<compile_context>
chip_gen: v6e
topology: v6e:2x2x1
jax: 0.10.0
libtpu: 0.0.40
codegen_flags: <defaults>
</compile_context>

<pallas_src>
import jax
import jax.numpy as jnp
from jax.experimental import pallas as pl
from jax.experimental.pallas import tpu as pltpu

BN_EPS = 1e-5


# --------------------------------------------------------------------------
# Fused DoubleConv kernel factory (9-accumulated-matmul form, no scratch)
# --------------------------------------------------------------------------
def _make_double_conv_kernel(n, h, w):
    P = n * h * w
    # 3x3 taps in (ky, kx) row-major order; off = flat-pixel offset of a tap.
    taps = [(dy, dx, dy * w + dx) for dy in (-1, 0, 1) for dx in (-1, 0, 1)]

    def kernel(x2_ref, x1_ref, m_ref, w1a_ref, w1b_ref, w2_ref,
               g1_ref, b1_ref, g2_ref, b2_ref, o_ref):
        # Host-precomputed {0,1} border masks, one clean f32 sublane row per
        # non-centre tap.  mask_k[p] == 1 iff tap (dy,dx) reads inside the
        # image at pixel p (implements SAME zero padding and kills the
        # cross-image / wrap-around reads of the lane rotation below).
        masks = [m_ref[i:i + 1, :] for i in range(8)]

        def conv3x3(srcs, w_refs):
            # 9 accumulated MXU matmuls, one per tap:
            #   acc += W_k @ (mask_k * roll(src, -off_k))
            # pltpu.roll matches jnp.roll (result[i] = x[(i - shift) % P]), so
            # shift = (-off) % P yields result[p] = x[(p + off) % P]; the mask
            # zeroes every position where the un-wrapped read leaves the image.
            acc = None
            mi = 0
            for k, (_, _, off) in enumerate(taps):
                if off == 0:
                    tap_srcs = srcs
                else:
                    m = masks[mi]
                    mi += 1
                    shift = (-off) % P
                    tap_srcs = [pltpu.roll(s, shift=shift, axis=1) * m
                                for s in srcs]
                for s, wref in zip(tap_srcs, w_refs):
                    d = jnp.dot(wref[k], s.astype(jnp.bfloat16),
                                preferred_element_type=jnp.float32)
                    acc = d if acc is None else acc + d
            return acc

        def bn_relu(acc, gamma, beta):
            # BatchNorm2d training semantics: per-channel stats over all
            # N*H*W positions (the lane axis), two-pass mean/variance
            # (biased), then affine + ReLU as a single FMA + max.
            inv_n = 1.0 / float(P)
            mu = jnp.sum(acc, axis=1, keepdims=True) * inv_n
            diff = acc - mu
            var = jnp.sum(diff * diff, axis=1, keepdims=True) * inv_n
            scale = gamma * jax.lax.rsqrt(var + BN_EPS)   # (C, 1)
            return jnp.maximum(diff * scale + beta, 0.0)

        # conv1 over the fused concat [x2, up(x1)] (never materialized).
        x2 = x2_ref[...].astype(jnp.float32)
        x1 = x1_ref[...].astype(jnp.float32)
        acc1 = conv3x3([x2, x1], [w1a_ref, w1b_ref])          # (Cmid, P) f32
        hid = bn_relu(acc1, g1_ref[...], b1_ref[...])          # stays in VMEM

        # conv2 consumes the VMEM-resident intermediate (no HBM round trip).
        acc2 = conv3x3([hid], [w2_ref])                        # (Cout, P) f32
        o_ref[...] = bn_relu(acc2, g2_ref[...], b2_ref[...])

    return kernel


# --------------------------------------------------------------------------
# Host-side helpers
# --------------------------------------------------------------------------
def _border_masks(n, h, w):
    """(8, n*h*w) f32 {0,1} masks for the 8 non-centre 3x3 taps."""
    p = n * h * w
    pos = jnp.arange(p, dtype=jnp.int32)
    yy = (pos // w) % h
    xx = pos % w
    rows = []
    for dy in (-1, 0, 1):
        for dx in (-1, 0, 1):
            if dy == 0 and dx == 0:
                continue
            valid = ((yy + dy >= 0) & (yy + dy < h) &
                     (xx + dx >= 0) & (xx + dx < w))
            rows.append(valid)
    return jnp.stack(rows, axis=0).astype(jnp.float32)


def _tap_weights(w_pt):
    """PyTorch (Cout, Cin, 3, 3) -> (9, Cout, Cin) bf16, tap-major."""
    cout, cin = w_pt.shape[0], w_pt.shape[1]
    return (jnp.transpose(w_pt, (2, 3, 0, 1))
            .reshape(9, cout, cin).astype(jnp.bfloat16))


def upsample2x_bilinear_align_corners(x):
    """nn.Upsample(scale_factor=2, mode='bilinear', align_corners=True)."""
    _, _, h, w = x.shape
    ho, wo = 2 * h, 2 * w

    def idx(out_size, in_size):
        if in_size == 1:
            z = jnp.zeros((out_size,), jnp.int32)
            return z, z, jnp.zeros((out_size,), jnp.float32)
        src = (jnp.arange(out_size, dtype=jnp.float32)
               * (in_size - 1) / (out_size - 1))
        i0 = jnp.clip(jnp.floor(src).astype(jnp.int32), 0, in_size - 2)
        return i0, i0 + 1, src - i0.astype(jnp.float32)

    r0, r1, rw = idx(ho, h)
    c0, c1, cw = idx(wo, w)
    xr = (x[:, :, r0, :] * (1.0 - rw)[None, None, :, None]
          + x[:, :, r1, :] * rw[None, None, :, None])
    return (xr[:, :, :, c0] * (1.0 - cw)[None, None, None, :]
            + xr[:, :, :, c1] * cw[None, None, None, :])


@jax.jit
def up_forward(x1_nchw, x2_nchw, params):
    """Up.forward(x1, x2) with PyTorch-style NCHW inputs/outputs."""
    x1 = upsample2x_bilinear_align_corners(x1_nchw.astype(jnp.float32))
    x2 = x2_nchw.astype(jnp.float32)
    diff_y = x2.shape[2] - x1.shape[2]
    diff_x = x2.shape[3] - x1.shape[3]
    x1 = jnp.pad(x1, ((0, 0), (0, 0),
                      (diff_y // 2, diff_y - diff_y // 2),
                      (diff_x // 2, diff_x - diff_x // 2)))

    n, c2, h, w = x2.shape
    c1 = x1.shape[1]
    p = n * h * w

    # Channel-major, pixel-flattened (lane-dense) bf16 operands.
    x2f = jnp.transpose(x2, (1, 0, 2, 3)).reshape(c2, p).astype(jnp.bfloat16)
    x1f = jnp.transpose(x1, (1, 0, 2, 3)).reshape(c1, p).astype(jnp.bfloat16)
    masks = _border_masks(n, h, w)                              # (8, p) f32

    # Split conv1 weights into the x2-block and x1-block of the fused concat.
    w1a = _tap_weights(params["w1"][:, :c2])                    # (9, Cmid, C2)
    w1b = _tap_weights(params["w1"][:, c2:])                    # (9, Cmid, C1)
    w2t = _tap_weights(params["w2"])                            # (9, Cout, Cmid)
    cmid, cout = w1a.shape[1], w2t.shape[1]
    g1 = params["g1"].reshape(cmid, 1).astype(jnp.float32)
    b1 = params["b1"].reshape(cmid, 1).astype(jnp.float32)
    g2 = params["g2"].reshape(cout, 1).astype(jnp.float32)
    b2 = params["b2"].reshape(cout, 1).astype(jnp.float32)

    # Scoped-VMEM limit sized to the actual footprint (>= per-chip defaults,
    # <= 48 MiB so it is always below v7x's 64 MiB physical VMEM).
    in_bytes = ((c2 + c1) * p * 2 + 8 * p * 4
                + (w1a.size + w1b.size + w2t.size) * 2 + (cmid + cout) * 8)
    out_bytes = cout * p * 4
    live_bytes = (2 * cmid + 2 * cout + c2 + c1) * p * 4
    vmem_limit = int(max(32 << 20,
                         min(48 << 20,
                             2 * (in_bytes + out_bytes) + live_bytes + (8 << 20))))

    vmem = pl.BlockSpec(memory_space=pltpu.MemorySpace.VMEM)
    out_flat = pl.pallas_call(
        _make_double_conv_kernel(n, h, w),
        out_shape=jax.ShapeDtypeStruct((cout, p), jnp.float32),
        in_specs=[vmem] * 10,
        out_specs=vmem,
        compiler_params=pltpu.CompilerParams(vmem_limit_bytes=vmem_limit),
    )(x2f, x1f, masks, w1a, w1b, w2t, g1, b1, g2, b2)

    return jnp.transpose(out_flat.reshape(cout, n, h, w), (1, 0, 2, 3))


# --------------------------------------------------------------------------
# Pure-XLA reference with the module's exact forward semantics (for checking)
# --------------------------------------------------------------------------
def _reference_up_forward(x1, x2, params):
    x1 = upsample2x_bilinear_align_corners(x1.astype(jnp.float32))
    x2 = x2.astype(jnp.float32)
    diff_y = x2.shape[2] - x1.shape[2]
    diff_x = x2.shape[3] - x1.shape[3]
    x1 = jnp.pad(x1, ((0, 0), (0, 0),
                      (diff_y // 2, diff_y - diff_y // 2),
                      (diff_x // 2, diff_x - diff_x // 2)))
    x = jnp.concatenate([x2, x1], axis=1)

    def conv_bn_relu(x, w_pt, g, b):
        y = jax.lax.conv_general_dilated(
            x, w_pt, window_strides=(1, 1), padding=((1, 1), (1, 1)),
            dimension_numbers=("NCHW", "OIHW", "NCHW"),
            precision=jax.lax.Precision.HIGHEST)
        mu = jnp.mean(y, axis=(0, 2, 3), keepdims=True)
        var = jnp.mean((y - mu) ** 2, axis=(0, 2, 3), keepdims=True)
        yn = ((y - mu) * jax.lax.rsqrt(var + BN_EPS)
              * g.reshape(1, -1, 1, 1) + b.reshape(1, -1, 1, 1))
        return jnp.maximum(yn, 0.0)

    hid = conv_bn_relu(x, params["w1"], params["g1"], params["b1"])
    return conv_bn_relu(hid, params["w2"], params["g2"], params["b2"])


# --------------------------------------------------------------------------
# Deterministic parameter init (PyTorch layout / PyTorch-like distributions)
# --------------------------------------------------------------------------
def init_up_params(key, in_channels, out_channels):
    mid_channels = in_channels // 2
    k1, k2 = jax.random.split(key)

    def conv_w(k, cin, cout):
        bound = float(1.0 / (cin * 9) ** 0.5)
        return jax.random.uniform(k, (cout, cin, 3, 3), jnp.float32,
                                  minval=-bound, maxval=bound)

    return {
        "w1": conv_w(k1, in_channels, mid_channels),
        "g1": jnp.ones((mid_channels,), jnp.float32),
        "b1": jnp.zeros((mid_channels,), jnp.float32),
        "w2": conv_w(k2, mid_channels, out_channels),
        "g2": jnp.ones((out_channels,), jnp.float32),
        "b2": jnp.zeros((out_channels,), jnp.float32),
    }


if __name__ == "__main__":
    # Up(in_channels=8, out_channels=8, bilinear=True)
    # x1: low-res decoder feature (2, 4, 8, 8); x2: skip feature (2, 4, 16, 16)
    # concat -> 8 channels = in_channels; mid_channels = 4.
    in_channels, out_channels = 8, 8
    key = jax.random.PRNGKey(0)
    kx1, kx2, kp = jax.random.split(key, 3)

    x1 = jax.random.normal(kx1, (2, in_channels // 2, 8, 8), jnp.float32)
    x2 = jax.random.normal(kx2, (2, in_channels // 2, 16, 16), jnp.float32)
    params = init_up_params(kp, in_channels, out_channels)

    out = jax.block_until_ready(up_forward(x1, x2, params))
    assert out.shape == (2, out_channels, 16, 16), out.shape

    ref = jax.block_until_ready(_reference_up_forward(x1, x2, params))
    err = float(jnp.max(jnp.abs(out - ref)))
    assert err < 5e-2, f"max abs error vs reference: {err}"

    print("KERNEL_OK")
</pallas_src>

<mosaic_0001>
module attributes {stable_mosaic.version = 11 : i64} {
  func.func @kernel(%arg0: memref<4x512xbf16, #tpu.memory_space<vmem>>, %arg1: memref<4x512xbf16, #tpu.memory_space<vmem>>, %arg2: memref<8x512xf32, #tpu.memory_space<vmem>>, %arg3: memref<9x4x4xbf16, #tpu.memory_space<vmem>>, %arg4: memref<9x4x4xbf16, #tpu.memory_space<vmem>>, %arg5: memref<9x8x4xbf16, #tpu.memory_space<vmem>>, %arg6: memref<4x1xf32, #tpu.memory_space<vmem>>, %arg7: memref<4x1xf32, #tpu.memory_space<vmem>>, %arg8: memref<8x1xf32, #tpu.memory_space<vmem>>, %arg9: memref<8x1xf32, #tpu.memory_space<vmem>>, %arg10: memref<8x512xf32, #tpu.memory_space<vmem>>) attributes {dimension_semantics = [], scalar_prefetch = 0 : i64, scratch_operands = 0 : i64, tpu.core_type = #tpu.core_type<tc>} {
    %c0 = arith.constant 0 : index
    %c0_0 = arith.constant 0 : index
    %0 = vector.load %arg2[%c0, %c0_0] : memref<8x512xf32, #tpu.memory_space<vmem>>, vector<1x512xf32>
    %c1 = arith.constant 1 : index
    %c0_1 = arith.constant 0 : index
    %1 = vector.load %arg2[%c1, %c0_1] : memref<8x512xf32, #tpu.memory_space<vmem>>, vector<1x512xf32>
    %c2 = arith.constant 2 : index
    %c0_2 = arith.constant 0 : index
    %2 = vector.load %arg2[%c2, %c0_2] : memref<8x512xf32, #tpu.memory_space<vmem>>, vector<1x512xf32>
    %c3 = arith.constant 3 : index
    %c0_3 = arith.constant 0 : index
    %3 = vector.load %arg2[%c3, %c0_3] : memref<8x512xf32, #tpu.memory_space<vmem>>, vector<1x512xf32>
    %c4 = arith.constant 4 : index
    %c0_4 = arith.constant 0 : index
    %4 = vector.load %arg2[%c4, %c0_4] : memref<8x512xf32, #tpu.memory_space<vmem>>, vector<1x512xf32>
    %c5 = arith.constant 5 : index
    %c0_5 = arith.constant 0 : index
    %5 = vector.load %arg2[%c5, %c0_5] : memref<8x512xf32, #tpu.memory_space<vmem>>, vector<1x512xf32>
    %c6 = arith.constant 6 : index
    %c0_6 = arith.constant 0 : index
    %6 = vector.load %arg2[%c6, %c0_6] : memref<8x512xf32, #tpu.memory_space<vmem>>, vector<1x512xf32>
    %c7 = arith.constant 7 : index
    %c0_7 = arith.constant 0 : index
    %7 = vector.load %arg2[%c7, %c0_7] : memref<8x512xf32, #tpu.memory_space<vmem>>, vector<1x512xf32>
    %c0_8 = arith.constant 0 : index
    %c0_9 = arith.constant 0 : index
    %8 = vector.load %arg0[%c0_8, %c0_9] : memref<4x512xbf16, #tpu.memory_space<vmem>>, vector<4x512xbf16>
    %9 = arith.extf %8 : vector<4x512xbf16> to vector<4x512xf32>
    %c0_10 = arith.constant 0 : index
    %c0_11 = arith.constant 0 : index
    %10 = vector.load %arg1[%c0_10, %c0_11] : memref<4x512xbf16, #tpu.memory_space<vmem>>, vector<4x512xbf16>
    %11 = arith.extf %10 : vector<4x512xbf16> to vector<4x512xf32>
    %c17_i32 = arith.constant 17 : i32
    %12 = tpu.dynamic_rotate %9 by %c17_i32 dim 1 : vector<4x512xf32>, i32 -> vector<4x512xf32>
    %13 = vector.broadcast %0 : vector<1x512xf32> to vector<4x512xf32>
    %14 = arith.mulf %12, %13 : vector<4x512xf32>
    %c17_i32_12 = arith.constant 17 : i32
    %15 = tpu.dynamic_rotate %11 by %c17_i32_12 dim 1 : vector<4x512xf32>, i32 -> vector<4x512xf32>
    %16 = vector.broadcast %0 : vector<1x512xf32> to vector<4x512xf32>
    %17 = arith.mulf %15, %16 : vector<4x512xf32>
    %c0_13 = arith.constant 0 : index
    %c0_14 = arith.constant 0 : index
    %c0_15 = arith.constant 0 : index
    %18 = vector.load %arg3[%c0_13, %c0_14, %c0_15] : memref<9x4x4xbf16, #tpu.memory_space<vmem>>, vector<1x4x4xbf16>
    %19 = vector.shape_cast %18 : vector<1x4x4xbf16> to vector<4x4xbf16>
    %20 = arith.truncf %14 : vector<4x512xf32> to vector<4x512xbf16>
    %cst = arith.constant dense<0.000000e+00> : vector<4x512xf32>
    %21 = tpu.matmul %19, %20, %cst {dimension_numbers = #tpu.dot_dimension_numbers<[1], [0], [0], [1], [0, 0, 1, 1], [], []>} : vector<4x4xbf16>, vector<4x512xbf16>, vector<4x512xf32> -> vector<4x512xf32>
    %c0_16 = arith.constant 0 : index
    %c0_17 = arith.constant 0 : index
    %c0_18 = arith.constant 0 : index
    %22 = vector.load %arg4[%c0_16, %c0_17, %c0_18] : memref<9x4x4xbf16, #tpu.memory_space<vmem>>, vector<1x4x4xbf16>
    %23 = vector.shape_cast %22 : vector<1x4x4xbf16> to vector<4x4xbf16>
    %24 = arith.truncf %17 : vector<4x512xf32> to vector<4x512xbf16>
    %cst_19 = arith.constant dense<0.000000e+00> : vector<4x512xf32>
    %25 = tpu.matmul %23, %24, %cst_19 {dimension_numbers = #tpu.dot_dimension_numbers<[1], [0], [0], [1], [0, 0, 1, 1], [], []>} : vector<4x4xbf16>, vector<4x512xbf16>, vector<4x512xf32> -> vector<4x512xf32>
    %26 = arith.addf %21, %25 : vector<4x512xf32>
    %c16_i32 = arith.constant 16 : i32
    %27 = tpu.dynamic_rotate %9 by %c16_i32 dim 1 : vector<4x512xf32>, i32 -> vector<4x512xf32>
    %28 = vector.broadcast %1 : vector<1x512xf32> to vector<4x512xf32>
    %29 = arith.mulf %27, %28 : vector<4x512xf32>
    %c16_i32_20 = arith.constant 16 : i32
    %30 = tpu.dynamic_rotate %11 by %c16_i32_20 dim 1 : vector<4x512xf32>, i32 -> vector<4x512xf32>
    %31 = vector.broadcast %1 : vector<1x512xf32> to vector<4x512xf32>
    %32 = arith.mulf %30, %31 : vector<4x512xf32>
    %c1_21 = arith.constant 1 : index
    %c0_22 = arith.constant 0 : index
    %c0_23 = arith.constant 0 : index
    %33 = vector.load %arg3[%c1_21, %c0_22, %c0_23] : memref<9x4x4xbf16, #tpu.memory_space<vmem>>, vector<1x4x4xbf16>
    %34 = vector.shape_cast %33 : vector<1x4x4xbf16> to vector<4x4xbf16>
    %35 = arith.truncf %29 : vector<4x512xf32> to vector<4x512xbf16>
    %cst_24 = arith.constant dense<0.000000e+00> : vector<4x512xf32>
    %36 = tpu.matmul %34, %35, %cst_24 {dimension_numbers = #tpu.dot_dimension_numbers<[1], [0], [0], [1], [0, 0, 1, 1], [], []>} : vector<4x4xbf16>, vector<4x512xbf16>, vector<4x512xf32> -> vector<4x512xf32>
    %37 = arith.addf %26, %36 : vector<4x512xf32>
    %c1_25 = arith.constant 1 : index
    %c0_26 = arith.constant 0 : index
    %c0_27 = arith.constant 0 : index
    %38 = vector.load %arg4[%c1_25, %c0_26, %c0_27] : memref<9x4x4xbf16, #tpu.memory_space<vmem>>, vector<1x4x4xbf16>
    %39 = vector.shape_cast %38 : vector<1x4x4xbf16> to vector<4x4xbf16>
    %40 = arith.truncf %32 : vector<4x512xf32> to vector<4x512xbf16>
    %cst_28 = arith.constant dense<0.000000e+00> : vector<4x512xf32>
    %41 = tpu.matmul %39, %40, %cst_28 {dimension_numbers = #tpu.dot_dimension_numbers<[1], [0], [0], [1], [0, 0, 1, 1], [], []>} : vector<4x4xbf16>, vector<4x512xbf16>, vector<4x512xf32> -> vector<4x512xf32>
    %42 = arith.addf %37, %41 : vector<4x512xf32>
    %c15_i32 = arith.constant 15 : i32
    %43 = tpu.dynamic_rotate %9 by %c15_i32 dim 1 : vector<4x512xf32>, i32 -> vector<4x512xf32>
    %44 = vector.broadcast %2 : vector<1x512xf32> to vector<4x512xf32>
    %45 = arith.mulf %43, %44 : vector<4x512xf32>
    %c15_i32_29 = arith.constant 15 : i32
    %46 = tpu.dynamic_rotate %11 by %c15_i32_29 dim 1 : vector<4x512xf32>, i32 -> vector<4x512xf32>
    %47 = vector.broadcast %2 : vector<1x512xf32> to vector<4x512xf32>
    %48 = arith.mulf %46, %47 : vector<4x512xf32>
    %c2_30 = arith.constant 2 : index
    %c0_31 = arith.constant 0 : index
    %c0_32 = arith.constant 0 : index
    %49 = vector.load %arg3[%c2_30, %c0_31, %c0_32] : memref<9x4x4xbf16, #tpu.memory_space<vmem>>, vector<1x4x4xbf16>
    %50 = vector.shape_cast %49 : vector<1x4x4xbf16> to vector<4x4xbf16>
    %51 = arith.truncf %45 : vector<4x512xf32> to vector<4x512xbf16>
    %cst_33 = arith.constant dense<0.000000e+00> : vector<4x512xf32>
    %52 = tpu.matmul %50, %51, %cst_33 {dimension_numbers = #tpu.dot_dimension_numbers<[1], [0], [0], [1], [0, 0, 1, 1], [], []>} : vector<4x4xbf16>, vector<4x512xbf16>, vector<4x512xf32> -> vector<4x512xf32>
    %53 = arith.addf %42, %52 : vector<4x512xf32>
    %c2_34 = arith.constant 2 : index
    %c0_35 = arith.constant 0 : index
    %c0_36 = arith.constant 0 : index
    %54 = vector.load %arg4[%c2_34, %c0_35, %c0_36] : memref<9x4x4xbf16, #tpu.memory_space<vmem>>, vector<1x4x4xbf16>
    %55 = vector.shape_cast %54 : vector<1x4x4xbf16> to vector<4x4xbf16>
    %56 = arith.truncf %48 : vector<4x512xf32> to vector<4x512xbf16>
    %cst_37 = arith.constant dense<0.000000e+00> : vector<4x512xf32>
    %57 = tpu.matmul %55, %56, %cst_37 {dimension_numbers = #tpu.dot_dimension_numbers<[1], [0], [0], [1], [0, 0, 1, 1], [], []>} : vector<4x4xbf16>, vector<4x512xbf16>, vector<4x512xf32> -> vector<4x512xf32>
    %58 = arith.addf %53, %57 : vector<4x512xf32>
    %c1_i32 = arith.constant 1 : i32
    %59 = tpu.dynamic_rotate %9 by %c1_i32 dim 1 : vector<4x512xf32>, i32 -> vector<4x512xf32>
    %60 = vector.broadcast %3 : vector<1x512xf32> to vector<4x512xf32>
    %61 = arith.mulf %59, %60 : vector<4x512xf32>
    %c1_i32_38 = arith.constant 1 : i32
    %62 = tpu.dynamic_rotate %11 by %c1_i32_38 dim 1 : vector<4x512xf32>, i32 -> vector<4x512xf32>
    %63 = vector.broadcast %3 : vector<1x512xf32> to vector<4x512xf32>
    %64 = arith.mulf %62, %63 : vector<4x512xf32>
    %c3_39 = arith.constant 3 : index
    %c0_40 = arith.constant 0 : index
    %c0_41 = arith.constant 0 : index
    %65 = vector.load %arg3[%c3_39, %c0_40, %c0_41] : memref<9x4x4xbf16, #tpu.memory_space<vmem>>, vector<1x4x4xbf16>
    %66 = vector.shape_cast %65 : vector<1x4x4xbf16> to vector<4x4xbf16>
    %67 = arith.truncf %61 : vector<4x512xf32> to vector<4x512xbf16>
    %cst_42 = arith.constant dense<0.000000e+00> : vector<4x512xf32>
    %68 = tpu.matmul %66, %67, %cst_42 {dimension_numbers = #tpu.dot_dimension_numbers<[1], [0], [0], [1], [0, 0, 1, 1], [], []>} : vector<4x4xbf16>, vector<4x512xbf16>, vector<4x512xf32> -> vector<4x512xf32>
    %69 = arith.addf %58, %68 : vector<4x512xf32>
    %c3_43 = arith.constant 3 : index
    %c0_44 = arith.constant 0 : index
    %c0_45 = arith.constant 0 : index
    %70 = vector.load %arg4[%c3_43, %c0_44, %c0_45] : memref<9x4x4xbf16, #tpu.memory_space<vmem>>, vector<1x4x4xbf16>
    %71 = vector.shape_cast %70 : vector<1x4x4xbf16> to vector<4x4xbf16>
    %72 = arith.truncf %64 : vector<4x512xf32> to vector<4x512xbf16>
    %cst_46 = arith.constant dense<0.000000e+00> : vector<4x512xf32>
    %73 = tpu.matmul %71, %72, %cst_46 {dimension_numbers = #tpu.dot_dimension_numbers<[1], [0], [0], [1], [0, 0, 1, 1], [], []>} : vector<4x4xbf16>, vector<4x512xbf16>, vector<4x512xf32> -> vector<4x512xf32>
    %74 = arith.addf %69, %73 : vector<4x512xf32>
    %c4_47 = arith.constant 4 : index
    %c0_48 = arith.constant 0 : index
    %c0_49 = arith.constant 0 : index
    %75 = vector.load %arg3[%c4_47, %c0_48, %c0_49] : memref<9x4x4xbf16, #tpu.memory_space<vmem>>, vector<1x4x4xbf16>
    %76 = vector.shape_cast %75 : vector<1x4x4xbf16> to vector<4x4xbf16>
    %77 = arith.truncf %9 : vector<4x512xf32> to vector<4x512xbf16>
    %cst_50 = arith.constant dense<0.000000e+00> : vector<4x512xf32>
    %78 = tpu.matmul %76, %77, %cst_50 {dimension_numbers = #tpu.dot_dimension_numbers<[1], [0], [0], [1], [0, 0, 1, 1], [], []>} : vector<4x4xbf16>, vector<4x512xbf16>, vector<4x512xf32> -> vector<4x512xf32>
    %79 = arith.addf %74, %78 : vector<4x512xf32>
    %c4_51 = arith.constant 4 : index
    %c0_52 = arith.constant 0 : index
    %c0_53 = arith.constant 0 : index
    %80 = vector.load %arg4[%c4_51, %c0_52, %c0_53] : memref<9x4x4xbf16, #tpu.memory_space<vmem>>, vector<1x4x4xbf16>
    %81 = vector.shape_cast %80 : vector<1x4x4xbf16> to vector<4x4xbf16>
    %82 = arith.truncf %11 : vector<4x512xf32> to vector<4x512xbf16>
    %cst_54 = arith.constant dense<0.000000e+00> : vector<4x512xf32>
    %83 = tpu.matmul %81, %82, %cst_54 {dimension_numbers = #tpu.dot_dimension_numbers<[1], [0], [0], [1], [0, 0, 1, 1], [], []>} : vector<4x4xbf16>, vector<4x512xbf16>, vector<4x512xf32> -> vector<4x512xf32>
    %84 = arith.addf %79, %83 : vector<4x512xf32>
    %c511_i32 = arith.constant 511 : i32
    %85 = tpu.dynamic_rotate %9 by %c511_i32 dim 1 : vector<4x512xf32>, i32 -> vector<4x512xf32>
    %86 = vector.broadcast %4 : vector<1x512xf32> to vector<4x512xf32>
    %87 = arith.mulf %85, %86 : vector<4x512xf32>
    %c511_i32_55 = arith.constant 511 : i32
    %88 = tpu.dynamic_rotate %11 by %c511_i32_55 dim 1 : vector<4x512xf32>, i32 -> vector<4x512xf32>
    %89 = vector.broadcast %4 : vector<1x512xf32> to vector<4x512xf32>
    %90 = arith.mulf %88, %89 : vector<4x512xf32>
    %c5_56 = arith.constant 5 : index
    %c0_57 = arith.constant 0 : index
    %c0_58 = arith.constant 0 : index
    %91 = vector.load %arg3[%c5_56, %c0_57, %c0_58] : memref<9x4x4xbf16, #tpu.memory_space<vmem>>, vector<1x4x4xbf16>
    %92 = vector.shape_cast %91 : vector<1x4x4xbf16> to vector<4x4xbf16>
    %93 = arith.truncf %87 : vector<4x512xf32> to vector<4x512xbf16>
    %cst_59 = arith.constant dense<0.000000e+00> : vector<4x512xf32>
    %94 = tpu.matmul %92, %93, %cst_59 {dimension_numbers = #tpu.dot_dimension_numbers<[1], [0], [0], [1], [0, 0, 1, 1], [], []>} : vector<4x4xbf16>, vector<4x512xbf16>, vector<4x512xf32> -> vector<4x512xf32>
    %95 = arith.addf %84, %94 : vector<4x512xf32>
    %c5_60 = arith.constant 5 : index
    %c0_61 = arith.constant 0 : index
    %c0_62 = arith.constant 0 : index
    %96 = vector.load %arg4[%c5_60, %c0_61, %c0_62] : memref<9x4x4xbf16, #tpu.memory_space<vmem>>, vector<1x4x4xbf16>
    %97 = vector.shape_cast %96 : vector<1x4x4xbf16> to vector<4x4xbf16>
    %98 = arith.truncf %90 : vector<4x512xf32> to vector<4x512xbf16>
    %cst_63 = arith.constant dense<0.000000e+00> : vector<4x512xf32>
    %99 = tpu.matmul %97, %98, %cst_63 {dimension_numbers = #tpu.dot_dimension_numbers<[1], [0], [0], [1], [0, 0, 1, 1], [], []>} : vector<4x4xbf16>, vector<4x512xbf16>, vector<4x512xf32> -> vector<4x512xf32>
    %100 = arith.addf %95, %99 : vector<4x512xf32>
    %c497_i32 = arith.constant 497 : i32
    %101 = tpu.dynamic_rotate %9 by %c497_i32 dim 1 : vector<4x512xf32>, i32 -> vector<4x512xf32>
    %102 = vector.broadcast %5 : vector<1x512xf32> to vector<4x512xf32>
    %103 = arith.mulf %101, %102 : vector<4x512xf32>
    %c497_i32_64 = arith.constant 497 : i32
    %104 = tpu.dynamic_rotate %11 by %c497_i32_64 dim 1 : vector<4x512xf32>, i32 -> vector<4x512xf32>
    %105 = vector.broadcast %5 : vector<1x512xf32> to vector<4x512xf32>
    %106 = arith.mulf %104, %105 : vector<4x512xf32>
    %c6_65 = arith.constant 6 : index
    %c0_66 = arith.constant 0 : index
    %c0_67 = arith.constant 0 : index
    %107 = vector.load %arg3[%c6_65, %c0_66, %c0_67] : memref<9x4x4xbf16, #tpu.memory_space<vmem>>, vector<1x4x4xbf16>
    %108 = vector.shape_cast %107 : vector<1x4x4xbf16> to vector<4x4xbf16>
    %109 = arith.truncf %103 : vector<4x512xf32> to vector<4x512xbf16>
    %cst_68 = arith.constant dense<0.000000e+00> : vector<4x512xf32>
    %110 = tpu.matmul %108, %109, %cst_68 {dimension_numbers = #tpu.dot_dimension_numbers<[1], [0], [0], [1], [0, 0, 1, 1], [], []>} : vector<4x4xbf16>, vector<4x512xbf16>, vector<4x512xf32> -> vector<4x512xf32>
    %111 = arith.addf %100, %110 : vector<4x512xf32>
    %c6_69 = arith.constant 6 : index
    %c0_70 = arith.constant 0 : index
    %c0_71 = arith.constant 0 : index
    %112 = vector.load %arg4[%c6_69, %c0_70, %c0_71] : memref<9x4x4xbf16, #tpu.memory_space<vmem>>, vector<1x4x4xbf16>
    %113 = vector.shape_cast %112 : vector<1x4x4xbf16> to vector<4x4xbf16>
    %114 = arith.truncf %106 : vector<4x512xf32> to vector<4x512xbf16>
    %cst_72 = arith.constant dense<0.000000e+00> : vector<4x512xf32>
    %115 = tpu.matmul %113, %114, %cst_72 {dimension_numbers = #tpu.dot_dimension_numbers<[1], [0], [0], [1], [0, 0, 1, 1], [], []>} : vector<4x4xbf16>, vector<4x512xbf16>, vector<4x512xf32> -> vector<4x512xf32>
    %116 = arith.addf %111, %115 : vector<4x512xf32>
    %c496_i32 = arith.constant 496 : i32
    %117 = tpu.dynamic_rotate %9 by %c496_i32 dim 1 : vector<4x512xf32>, i32 -> vector<4x512xf32>
    %118 = vector.broadcast %6 : vector<1x512xf32> to vector<4x512xf32>
    %119 = arith.mulf %117, %118 : vector<4x512xf32>
    %c496_i32_73 = arith.constant 496 : i32
    %120 = tpu.dynamic_rotate %11 by %c496_i32_73 dim 1 : vector<4x512xf32>, i32 -> vector<4x512xf32>
    %121 = vector.broadcast %6 : vector<1x512xf32> to vector<4x512xf32>
    %122 = arith.mulf %120, %121 : vector<4x512xf32>
    %c7_74 = arith.constant 7 : index
    %c0_75 = arith.constant 0 : index
    %c0_76 = arith.constant 0 : index
    %123 = vector.load %arg3[%c7_74, %c0_75, %c0_76] : memref<9x4x4xbf16, #tpu.memory_space<vmem>>, vector<1x4x4xbf16>
    %124 = vector.shape_cast %123 : vector<1x4x4xbf16> to vector<4x4xbf16>
    %125 = arith.truncf %119 : vector<4x512xf32> to vector<4x512xbf16>
    %cst_77 = arith.constant dense<0.000000e+00> : vector<4x512xf32>
    %126 = tpu.matmul %124, %125, %cst_77 {dimension_numbers = #tpu.dot_dimension_numbers<[1], [0], [0], [1], [0, 0, 1, 1], [], []>} : vector<4x4xbf16>, vector<4x512xbf16>, vector<4x512xf32> -> vector<4x512xf32>
    %127 = arith.addf %116, %126 : vector<4x512xf32>
    %c7_78 = arith.constant 7 : index
    %c0_79 = arith.constant 0 : index
    %c0_80 = arith.constant 0 : index
    %128 = vector.load %arg4[%c7_78, %c0_79, %c0_80] : memref<9x4x4xbf16, #tpu.memory_space<vmem>>, vector<1x4x4xbf16>
    %129 = vector.shape_cast %128 : vector<1x4x4xbf16> to vector<4x4xbf16>
    %130 = arith.truncf %122 : vector<4x512xf32> to vector<4x512xbf16>
    %cst_81 = arith.constant dense<0.000000e+00> : vector<4x512xf32>
    %131 = tpu.matmul %129, %130, %cst_81 {dimension_numbers = #tpu.dot_dimension_numbers<[1], [0], [0], [1], [0, 0, 1, 1], [], []>} : vector<4x4xbf16>, vector<4x512xbf16>, vector<4x512xf32> -> vector<4x512xf32>
    %132 = arith.addf %127, %131 : vector<4x512xf32>
    %c495_i32 = arith.constant 495 : i32
    %133 = tpu.dynamic_rotate %9 by %c495_i32 dim 1 : vector<4x512xf32>, i32 -> vector<4x512xf32>
    %134 = vector.broadcast %7 : vector<1x512xf32> to vector<4x512xf32>
    %135 = arith.mulf %133, %134 : vector<4x512xf32>
    %c495_i32_82 = arith.constant 495 : i32
    %136 = tpu.dynamic_rotate %11 by %c495_i32_82 dim 1 : vector<4x512xf32>, i32 -> vector<4x512xf32>
    %137 = vector.broadcast %7 : vector<1x512xf32> to vector<4x512xf32>
    %138 = arith.mulf %136, %137 : vector<4x512xf32>
    %c8 = arith.constant 8 : index
    %c0_83 = arith.constant 0 : index
    %c0_84 = arith.constant 0 : index
    %139 = vector.load %arg3[%c8, %c0_83, %c0_84] : memref<9x4x4xbf16, #tpu.memory_space<vmem>>, vector<1x4x4xbf16>
    %140 = vector.shape_cast %139 : vector<1x4x4xbf16> to vector<4x4xbf16>
    %141 = arith.truncf %135 : vector<4x512xf32> to vector<4x512xbf16>
    %cst_85 = arith.constant dense<0.000000e+00> : vector<4x512xf32>
    %142 = tpu.matmul %140, %141, %cst_85 {dimension_numbers = #tpu.dot_dimension_numbers<[1], [0], [0], [1], [0, 0, 1, 1], [], []>} : vector<4x4xbf16>, vector<4x512xbf16>, vector<4x512xf32> -> vector<4x512xf32>
    %143 = arith.addf %132, %142 : vector<4x512xf32>
    %c8_86 = arith.constant 8 : index
    %c0_87 = arith.constant 0 : index
    %c0_88 = arith.constant 0 : index
    %144 = vector.load %arg4[%c8_86, %c0_87, %c0_88] : memref<9x4x4xbf16, #tpu.memory_space<vmem>>, vector<1x4x4xbf16>
    %145 = vector.shape_cast %144 : vector<1x4x4xbf16> to vector<4x4xbf16>
    %146 = arith.truncf %138 : vector<4x512xf32> to vector<4x512xbf16>
    %cst_89 = arith.constant dense<0.000000e+00> : vector<4x512xf32>
    %147 = tpu.matmul %145, %146, %cst_89 {dimension_numbers = #tpu.dot_dimension_numbers<[1], [0], [0], [1], [0, 0, 1, 1], [], []>} : vector<4x4xbf16>, vector<4x512xbf16>, vector<4x512xf32> -> vector<4x512xf32>
    %148 = arith.addf %143, %147 : vector<4x512xf32>
    %c0_90 = arith.constant 0 : index
    %c0_91 = arith.constant 0 : index
    %149 = vector.load %arg6[%c0_90, %c0_91] : memref<4x1xf32, #tpu.memory_space<vmem>>, vector<4x1xf32>
    %c0_92 = arith.constant 0 : index
    %c0_93 = arith.constant 0 : index
    %150 = vector.load %arg7[%c0_92, %c0_93] : memref<4x1xf32, #tpu.memory_space<vmem>>, vector<4x1xf32>
    %cst_94 = arith.constant dense<0.000000e+00> : vector<4xf32>
    %151 = vector.multi_reduction <add>, %148, %cst_94 [1] : vector<4x512xf32> to vector<4xf32>
    %152 = vector.shape_cast %151 : vector<4xf32> to vector<4x1xf32>
    %cst_95 = arith.constant 0.001953125 : f32
    %153 = vector.broadcast %cst_95 : f32 to vector<4x1xf32>
    %154 = arith.mulf %152, %153 : vector<4x1xf32>
    %155 = vector.broadcast %154 : vector<4x1xf32> to vector<4x512xf32>
    %156 = arith.subf %148, %155 : vector<4x512xf32>
    %157 = arith.mulf %156, %156 : vector<4x512xf32>
    %cst_96 = arith.constant dense<0.000000e+00> : vector<4xf32>
    %158 = vector.multi_reduction <add>, %157, %cst_96 [1] : vector<4x512xf32> to vector<4xf32>
    %159 = vector.shape_cast %158 : vector<4xf32> to vector<4x1xf32>
    %cst_97 = arith.constant 0.001953125 : f32
    %160 = vector.broadcast %cst_97 : f32 to vector<4x1xf32>
    %161 = arith.mulf %159, %160 : vector<4x1xf32>
    %cst_98 = arith.constant 9.99999974E-6 : f32
    %162 = vector.broadcast %cst_98 : f32 to vector<4x1xf32>
    %163 = arith.addf %161, %162 : vector<4x1xf32>
    %164 = math.rsqrt %163 : vector<4x1xf32>
    %165 = arith.mulf %149, %164 : vector<4x1xf32>
    %166 = vector.broadcast %165 : vector<4x1xf32> to vector<4x512xf32>
    %167 = arith.mulf %156, %166 : vector<4x512xf32>
    %168 = vector.broadcast %150 : vector<4x1xf32> to vector<4x512xf32>
    %169 = arith.addf %167, %168 : vector<4x512xf32>
    %cst_99 = arith.constant 0.000000e+00 : f32
    %170 = vector.broadcast %cst_99 : f32 to vector<4x512xf32>
    %171 = arith.maximumf %169, %170 : vector<4x512xf32>
    %c17_i32_100 = arith.constant 17 : i32
    %172 = tpu.dynamic_rotate %171 by %c17_i32_100 dim 1 : vector<4x512xf32>, i32 -> vector<4x512xf32>
    %173 = vector.broadcast %0 : vector<1x512xf32> to vector<4x512xf32>
    %174 = arith.mulf %172, %173 : vector<4x512xf32>
    %c0_101 = arith.constant 0 : index
    %c0_102 = arith.constant 0 : index
    %c0_103 = arith.constant 0 : index
    %175 = vector.load %arg5[%c0_101, %c0_102, %c0_103] : memref<9x8x4xbf16, #tpu.memory_space<vmem>>, vector<1x8x4xbf16>
    %176 = vector.shape_cast %175 : vector<1x8x4xbf16> to vector<8x4xbf16>
    %177 = arith.truncf %174 : vector<4x512xf32> to vector<4x512xbf16>
    %cst_104 = arith.constant dense<0.000000e+00> : vector<8x512xf32>
    %178 = tpu.matmul %176, %177, %cst_104 {dimension_numbers = #tpu.dot_dimension_numbers<[1], [0], [0], [1], [0, 0, 1, 1], [], []>} : vector<8x4xbf16>, vector<4x512xbf16>, vector<8x512xf32> -> vector<8x512xf32>
    %c16_i32_105 = arith.constant 16 : i32
    %179 = tpu.dynamic_rotate %171 by %c16_i32_105 dim 1 : vector<4x512xf32>, i32 -> vector<4x512xf32>
    %180 = vector.broadcast %1 : vector<1x512xf32> to vector<4x512xf32>
    %181 = arith.mulf %179, %180 : vector<4x512xf32>
    %c1_106 = arith.constant 1 : index
    %c0_107 = arith.constant 0 : index
    %c0_108 = arith.constant 0 : index
    %182 = vector.load %arg5[%c1_106, %c0_107, %c0_108] : memref<9x8x4xbf16, #tpu.memory_space<vmem>>, vector<1x8x4xbf16>
    %183 = vector.shape_cast %182 : vector<1x8x4xbf16> to vector<8x4xbf16>
    %184 = arith.truncf %181 : vector<4x512xf32> to vector<4x512xbf16>
    %cst_109 = arith.constant dense<0.000000e+00> : vector<8x512xf32>
    %185 = tpu.matmul %183, %184, %cst_109 {dimension_numbers = #tpu.dot_dimension_numbers<[1], [0], [0], [1], [0, 0, 1, 1], [], []>} : vector<8x4xbf16>, vector<4x512xbf16>, vector<8x512xf32> -> vector<8x512xf32>
    %186 = arith.addf %178, %185 : vector<8x512xf32>
    %c15_i32_110 = arith.constant 15 : i32
    %187 = tpu.dynamic_rotate %171 by %c15_i32_110 dim 1 : vector<4x512xf32>, i32 -> vector<4x512xf32>
    %188 = vector.broadcast %2 : vector<1x512xf32> to vector<4x512xf32>
    %189 = arith.mulf %187, %188 : vector<4x512xf32>
    %c2_111 = arith.constant 2 : index
    %c0_112 = arith.constant 0 : index
    %c0_113 = arith.constant 0 : index
    %190 = vector.load %arg5[%c2_111, %c0_112, %c0_113] : memref<9x8x4xbf16, #tpu.memory_space<vmem>>, vector<1x8x4xbf16>
    %191 = vector.shape_cast %190 : vector<1x8x4xbf16> to vector<8x4xbf16>
    %192 = arith.truncf %189 : vector<4x512xf32> to vector<4x512xbf16>
    %cst_114 = arith.constant dense<0.000000e+00> : vector<8x512xf32>
    %193 = tpu.matmul %191, %192, %cst_114 {dimension_numbers = #tpu.dot_dimension_numbers<[1], [0], [0], [1], [0, 0, 1, 1], [], []>} : vector<8x4xbf16>, vector<4x512xbf16>, vector<8x512xf32> -> vector<8x512xf32>
    %194 = arith.addf %186, %193 : vector<8x512xf32>
    %c1_i32_115 = arith.constant 1 : i32
    %195 = tpu.dynamic_rotate %171 by %c1_i32_115 dim 1 : vector<4x512xf32>, i32 -> vector<4x512xf32>
    %196 = vector.broadcast %3 : vector<1x512xf32> to vector<4x512xf32>
    %197 = arith.mulf %195, %196 : vector<4x512xf32>
    %c3_116 = arith.constant 3 : index
    %c0_117 = arith.constant 0 : index
    %c0_118 = arith.constant 0 : index
    %198 = vector.load %arg5[%c3_116, %c0_117, %c0_118] : memref<9x8x4xbf16, #tpu.memory_space<vmem>>, vector<1x8x4xbf16>
    %199 = vector.shape_cast %198 : vector<1x8x4xbf16> to vector<8x4xbf16>
    %200 = arith.truncf %197 : vector<4x512xf32> to vector<4x512xbf16>
    %cst_119 = arith.constant dense<0.000000e+00> : vector<8x512xf32>
    %201 = tpu.matmul %199, %200, %cst_119 {dimension_numbers = #tpu.dot_dimension_numbers<[1], [0], [0], [1], [0, 0, 1, 1], [], []>} : vector<8x4xbf16>, vector<4x512xbf16>, vector<8x512xf32> -> vector<8x512xf32>
    %202 = arith.addf %194, %201 : vector<8x512xf32>
    %c4_120 = arith.constant 4 : index
    %c0_121 = arith.constant 0 : index
    %c0_122 = arith.constant 0 : index
    %203 = vector.load %arg5[%c4_120, %c0_121, %c0_122] : memref<9x8x4xbf16, #tpu.memory_space<vmem>>, vector<1x8x4xbf16>
    %204 = vector.shape_cast %203 : vector<1x8x4xbf16> to vector<8x4xbf16>
    %205 = arith.truncf %171 : vector<4x512xf32> to vector<4x512xbf16>
    %cst_123 = arith.constant dense<0.000000e+00> : vector<8x512xf32>
    %206 = tpu.matmul %204, %205, %cst_123 {dimension_numbers = #tpu.dot_dimension_numbers<[1], [0], [0], [1], [0, 0, 1, 1], [], []>} : vector<8x4xbf16>, vector<4x512xbf16>, vector<8x512xf32> -> vector<8x512xf32>
    %207 = arith.addf %202, %206 : vector<8x512xf32>
    %c511_i32_124 = arith.constant 511 : i32
    %208 = tpu.dynamic_rotate %171 by %c511_i32_124 dim 1 : vector<4x512xf32>, i32 -> vector<4x512xf32>
    %209 = vector.broadcast %4 : vector<1x512xf32> to vector<4x512xf32>
    %210 = arith.mulf %208, %209 : vector<4x512xf32>
    %c5_125 = arith.constant 5 : index
    %c0_126 = arith.constant 0 : index
    %c0_127 = arith.constant 0 : index
    %211 = vector.load %arg5[%c5_125, %c0_126, %c0_127] : memref<9x8x4xbf16, #tpu.memory_space<vmem>>, vector<1x8x4xbf16>
    %212 = vector.shape_cast %211 : vector<1x8x4xbf16> to vector<8x4xbf16>
    %213 = arith.truncf %210 : vector<4x512xf32> to vector<4x512xbf16>
    %cst_128 = arith.constant dense<0.000000e+00> : vector<8x512xf32>
    %214 = tpu.matmul %212, %213, %cst_128 {dimension_numbers = #tpu.dot_dimension_numbers<[1], [0], [0], [1], [0, 0, 1, 1], [], []>} : vector<8x4xbf16>, vector<4x512xbf16>, vector<8x512xf32> -> vector<8x512xf32>
    %215 = arith.addf %207, %214 : vector<8x512xf32>
    %c497_i32_129 = arith.constant 497 : i32
    %216 = tpu.dynamic_rotate %171 by %c497_i32_129 dim 1 : vector<4x512xf32>, i32 -> vector<4x512xf32>
    %217 = vector.broadcast %5 : vector<1x512xf32> to vector<4x512xf32>
    %218 = arith.mulf %216, %217 : vector<4x512xf32>
    %c6_130 = arith.constant 6 : index
    %c0_131 = arith.constant 0 : index
    %c0_132 = arith.constant 0 : index
    %219 = vector.load %arg5[%c6_130, %c0_131, %c0_132] : memref<9x8x4xbf16, #tpu.memory_space<vmem>>, vector<1x8x4xbf16>
    %220 = vector.shape_cast %219 : vector<1x8x4xbf16> to vector<8x4xbf16>
    %221 = arith.truncf %218 : vector<4x512xf32> to vector<4x512xbf16>
    %cst_133 = arith.constant dense<0.000000e+00> : vector<8x512xf32>
    %222 = tpu.matmul %220, %221, %cst_133 {dimension_numbers = #tpu.dot_dimension_numbers<[1], [0], [0], [1], [0, 0, 1, 1], [], []>} : vector<8x4xbf16>, vector<4x512xbf16>, vector<8x512xf32> -> vector<8x512xf32>
    %223 = arith.addf %215, %222 : vector<8x512xf32>
    %c496_i32_134 = arith.constant 496 : i32
    %224 = tpu.dynamic_rotate %171 by %c496_i32_134 dim 1 : vector<4x512xf32>, i32 -> vector<4x512xf32>
    %225 = vector.broadcast %6 : vector<1x512xf32> to vector<4x512xf32>
    %226 = arith.mulf %224, %225 : vector<4x512xf32>
    %c7_135 = arith.constant 7 : index
    %c0_136 = arith.constant 0 : index
    %c0_137 = arith.constant 0 : index
    %227 = vector.load %arg5[%c7_135, %c0_136, %c0_137] : memref<9x8x4xbf16, #tpu.memory_space<vmem>>, vector<1x8x4xbf16>
    %228 = vector.shape_cast %227 : vector<1x8x4xbf16> to vector<8x4xbf16>
    %229 = arith.truncf %226 : vector<4x512xf32> to vector<4x512xbf16>
    %cst_138 = arith.constant dense<0.000000e+00> : vector<8x512xf32>
    %230 = tpu.matmul %228, %229, %cst_138 {dimension_numbers = #tpu.dot_dimension_numbers<[1], [0], [0], [1], [0, 0, 1, 1], [], []>} : vector<8x4xbf16>, vector<4x512xbf16>, vector<8x512xf32> -> vector<8x512xf32>
    %231 = arith.addf %223, %230 : vector<8x512xf32>
    %c495_i32_139 = arith.constant 495 : i32
    %232 = tpu.dynamic_rotate %171 by %c495_i32_139 dim 1 : vector<4x512xf32>, i32 -> vector<4x512xf32>
    %233 = vector.broadcast %7 : vector<1x512xf32> to vector<4x512xf32>
    %234 = arith.mulf %232, %233 : vector<4x512xf32>
    %c8_140 = arith.constant 8 : index
    %c0_141 = arith.constant 0 : index
    %c0_142 = arith.constant 0 : index
    %235 = vector.load %arg5[%c8_140, %c0_141, %c0_142] : memref<9x8x4xbf16, #tpu.memory_space<vmem>>, vector<1x8x4xbf16>
    %236 = vector.shape_cast %235 : vector<1x8x4xbf16> to vector<8x4xbf16>
    %237 = arith.truncf %234 : vector<4x512xf32> to vector<4x512xbf16>
    %cst_143 = arith.constant dense<0.000000e+00> : vector<8x512xf32>
    %238 = tpu.matmul %236, %237, %cst_143 {dimension_numbers = #tpu.dot_dimension_numbers<[1], [0], [0], [1], [0, 0, 1, 1], [], []>} : vector<8x4xbf16>, vector<4x512xbf16>, vector<8x512xf32> -> vector<8x512xf32>
    %239 = arith.addf %231, %238 : vector<8x512xf32>
    %c0_144 = arith.constant 0 : index
    %c0_145 = arith.constant 0 : index
    %240 = vector.load %arg8[%c0_144, %c0_145] : memref<8x1xf32, #tpu.memory_space<vmem>>, vector<8x1xf32>
    %c0_146 = arith.constant 0 : index
    %c0_147 = arith.constant 0 : index
    %241 = vector.load %arg9[%c0_146, %c0_147] : memref<8x1xf32, #tpu.memory_space<vmem>>, vector<8x1xf32>
    %cst_148 = arith.constant dense<0.000000e+00> : vector<8xf32>
    %242 = vector.multi_reduction <add>, %239, %cst_148 [1] : vector<8x512xf32> to vector<8xf32>
    %243 = vector.shape_cast %242 : vector<8xf32> to vector<8x1xf32>
    %cst_149 = arith.constant 0.001953125 : f32
    %244 = vector.broadcast %cst_149 : f32 to vector<8x1xf32>
    %245 = arith.mulf %243, %244 : vector<8x1xf32>
    %246 = vector.broadcast %245 : vector<8x1xf32> to vector<8x512xf32>
    %247 = arith.subf %239, %246 : vector<8x512xf32>
    %248 = arith.mulf %247, %247 : vector<8x512xf32>
    %cst_150 = arith.constant dense<0.000000e+00> : vector<8xf32>
    %249 = vector.multi_reduction <add>, %248, %cst_150 [1] : vector<8x512xf32> to vector<8xf32>
    %250 = vector.shape_cast %249 : vector<8xf32> to vector<8x1xf32>
    %cst_151 = arith.constant 0.001953125 : f32
    %251 = vector.broadcast %cst_151 : f32 to vector<8x1xf32>
    %252 = arith.mulf %250, %251 : vector<8x1xf32>
    %cst_152 = arith.constant 9.99999974E-6 : f32
    %253 = vector.broadcast %cst_152 : f32 to vector<8x1xf32>
    %254 = arith.addf %252, %253 : vector<8x1xf32>
    %255 = math.rsqrt %254 : vector<8x1xf32>
    %256 = arith.mulf %240, %255 : vector<8x1xf32>
    %257 = vector.broadcast %256 : vector<8x1xf32> to vector<8x512xf32>
    %258 = arith.mulf %247, %257 : vector<8x512xf32>
    %259 = vector.broadcast %241 : vector<8x1xf32> to vector<8x512xf32>
    %260 = arith.addf %258, %259 : vector<8x512xf32>
    %cst_153 = arith.constant 0.000000e+00 : f32
    %261 = vector.broadcast %cst_153 : f32 to vector<8x512xf32>
    %262 = arith.maximumf %260, %261 : vector<8x512xf32>
    %c0_154 = arith.constant 0 : index
    %c0_155 = arith.constant 0 : index
    %263 = vector.load %arg10[%c0_154, %c0_155] : memref<8x512xf32, #tpu.memory_space<vmem>>, vector<8x512xf32>
    tpu.vector_store %arg10[%c0_154, %c0_155], %262 {strides = array<i32>} : memref<8x512xf32, #tpu.memory_space<vmem>>, vector<8x512xf32>,
    return
  }
}

</mosaic_0001>

<llo_original>
// kernel: up_forward.1
$region0: #{up_forward.1}
  #allocation0 [shape = 'u32[]', space=smem, size = 0x4, offset = 0x4, fixed_abs, tag = 'smem constant byte address 0x4 - core index']
  #allocation1 [shape = 'u32[144,128]{1,0:T(1,128)}', space=vmem, size = 0x12000, scoped, tag = 'internal scratch']
  %s0 = inlined_call_operand.vmem [shape: bf16[4,512], index: 0, kind: input, shape index: {}]
  %s1 = inlined_call_operand.vmem [shape: bf16[4,512], index: 1, kind: input, shape index: {}]
  %s2 = inlined_call_operand.vmem [shape: f32[8,512], index: 2, kind: input, shape index: {}]
  %s3 = inlined_call_operand.vmem [shape: bf16[9,4,4], index: 3, kind: input, shape index: {}]
  %s4 = inlined_call_operand.vmem [shape: bf16[9,4,4], index: 4, kind: input, shape index: {}]
  %s5 = inlined_call_operand.vmem [shape: bf16[9,8,4], index: 5, kind: input, shape index: {}]
  %s6 = inlined_call_operand.vmem [shape: f32[4,1], index: 6, kind: input, shape index: {}]
  %s7 = inlined_call_operand.vmem [shape: f32[4,1], index: 7, kind: input, shape index: {}]
  %s8 = inlined_call_operand.vmem [shape: f32[8,1], index: 8, kind: input, shape index: {}]
  %s9 = inlined_call_operand.vmem [shape: f32[8,1], index: 9, kind: input, shape index: {}]
  %s10 = inlined_call_operand.vmem [shape: f32[8,512], index: 10, kind: output, shape index: {}]
  %s11 = sld [smem:[#allocation0]]
  $region50: #{up_forward.1} parent=0
    _
  %s13 = ssub.s32 1, %s11
  %s14 = scalar_select 0, %s13, %s11
  // Predicated region
  $region2: #{up_forward.1} parent=0 // pred_check
    _
  $region3: #{up_forward.1} parent=0 // pred_check_branch
    %16 = sbr.rel (0) target = $region5
  $region4: #{up_forward.1} parent=0 // pred_region
    _
  $region5: #{up_forward.1} parent=0 // pred_fallthru
    _
  // Predicated region
  $region6: #{up_forward.1} parent=0 // pred_check
    _
  $region7: #{up_forward.1} parent=0 // pred_check_branch
    %18 = sbr.rel (0) target = $region9
  $region8: #{up_forward.1} parent=0 // pred_region
    _
  $region9: #{up_forward.1} parent=0 // pred_fallthru
    _
  // Predicated region
  $region10: #{up_forward.1} parent=0 // pred_check
    _
  $region11: #{up_forward.1} parent=0 // pred_check_branch
    %20 = sbr.rel (0) target = $region13
  $region12: #{up_forward.1} parent=0 // pred_region
    _
  $region13: #{up_forward.1} parent=0 // pred_fallthru
    _
  // Predicated region
  $region14: #{up_forward.1} parent=0 // pred_check
    _
  $region15: #{up_forward.1} parent=0 // pred_check_branch
    %22 = sbr.rel (0) target = $region17
  $region16: #{up_forward.1} parent=0 // pred_region
    _
  $region17: #{up_forward.1} parent=0 // pred_fallthru
    _
  // Predicated region
  $region18: #{up_forward.1} parent=0 // pred_check
    _
  $region19: #{up_forward.1} parent=0 // pred_check_branch
    %24 = sbr.rel (0) target = $region21
  $region20: #{up_forward.1} parent=0 // pred_region
    _
  $region21: #{up_forward.1} parent=0 // pred_fallthru
    _
  // Predicated region
  $region22: #{up_forward.1} parent=0 // pred_check
    _
  $region23: #{up_forward.1} parent=0 // pred_check_branch
    %26 = sbr.rel (0) target = $region25
  $region24: #{up_forward.1} parent=0 // pred_region
    _
  $region25: #{up_forward.1} parent=0 // pred_fallthru
    _
  // Predicated region
  $region26: #{up_forward.1} parent=0 // pred_check
    _
  $region27: #{up_forward.1} parent=0 // pred_check_branch
    %28 = sbr.rel (0) target = $region29
  $region28: #{up_forward.1} parent=0 // pred_region
    _
  $region29: #{up_forward.1} parent=0 // pred_fallthru
    _
  // Predicated region
  $region30: #{up_forward.1} parent=0 // pred_check
    _
  $region31: #{up_forward.1} parent=0 // pred_check_branch
    %30 = sbr.rel (0) target = $region33
  $region32: #{up_forward.1} parent=0 // pred_region
    _
  $region33: #{up_forward.1} parent=0 // pred_fallthru
    _
  // Predicated region
  $region34: #{up_forward.1} parent=0 // pred_check
    _
  $region35: #{up_forward.1} parent=0 // pred_check_branch
    %32 = sbr.rel (0) target = $region37
  $region36: #{up_forward.1} parent=0 // pred_region
    _
  $region37: #{up_forward.1} parent=0 // pred_fallthru
    _
  // Predicated region
  $region38: #{up_forward.1} parent=0 // pred_check
    _
  $region39: #{up_forward.1} parent=0 // pred_check_branch
    %34 = sbr.rel (0) target = $region41
  $region40: #{up_forward.1} parent=0 // pred_region
    _
  $region41: #{up_forward.1} parent=0 // pred_fallthru
    _
  %v36 = vld [vmem:[%s2] ss:$8 sm:$0xf]
  %s37 = scalar_lea.vmem %s2, 1
  %v38 = vld [vmem:[%s37] ss:$8 sm:$0xf]
  %s39 = scalar_lea.vmem %s2, 2
  %v40 = vld [vmem:[%s39] ss:$8 sm:$0xf]
  %s41 = scalar_lea.vmem %s2, 3
  %v42 = vld [vmem:[%s41] ss:$8 sm:$0xf]
  %s43 = scalar_lea.vmem %s2, 4
  %v44 = vld [vmem:[%s43] ss:$8 sm:$0xf]
  %s45 = scalar_lea.vmem %s2, 5
  %v46 = vld [vmem:[%s45] ss:$8 sm:$0xf]
  %s47 = scalar_lea.vmem %s2, 6
  %v48 = vld [vmem:[%s47] ss:$8 sm:$0xf]
  %s49 = scalar_lea.vmem %s2, 7
  %v50 = vld [vmem:[%s49] ss:$8 sm:$0xf]
  %v51 = vld [vmem:[%s0] sm:$0xff]
  %v52 = vunpack.c.l.bf16 %v51
  %v53 = vunpack.c.h.bf16 %v51
  %v54 = vld [vmem:[%s1] sm:$0xff]
  %v55 = vunpack.c.l.bf16 %v54
  %v56 = vunpack.c.h.bf16 %v54
  %v59 = vcombine.high %v52, %v52
  %v60 = vcombine.high %v53, %v53
  %63 = vrot.lane.b32.xlu0 %v52, 17
  %v64 = vpop.permute.xlu0 %63
  %65 = vrot.lane.b32.xlu0 %v59, 17
  %v66 = vpop.permute.xlu0 %65
  %67 = vrot.lane.b32.xlu0 %v53, 17
  %v68 = vpop.permute.xlu0 %67
  %69 = vrot.lane.b32.xlu0 %v60, 17
  %v70 = vpop.permute.xlu0 %69
  %v71 = vlaneseq
  %v72 = vand.u32 %v71, 127
  %vm73 = vcmp.lt.s32.totalorder %v72, 17
  %v74 = vsel %vm73, %v68, %v70
  %v75 = vsel %vm73, %v66, %v68
  %v76 = vsel %vm73, %v64, %v66
  %v77 = vsel %vm73, %v70, %v64
  %v79 = vlaneseq
  %v80 = vshrl.u32 %v79, 7
  %v81 = vsub.s32 0, %v80
  %v82 = vrot.slane %v36, %v81
  %v83 = vlaneseq
  %v84 = vshrl.u32 %v83, 7
  %v85 = vsub.s32 1, %v84
  %v86 = vrot.slane %v36, %v85
  %v87 = vlaneseq
  %v88 = vshrl.u32 %v87, 7
  %v89 = vsub.s32 2, %v88
  %v90 = vrot.slane %v36, %v89
  %v91 = vlaneseq
  %v92 = vshrl.u32 %v91, 7
  %v93 = vsub.s32 3, %v92
  %v94 = vrot.slane %v36, %v93
  %v99 = vmul.f32 %v77, %v82
  %v100 = vmul.f32 %v76, %v86
  %v101 = vmul.f32 %v75, %v90
  %v102 = vmul.f32 %v74, %v94
  %v105 = vcombine.high %v55, %v55
  %v106 = vcombine.high %v56, %v56
  %109 = vrot.lane.b32.xlu0 %v55, 17
  %v110 = vpop.permute.xlu0 %109
  %111 = vrot.lane.b32.xlu0 %v105, 17
  %v112 = vpop.permute.xlu0 %111
  %113 = vrot.lane.b32.xlu0 %v56, 17
  %v114 = vpop.permute.xlu0 %113
  %115 = vrot.lane.b32.xlu0 %v106, 17
  %v116 = vpop.permute.xlu0 %115
  %v117 = vsel %vm73, %v114, %v116
  %v118 = vsel %vm73, %v112, %v114
  %v119 = vsel %vm73, %v110, %v112
  %v120 = vsel %vm73, %v116, %v110
  %v121 = vmul.f32 %v120, %v82
  %v122 = vmul.f32 %v119, %v86
  %v123 = vmul.f32 %v118, %v90
  %v124 = vmul.f32 %v117, %v94
  %v125 = vld [vmem:[%s3] sm:$0x3]
  %v126 = vpack.c.bf16 %v99, %v99
  %v127 = vpack.c.bf16 %v100, %v100
  %v128 = vpack.c.bf16 %v101, %v101
  %v129 = vpack.c.bf16 %v102, %v102
  %v130 = vld [vmem:[%s4] sm:$0x3]
  %v131 = vpack.c.bf16 %v121, %v121
  %v132 = vpack.c.bf16 %v122, %v122
  %v133 = vpack.c.bf16 %v123, %v123
  %v134 = vpack.c.bf16 %v124, %v124
  %vm135 = vcmask 31744
  %v137 = vsel %vm135, %v130, 0
  %vm139 = vcmask 1041408
  %v141 = vsel %vm139, %v131, 0
  %v144 = vsel %vm139, %v132, 0
  %v147 = vsel %vm139, %v133, 0
  %v150 = vsel %vm139, %v134, 0
  %152 = vmatprep.subr.bf16.mxu0 0
  %153 = vmatpush1.bf16.msra.mxu0 0
  %154 = vmatprep.subr.bf16.mxu0 0
  %155 = vmatpush1.bf16.msra.mxu0 0
  %156 = vmatprep.subr.bf16.mxu0 0
  %157 = vmatpush1.bf16.msra.mxu0 0
  %158 = vmatprep.subr.bf16.mxu0 0
  %159 = vmatpush1.bf16.msra.mxu0 0
  %160 = vmatprep.subr.bf16.mxu0 0
  %161 = vmatpush1.bf16.msra.mxu0 0
  %162 = vmatprep.subr.bf16.mxu0 0
  %163 = vmatpush1.bf16.msra.mxu0 0
  %164 = vmatprep.subr.bf16.mxu0 0
  %165 = vmatpush1.bf16.msra.mxu0 0
  %166 = vmatprep.subr.bf16.mxu0 %v144
  %167 = vmatpush1.bf16.msra.mxu0 %v141
  %168 = vmatprep.subr.bf16.mxu0 0
  %169 = vmatpush2.bf16.msra.mxu0 0
  %170 = vmatprep.subr.bf16.mxu0 0
  %171 = vmatpush2.bf16.msra.mxu0 0
  %172 = vmatprep.subr.bf16.mxu0 0
  %173 = vmatpush2.bf16.msra.mxu0 0
  %174 = vmatprep.subr.bf16.mxu0 0
  %175 = vmatpush2.bf16.msra.mxu0 0
  %176 = vmatprep.subr.bf16.mxu0 0
  %177 = vmatpush2.bf16.msra.mxu0 0
  %178 = vmatprep.subr.bf16.mxu0 0
  %179 = vmatpush2.bf16.msra.mxu0 0
  %180 = vmatprep.subr.bf16.mxu0 0
  %181 = vmatpush2.bf16.msra.mxu0 0
  %182 = vmatprep.subr.bf16.mxu0 0
  %183 = vmatpush2.bf16.msra.mxu0 0
  %184 = vmatprep.mubr.bf16.mxu0 0
  %185 = vmatmul.mubr.bf16.gmra.mxu0 %v137
  %v186 = vpop.f32.mrf.mxu0
  %v187 = vadd.f32 0.0, %v186
  %v188 = vpop.f32.mrf.mxu0
  %v189 = vadd.f32 0.0, %v188
  %v190 = vpop.f32.mrf.mxu0
  %v191 = vpop.f32.mrf.mxu0
  %192 = vdwg.mxu0
  %193 = vmatprep.subr.bf16.mxu0 0
  %194 = vmatpush1.bf16.msra.mxu0 0
  %195 = vmatprep.subr.bf16.mxu0 0
  %196 = vmatpush1.bf16.msra.mxu0 0
  %197 = vmatprep.subr.bf16.mxu0 0
  %198 = vmatpush1.bf16.msra.mxu0 0
  %199 = vmatprep.subr.bf16.mxu0 0
  %200 = vmatpush1.bf16.msra.mxu0 0
  %201 = vmatprep.subr.bf16.mxu0 0
  %202 = vmatpush1.bf16.msra.mxu0 0
  %203 = vmatprep.subr.bf16.mxu0 0
  %204 = vmatpush1.bf16.msra.mxu0 0
  %205 = vmatprep.subr.bf16.mxu0 0
  %206 = vmatpush1.bf16.msra.mxu0 0
  %207 = vmatprep.subr.bf16.mxu0 %v150
  %208 = vmatpush1.bf16.msra.mxu0 %v147
  %209 = vmatprep.subr.bf16.mxu0 0
  %210 = vmatpush2.bf16.msra.mxu0 0
  %211 = vmatprep.subr.bf16.mxu0 0
  %212 = vmatpush2.bf16.msra.mxu0 0
  %213 = vmatprep.subr.bf16.mxu0 0
  %214 = vmatpush2.bf16.msra.mxu0 0
  %215 = vmatprep.subr.bf16.mxu0 0
  %216 = vmatpush2.bf16.msra.mxu0 0
  %217 = vmatprep.subr.bf16.mxu0 0
  %218 = vmatpush2.bf16.msra.mxu0 0
  %219 = vmatprep.subr.bf16.mxu0 0
  %220 = vmatpush2.bf16.msra.mxu0 0
  %221 = vmatprep.subr.bf16.mxu0 0
  %222 = vmatpush2.bf16.msra.mxu0 0
  %223 = vmatprep.subr.bf16.mxu0 0
  %224 = vmatpush2.bf16.msra.mxu0 0
  %225 = vmatprep.mubr.bf16.mxu0 0
  %226 = vmatmul.mubr.bf16.gmra.mxu0 %v137
  %v227 = vpop.f32.mrf.mxu0
  %v228 = vadd.f32 0.0, %v227
  %v229 = vpop.f32.mrf.mxu0
  %v230 = vadd.f32 0.0, %v229
  %v231 = vpop.f32.mrf.mxu0
  %v232 = vpop.f32.mrf.mxu0
  %233 = vdwg.mxu0
  %v235 = vsel %vm135, %v125, 0
  %v238 = vsel %vm139, %v126, 0
  %v241 = vsel %vm139, %v127, 0
  %v244 = vsel %vm139, %v128, 0
  %v247 = vsel %vm139, %v129, 0
  %249 = vmatprep.subr.bf16.mxu0 0
  %250 = vmatpush1.bf16.msra.mxu0 0
  %251 = vmatprep.subr.bf16.mxu0 0
  %252 = vmatpush1.bf16.msra.mxu0 0
  %253 = vmatprep.subr.bf16.mxu0 0
  %254 = vmatpush1.bf16.msra.mxu0 0
  %255 = vmatprep.subr.bf16.mxu0 0
  %256 = vmatpush1.bf16.msra.mxu0 0
  %257 = vmatprep.subr.bf16.mxu0 0
  %258 = vmatpush1.bf16.msra.mxu0 0
  %259 = vmatprep.subr.bf16.mxu0 0
  %260 = vmatpush1.bf16.msra.mxu0 0
  %261 = vmatprep.subr.bf16.mxu0 0
  %262 = vmatpush1.bf16.msra.mxu0 0
  %263 = vmatprep.subr.bf16.mxu0 %v241
  %264 = vmatpush1.bf16.msra.mxu0 %v238
  %265 = vmatprep.subr.bf16.mxu0 0
  %266 = vmatpush2.bf16.msra.mxu0 0
  %267 = vmatprep.subr.bf16.mxu0 0
  %268 = vmatpush2.bf16.msra.mxu0 0
  %269 = vmatprep.subr.bf16.mxu0 0
  %270 = vmatpush2.bf16.msra.mxu0 0
  %271 = vmatprep.subr.bf16.mxu0 0
  %272 = vmatpush2.bf16.msra.mxu0 0
  %273 = vmatprep.subr.bf16.mxu0 0
  %274 = vmatpush2.bf16.msra.mxu0 0
  %275 = vmatprep.subr.bf16.mxu0 0
  %276 = vmatpush2.bf16.msra.mxu0 0
  %277 = vmatprep.subr.bf16.mxu0 0
  %278 = vmatpush2.bf16.msra.mxu0 0
  %279 = vmatprep.subr.bf16.mxu0 0
  %280 = vmatpush2.bf16.msra.mxu0 0
  %281 = vmatprep.mubr.bf16.mxu0 0
  %282 = vmatmul.mubr.bf16.gmra.mxu0 %v235
  %v283 = vpop.f32.mrf.mxu0
  %v284 = vadd.f32 %v187, %v283
  %v285 = vpop.f32.mrf.mxu0
  %v286 = vadd.f32 %v189, %v285
  %v287 = vpop.f32.mrf.mxu0
  %v288 = vpop.f32.mrf.mxu0
  %289 = vdwg.mxu0
  %290 = vmatprep.subr.bf16.mxu0 0
  %291 = vmatpush1.bf16.msra.mxu0 0
  %292 = vmatprep.subr.bf16.mxu0 0
  %293 = vmatpush1.bf16.msra.mxu0 0
  %294 = vmatprep.subr.bf16.mxu0 0
  %295 = vmatpush1.bf16.msra.mxu0 0
  %296 = vmatprep.subr.bf16.mxu0 0
  %297 = vmatpush1.bf16.msra.mxu0 0
  %298 = vmatprep.subr.bf16.mxu0 0
  %299 = vmatpush1.bf16.msra.mxu0 0
  %300 = vmatprep.subr.bf16.mxu0 0
  %301 = vmatpush1.bf16.msra.mxu0 0
  %302 = vmatprep.subr.bf16.mxu0 0
  %303 = vmatpush1.bf16.msra.mxu0 0
  %304 = vmatprep.subr.bf16.mxu0 %v247
  %305 = vmatpush1.bf16.msra.mxu0 %v244
  %306 = vmatprep.subr.bf16.mxu0 0
  %307 = vmatpush2.bf16.msra.mxu0 0
  %308 = vmatprep.subr.bf16.mxu0 0
  %309 = vmatpush2.bf16.msra.mxu0 0
  %310 = vmatprep.subr.bf16.mxu0 0
  %311 = vmatpush2.bf16.msra.mxu0 0
  %312 = vmatprep.subr.bf16.mxu0 0
  %313 = vmatpush2.bf16.msra.mxu0 0
  %314 = vmatprep.subr.bf16.mxu0 0
  %315 = vmatpush2.bf16.msra.mxu0 0
  %316 = vmatprep.subr.bf16.mxu0 0
  %317 = vmatpush2.bf16.msra.mxu0 0
  %318 = vmatprep.subr.bf16.mxu0 0
  %319 = vmatpush2.bf16.msra.mxu0 0
  %320 = vmatprep.subr.bf16.mxu0 0
  %321 = vmatpush2.bf16.msra.mxu0 0
  %322 = vmatprep.mubr.bf16.mxu0 0
  %323 = vmatmul.mubr.bf16.gmra.mxu0 %v235
  %v324 = vpop.f32.mrf.mxu0
  %v325 = vadd.f32 %v228, %v324
  %v326 = vpop.f32.mrf.mxu0
  %v327 = vadd.f32 %v230, %v326
  %v328 = vpop.f32.mrf.mxu0
  %v329 = vpop.f32.mrf.mxu0
  %330 = vdwg.mxu0
  %331 = vrot.lane.b32.xlu0 %v52, 16
  %v332 = vpop.permute.xlu0 %331
  %333 = vrot.lane.b32.xlu0 %v59, 16
  %v334 = vpop.permute.xlu0 %333
  %335 = vrot.lane.b32.xlu0 %v53, 16
  %v336 = vpop.permute.xlu0 %335
  %337 = vrot.lane.b32.xlu0 %v60, 16
  %v338 = vpop.permute.xlu0 %337
  %vm339 = vcmp.lt.s32.totalorder %v72, 16
  %v340 = vsel %vm339, %v336, %v338
  %v341 = vsel %vm339, %v334, %v336
  %v342 = vsel %vm339, %v332, %v334
  %v343 = vsel %vm339, %v338, %v332
  %v345 = vlaneseq
  %v346 = vshrl.u32 %v345, 7
  %v347 = vsub.s32 0, %v346
  %v348 = vrot.slane %v38, %v347
  %v349 = vlaneseq
  %v350 = vshrl.u32 %v349, 7
  %v351 = vsub.s32 1, %v350
  %v352 = vrot.slane %v38, %v351
  %v353 = vlaneseq
  %v354 = vshrl.u32 %v353, 7
  %v355 = vsub.s32 2, %v354
  %v356 = vrot.slane %v38, %v355
  %v357 = vlaneseq
  %v358 = vshrl.u32 %v357, 7
  %v359 = vsub.s32 3, %v358
  %v360 = vrot.slane %v38, %v359
  %v365 = vmul.f32 %v343, %v348
  %v366 = vmul.f32 %v342, %v352
  %v367 = vmul.f32 %v341, %v356
  %v368 = vmul.f32 %v340, %v360
  %369 = vrot.lane.b32.xlu0 %v55, 16
  %v370 = vpop.permute.xlu0 %369
  %371 = vrot.lane.b32.xlu0 %v105, 16
  %v372 = vpop.permute.xlu0 %371
  %373 = vrot.lane.b32.xlu0 %v56, 16
  %v374 = vpop.permute.xlu0 %373
  %375 = vrot.lane.b32.xlu0 %v106, 16
  %v376 = vpop.permute.xlu0 %375
  %v377 = vsel %vm339, %v374, %v376
  %v378 = vsel %vm339, %v372, %v374
  %v379 = vsel %vm339, %v370, %v372
  %v380 = vsel %vm339, %v376, %v370
  %v381 = vmul.f32 %v380, %v348
  %v382 = vmul.f32 %v379, %v352
  %v383 = vmul.f32 %v378, %v356
  %v384 = vmul.f32 %v377, %v360
  %s385 = scalar_lea.vmem %s3, 2
  %v386 = vld [vmem:[%s385] sm:$0x3]
  %v387 = vpack.c.bf16 %v365, %v365
  %v388 = vpack.c.bf16 %v366, %v366
  %v389 = vpack.c.bf16 %v367, %v367
  %v390 = vpack.c.bf16 %v368, %v368
  %v392 = vsel %vm135, %v386, 0
  %v395 = vsel %vm139, %v387, 0
  %v398 = vsel %vm139, %v388, 0
  %v401 = vsel %vm139, %v389, 0
  %v404 = vsel %vm139, %v390, 0
  %406 = vmatprep.subr.bf16.mxu0 0
  %407 = vmatpush1.bf16.msra.mxu0 0
  %408 = vmatprep.subr.bf16.mxu0 0
  %409 = vmatpush1.bf16.msra.mxu0 0
  %410 = vmatprep.subr.bf16.mxu0 0
  %411 = vmatpush1.bf16.msra.mxu0 0
  %412 = vmatprep.subr.bf16.mxu0 0
  %413 = vmatpush1.bf16.msra.mxu0 0
  %414 = vmatprep.subr.bf16.mxu0 0
  %415 = vmatpush1.bf16.msra.mxu0 0
  %416 = vmatprep.subr.bf16.mxu0 0
  %417 = vmatpush1.bf16.msra.mxu0 0
  %418 = vmatprep.subr.bf16.mxu0 0
  %419 = vmatpush1.bf16.msra.mxu0 0
  %420 = vmatprep.subr.bf16.mxu0 %v398
  %421 = vmatpush1.bf16.msra.mxu0 %v395
  %422 = vmatprep.subr.bf16.mxu0 0
  %423 = vmatpush2.bf16.msra.mxu0 0
  %424 = vmatprep.subr.bf16.mxu0 0
  %425 = vmatpush2.bf16.msra.mxu0 0
  %426 = vmatprep.subr.bf16.mxu0 0
  %427 = vmatpush2.bf16.msra.mxu0 0
  %428 = vmatprep.subr.bf16.mxu0 0
  %429 = vmatpush2.bf16.msra.mxu0 0
  %430 = vmatprep.subr.bf16.mxu0 0
  %431 = vmatpush2.bf16.msra.mxu0 0
  %432 = vmatprep.subr.bf16.mxu0 0
  %433 = vmatpush2.bf16.msra.mxu0 0
  %434 = vmatprep.subr.bf16.mxu0 0
  %435 = vmatpush2.bf16.msra.mxu0 0
  %436 = vmatprep.subr.bf16.mxu0 0
  %437 = vmatpush2.bf16.msra.mxu0 0
  %438 = vmatprep.mubr.bf16.mxu0 0
  %439 = vmatmul.mubr.bf16.gmra.mxu0 %v392
  %v440 = vpop.f32.mrf.mxu0
  %v441 = vadd.f32 0.0, %v440
  %v442 = vpop.f32.mrf.mxu0
  %v443 = vadd.f32 0.0, %v442
  %v444 = vpop.f32.mrf.mxu0
  %v445 = vpop.f32.mrf.mxu0
  %446 = vdwg.mxu0
  %447 = vmatprep.subr.bf16.mxu0 0
  %448 = vmatpush1.bf16.msra.mxu0 0
  %449 = vmatprep.subr.bf16.mxu0 0
  %450 = vmatpush1.bf16.msra.mxu0 0
  %451 = vmatprep.subr.bf16.mxu0 0
  %452 = vmatpush1.bf16.msra.mxu0 0
  %453 = vmatprep.subr.bf16.mxu0 0
  %454 = vmatpush1.bf16.msra.mxu0 0
  %455 = vmatprep.subr.bf16.mxu0 0
  %456 = vmatpush1.bf16.msra.mxu0 0
  %457 = vmatprep.subr.bf16.mxu0 0
  %458 = vmatpush1.bf16.msra.mxu0 0
  %459 = vmatprep.subr.bf16.mxu0 0
  %460 = vmatpush1.bf16.msra.mxu0 0
  %461 = vmatprep.subr.bf16.mxu0 %v404
  %462 = vmatpush1.bf16.msra.mxu0 %v401
  %463 = vmatprep.subr.bf16.mxu0 0
  %464 = vmatpush2.bf16.msra.mxu0 0
  %465 = vmatprep.subr.bf16.mxu0 0
  %466 = vmatpush2.bf16.msra.mxu0 0
  %467 = vmatprep.subr.bf16.mxu0 0
  %468 = vmatpush2.bf16.msra.mxu0 0
  %469 = vmatprep.subr.bf16.mxu0 0
  %470 = vmatpush2.bf16.msra.mxu0 0
  %471 = vmatprep.subr.bf16.mxu0 0
  %472 = vmatpush2.bf16.msra.mxu0 0
  %473 = vmatprep.subr.bf16.mxu0 0
  %474 = vmatpush2.bf16.msra.mxu0 0
  %475 = vmatprep.subr.bf16.mxu0 0
  %476 = vmatpush2.bf16.msra.mxu0 0
  %477 = vmatprep.subr.bf16.mxu0 0
  %478 = vmatpush2.bf16.msra.mxu0 0
  %479 = vmatprep.mubr.bf16.mxu0 0
  %480 = vmatmul.mubr.bf16.gmra.mxu0 %v392
  %v481 = vpop.f32.mrf.mxu0
  %v482 = vadd.f32 0.0, %v481
  %v483 = vpop.f32.mrf.mxu0
  %v484 = vadd.f32 0.0, %v483
  %v485 = vpop.f32.mrf.mxu0
  %v486 = vpop.f32.mrf.mxu0
  %487 = vdwg.mxu0
  %v488 = vadd.f32 %v284, %v441
  %v489 = vadd.f32 %v286, %v443
  %v490 = vadd.f32 %v325, %v482
  %v491 = vadd.f32 %v327, %v484
  %s492 = scalar_lea.vmem %s4, 2
  %v493 = vld [vmem:[%s492] sm:$0x3]
  %v494 = vpack.c.bf16 %v381, %v381
  %v495 = vpack.c.bf16 %v382, %v382
  %v496 = vpack.c.bf16 %v383, %v383
  %v497 = vpack.c.bf16 %v384, %v384
  %v499 = vsel %vm135, %v493, 0
  %v502 = vsel %vm139, %v494, 0
  %v505 = vsel %vm139, %v495, 0
  %v508 = vsel %vm139, %v496, 0
  %v511 = vsel %vm139, %v497, 0
  %513 = vmatprep.subr.bf16.mxu0 0
  %514 = vmatpush1.bf16.msra.mxu0 0
  %515 = vmatprep.subr.bf16.mxu0 0
  %516 = vmatpush1.bf16.msra.mxu0 0
  %517 = vmatprep.subr.bf16.mxu0 0
  %518 = vmatpush1.bf16.msra.mxu0 0
  %519 = vmatprep.subr.bf16.mxu0 0
  %520 = vmatpush1.bf16.msra.mxu0 0
  %521 = vmatprep.subr.bf16.mxu0 0
  %522 = vmatpush1.bf16.msra.mxu0 0
  %523 = vmatprep.subr.bf16.mxu0 0
  %524 = vmatpush1.bf16.msra.mxu0 0
  %525 = vmatprep.subr.bf16.mxu0 0
  %526 = vmatpush1.bf16.msra.mxu0 0
  %527 = vmatprep.subr.bf16.mxu0 %v505
  %528 = vmatpush1.bf16.msra.mxu0 %v502
  %529 = vmatprep.subr.bf16.mxu0 0
  %530 = vmatpush2.bf16.msra.mxu0 0
  %531 = vmatprep.subr.bf16.mxu0 0
  %532 = vmatpush2.bf16.msra.mxu0 0
  %533 = vmatprep.subr.bf16.mxu0 0
  %534 = vmatpush2.bf16.msra.mxu0 0
  %535 = vmatprep.subr.bf16.mxu0 0
  %536 = vmatpush2.bf16.msra.mxu0 0
  %537 = vmatprep.subr.bf16.mxu0 0
  %538 = vmatpush2.bf16.msra.mxu0 0
  %539 = vmatprep.subr.bf16.mxu0 0
  %540 = vmatpush2.bf16.msra.mxu0 0
  %541 = vmatprep.subr.bf16.mxu0 0
  %542 = vmatpush2.bf16.msra.mxu0 0
  %543 = vmatprep.subr.bf16.mxu0 0
  %544 = vmatpush2.bf16.msra.mxu0 0
  %545 = vmatprep.mubr.bf16.mxu0 0
  %546 = vmatmul.mubr.bf16.gmra.mxu0 %v499
  %v547 = vpop.f32.mrf.mxu0
  %v548 = vadd.f32 0.0, %v547
  %v549 = vpop.f32.mrf.mxu0
  %v550 = vadd.f32 0.0, %v549
  %v551 = vpop.f32.mrf.mxu0
  %v552 = vpop.f32.mrf.mxu0
  %553 = vdwg.mxu0
  %554 = vmatprep.subr.bf16.mxu0 0
  %555 = vmatpush1.bf16.msra.mxu0 0
  %556 = vmatprep.subr.bf16.mxu0 0
  %557 = vmatpush1.bf16.msra.mxu0 0
  %558 = vmatprep.subr.bf16.mxu0 0
  %559 = vmatpush1.bf16.msra.mxu0 0
  %560 = vmatprep.subr.bf16.mxu0 0
  %561 = vmatpush1.bf16.msra.mxu0 0
  %562 = vmatprep.subr.bf16.mxu0 0
  %563 = vmatpush1.bf16.msra.mxu0 0
  %564 = vmatprep.subr.bf16.mxu0 0
  %565 = vmatpush1.bf16.msra.mxu0 0
  %566 = vmatprep.subr.bf16.mxu0 0
  %567 = vmatpush1.bf16.msra.mxu0 0
  %568 = vmatprep.subr.bf16.mxu0 %v511
  %569 = vmatpush1.bf16.msra.mxu0 %v508
  %570 = vmatprep.subr.bf16.mxu0 0
  %571 = vmatpush2.bf16.msra.mxu0 0
  %572 = vmatprep.subr.bf16.mxu0 0
  %573 = vmatpush2.bf16.msra.mxu0 0
  %574 = vmatprep.subr.bf16.mxu0 0
  %575 = vmatpush2.bf16.msra.mxu0 0
  %576 = vmatprep.subr.bf16.mxu0 0
  %577 = vmatpush2.bf16.msra.mxu0 0
  %578 = vmatprep.subr.bf16.mxu0 0
  %579 = vmatpush2.bf16.msra.mxu0 0
  %580 = vmatprep.subr.bf16.mxu0 0
  %581 = vmatpush2.bf16.msra.mxu0 0
  %582 = vmatprep.subr.bf16.mxu0 0
  %583 = vmatpush2.bf16.msra.mxu0 0
  %584 = vmatprep.subr.bf16.mxu0 0
  %585 = vmatpush2.bf16.msra.mxu0 0
  %586 = vmatprep.mubr.bf16.mxu0 0
  %587 = vmatmul.mubr.bf16.gmra.mxu0 %v499
  %v588 = vpop.f32.mrf.mxu0
  %v589 = vadd.f32 0.0, %v588
  %v590 = vpop.f32.mrf.mxu0
  %v591 = vadd.f32 0.0, %v590
  %v592 = vpop.f32.mrf.mxu0
  %v593 = vpop.f32.mrf.mxu0
  %594 = vdwg.mxu0
  %v595 = vadd.f32 %v488, %v548
  %v596 = vadd.f32 %v489, %v550
  %v597 = vadd.f32 %v490, %v589
  %v598 = vadd.f32 %v491, %v591
  %599 = vrot.lane.b32.xlu0 %v52, 15
  %v600 = vpop.permute.xlu0 %599
  %601 = vrot.lane.b32.xlu0 %v59, 15
  %v602 = vpop.permute.xlu0 %601
  %603 = vrot.lane.b32.xlu0 %v53, 15
  %v604 = vpop.permute.xlu0 %603
  %605 = vrot.lane.b32.xlu0 %v60, 15
  %v606 = vpop.permute.xlu0 %605
  %vm607 = vcmp.lt.s32.totalorder %v72, 15
  %v608 = vsel %vm607, %v604, %v606
  %v609 = vsel %vm607, %v602, %v604
  %v610 = vsel %vm607, %v600, %v602
  %v611 = vsel %vm607, %v606, %v600
  %v613 = vlaneseq
  %v614 = vshrl.u32 %v613, 7
  %v615 = vsub.s32 0, %v614
  %v616 = vrot.slane %v40, %v615
  %v617 = vlaneseq
  %v618 = vshrl.u32 %v617, 7
  %v619 = vsub.s32 1, %v618
  %v620 = vrot.slane %v40, %v619
  %v621 = vlaneseq
  %v622 = vshrl.u32 %v621, 7
  %v623 = vsub.s32 2, %v622
  %v624 = vrot.slane %v40, %v623
  %v625 = vlaneseq
  %v626 = vshrl.u32 %v625, 7
  %v627 = vsub.s32 3, %v626
  %v628 = vrot.slane %v40, %v627
  %v633 = vmul.f32 %v611, %v616
  %v634 = vmul.f32 %v610, %v620
  %v635 = vmul.f32 %v609, %v624
  %v636 = vmul.f32 %v608, %v628
  %637 = vrot.lane.b32.xlu0 %v55, 15
  %v638 = vpop.permute.xlu0 %637
  %639 = vrot.lane.b32.xlu0 %v105, 15
  %v640 = vpop.permute.xlu0 %639
  %641 = vrot.lane.b32.xlu0 %v56, 15
  %v642 = vpop.permute.xlu0 %641
  %643 = vrot.lane.b32.xlu0 %v106, 15
  %v644 = vpop.permute.xlu0 %643
  %v645 = vsel %vm607, %v642, %v644
  %v646 = vsel %vm607, %v640, %v642
  %v647 = vsel %vm607, %v638, %v640
  %v648 = vsel %vm607, %v644, %v638
  %v649 = vmul.f32 %v648, %v616
  %v650 = vmul.f32 %v647, %v620
  %v651 = vmul.f32 %v646, %v624
  %v652 = vmul.f32 %v645, %v628
  %s653 = scalar_lea.vmem %s3, 4
  %v654 = vld [vmem:[%s653] sm:$0x3]
  %v655 = vpack.c.bf16 %v633, %v633
  %v656 = vpack.c.bf16 %v634, %v634
  %v657 = vpack.c.bf16 %v635, %v635
  %v658 = vpack.c.bf16 %v636, %v636
  %v660 = vsel %vm135, %v654, 0
  %v663 = vsel %vm139, %v655, 0
  %v666 = vsel %vm139, %v656, 0
  %v669 = vsel %vm139, %v657, 0
  %v672 = vsel %vm139, %v658, 0
  %674 = vmatprep.subr.bf16.mxu0 0
  %675 = vmatpush1.bf16.msra.mxu0 0
  %676 = vmatprep.subr.bf16.mxu0 0
  %677 = vmatpush1.bf16.msra.mxu0 0
  %678 = vmatprep.subr.bf16.mxu0 0
  %679 = vmatpush1.bf16.msra.mxu0 0
  %680 = vmatprep.subr.bf16.mxu0 0
  %681 = vmatpush1.bf16.msra.mxu0 0
  %682 = vmatprep.subr.bf16.mxu0 0
  %683 = vmatpush1.bf16.msra.mxu0 0
  %684 = vmatprep.subr.bf16.mxu0 0
  %685 = vmatpush1.bf16.msra.mxu0 0
  %686 = vmatprep.subr.bf16.mxu0 0
  %687 = vmatpush1.bf16.msra.mxu0 0
  %688 = vmatprep.subr.bf16.mxu0 %v666
  %689 = vmatpush1.bf16.msra.mxu0 %v663
  %690 = vmatprep.subr.bf16.mxu0 0
  %691 = vmatpush2.bf16.msra.mxu0 0
  %692 = vmatprep.subr.bf16.mxu0 0
  %693 = vmatpush2.bf16.msra.mxu0 0
  %694 = vmatprep.subr.bf16.mxu0 0
  %695 = vmatpush2.bf16.msra.mxu0 0
  %696 = vmatprep.subr.bf16.mxu0 0
  %697 = vmatpush2.bf16.msra.mxu0 0
  %698 = vmatprep.subr.bf16.mxu0 0
  %699 = vmatpush2.bf16.msra.mxu0 0
  %700 = vmatprep.subr.bf16.mxu0 0
  %701 = vmatpush2.bf16.msra.mxu0 0
  %702 = vmatprep.subr.bf16.mxu0 0
  %703 = vmatpush2.bf16.msra.mxu0 0
  %704 = vmatprep.subr.bf16.mxu0 0
  %705 = vmatpush2.bf16.msra.mxu0 0
  %706 = vmatprep.mubr.bf16.mxu0 0
  %707 = vmatmul.mubr.bf16.gmra.mxu0 %v660
  %v708 = vpop.f32.mrf.mxu0
  %v709 = vadd.f32 0.0, %v708
  %v710 = vpop.f32.mrf.mxu0
  %v711 = vadd.f32 0.0, %v710
  %v712 = vpop.f32.mrf.mxu0
  %v713 = vpop.f32.mrf.mxu0
  %714 = vdwg.mxu0
  %715 = vmatprep.subr.bf16.mxu0 0
  %716 = vmatpush1.bf16.msra.mxu0 0
  %717 = vmatprep.subr.bf16.mxu0 0
  %718 = vmatpush1.bf16.msra.mxu0 0
  %719 = vmatprep.subr.bf16.mxu0 0
  %720 = vmatpush1.bf16.msra.mxu0 0
  %721 = vmatprep.subr.bf16.mxu0 0
  %722 = vmatpush1.bf16.msra.mxu0 0
  %723 = vmatprep.subr.bf16.mxu0 0
  %724 = vmatpush1.bf16.msra.mxu0 0
  %725 = vmatprep.subr.bf16.mxu0 0
  %726 = vmatpush1.bf16.msra.mxu0 0
  %727 = vmatprep.subr.bf16.mxu0 0
  %728 = vmatpush1.bf16.msra.mxu0 0
  %729 = vmatprep.subr.bf16.mxu0 %v672
  %730 = vmatpush1.bf16.msra.mxu0 %v669
  %731 = vmatprep.subr.bf16.mxu0 0
  %732 = vmatpush2.bf16.msra.mxu0 0
  %733 = vmatprep.subr.bf16.mxu0 0
  %734 = vmatpush2.bf16.msra.mxu0 0
  %735 = vmatprep.subr.bf16.mxu0 0
  %736 = vmatpush2.bf16.msra.mxu0 0
  %737 = vmatprep.subr.bf16.mxu0 0
  %738 = vmatpush2.bf16.msra.mxu0 0
  %739 = vmatprep.subr.bf16.mxu0 0
  %740 = vmatpush2.bf16.msra.mxu0 0
  %741 = vmatprep.subr.bf16.mxu0 0
  %742 = vmatpush2.bf16.msra.mxu0 0
  %743 = vmatprep.subr.bf16.mxu0 0
  %744 = vmatpush2.bf16.msra.mxu0 0
  %745 = vmatprep.subr.bf16.mxu0 0
  %746 = vmatpush2.bf16.msra.mxu0 0
  %747 = vmatprep.mubr.bf16.mxu0 0
  %748 = vmatmul.mubr.bf16.gmra.mxu0 %v660
  %v749 = vpop.f32.mrf.mxu0
  %v750 = vadd.f32 0.0, %v749
  %v751 = vpop.f32.mrf.mxu0
  %v752 = vadd.f32 0.0, %v751
  %v753 = vpop.f32.mrf.mxu0
  %v754 = vpop.f32.mrf.mxu0
  %755 = vdwg.mxu0
  %v756 = vadd.f32 %v595, %v709
  %v757 = vadd.f32 %v596, %v711
  %v758 = vadd.f32 %v597, %v750
  %v759 = vadd.f32 %v598, %v752
  %s760 = scalar_lea.vmem %s4, 4
  %v761 = vld [vmem:[%s760] sm:$0x3]
  %v762 = vpack.c.bf16 %v649, %v649
  %v763 = vpack.c.bf16 %v650, %v650
  %v764 = vpack.c.bf16 %v651, %v651
  %v765 = vpack.c.bf16 %v652, %v652
  %v767 = vsel %vm135, %v761, 0
  %v770 = vsel %vm139, %v762, 0
  %v773 = vsel %vm139, %v763, 0
  %v776 = vsel %vm139, %v764, 0
  %v779 = vsel %vm139, %v765, 0
  %781 = vmatprep.subr.bf16.mxu0 0
  %782 = vmatpush1.bf16.msra.mxu0 0
  %783 = vmatprep.subr.bf16.mxu0 0
  %784 = vmatpush1.bf16.msra.mxu0 0
  %785 = vmatprep.subr.bf16.mxu0 0
  %786 = vmatpush1.bf16.msra.mxu0 0
  %787 = vmatprep.subr.bf16.mxu0 0
  %788 = vmatpush1.bf16.msra.mxu0 0
  %789 = vmatprep.subr.bf16.mxu0 0
  %790 = vmatpush1.bf16.msra.mxu0 0
  %791 = vmatprep.subr.bf16.mxu0 0
  %792 = vmatpush1.bf16.msra.mxu0 0
  %793 = vmatprep.subr.bf16.mxu0 0
  %794 = vmatpush1.bf16.msra.mxu0 0
  %795 = vmatprep.subr.bf16.mxu0 %v773
  %796 = vmatpush1.bf16.msra.mxu0 %v770
  %797 = vmatprep.subr.bf16.mxu0 0
  %798 = vmatpush2.bf16.msra.mxu0 0
  %799 = vmatprep.subr.bf16.mxu0 0
  %800 = vmatpush2.bf16.msra.mxu0 0
  %801 = vmatprep.subr.bf16.mxu0 0
  %802 = vmatpush2.bf16.msra.mxu0 0
  %803 = vmatprep.subr.bf16.mxu0 0
  %804 = vmatpush2.bf16.msra.mxu0 0
  %805 = vmatprep.subr.bf16.mxu0 0
  %806 = vmatpush2.bf16.msra.mxu0 0
  %807 = vmatprep.subr.bf16.mxu0 0
  %808 = vmatpush2.bf16.msra.mxu0 0
  %809 = vmatprep.subr.bf16.mxu0 0
  %810 = vmatpush2.bf16.msra.mxu0 0
  %811 = vmatprep.subr.bf16.mxu0 0
  %812 = vmatpush2.bf16.msra.mxu0 0
  %813 = vmatprep.mubr.bf16.mxu0 0
  %814 = vmatmul.mubr.bf16.gmra.mxu0 %v767
  %v815 = vpop.f32.mrf.mxu0
  %v816 = vadd.f32 0.0, %v815
  %v817 = vpop.f32.mrf.mxu0
  %v818 = vadd.f32 0.0, %v817
  %v819 = vpop.f32.mrf.mxu0
  %v820 = vpop.f32.mrf.mxu0
  %821 = vdwg.mxu0
  %822 = vmatprep.subr.bf16.mxu0 0
  %823 = vmatpush1.bf16.msra.mxu0 0
  %824 = vmatprep.subr.bf16.mxu0 0
  %825 = vmatpush1.bf16.msra.mxu0 0
  %826 = vmatprep.subr.bf16.mxu0 0
  %827 = vmatpush1.bf16.msra.mxu0 0
  %828 = vmatprep.subr.bf16.mxu0 0
  %829 = vmatpush1.bf16.msra.mxu0 0
  %830 = vmatprep.subr.bf16.mxu0 0
  %831 = vmatpush1.bf16.msra.mxu0 0
  %832 = vmatprep.subr.bf16.mxu0 0
  %833 = vmatpush1.bf16.msra.mxu0 0
  %834 = vmatprep.subr.bf16.mxu0 0
  %835 = vmatpush1.bf16.msra.mxu0 0
  %836 = vmatprep.subr.bf16.mxu0 %v779
  %837 = vmatpush1.bf16.msra.mxu0 %v776
  %838 = vmatprep.subr.bf16.mxu0 0
  %839 = vmatpush2.bf16.msra.mxu0 0
  %840 = vmatprep.subr.bf16.mxu0 0
  %841 = vmatpush2.bf16.msra.mxu0 0
  %842 = vmatprep.subr.bf16.mxu0 0
  %843 = vmatpush2.bf16.msra.mxu0 0
  %844 = vmatprep.subr.bf16.mxu0 0
  %845 = vmatpush2.bf16.msra.mxu0 0
  %846 = vmatprep.subr.bf16.mxu0 0
  %847 = vmatpush2.bf16.msra.mxu0 0
  %848 = vmatprep.subr.bf16.mxu0 0
  %849 = vmatpush2.bf16.msra.mxu0 0
  %850 = vmatprep.subr.bf16.mxu0 0
  %851 = vmatpush2.bf16.msra.mxu0 0
  %852 = vmatprep.subr.bf16.mxu0 0
  %853 = vmatpush2.bf16.msra.mxu0 0
  %854 = vmatprep.mubr.bf16.mxu0 0
  %855 = vmatmul.mubr.bf16.gmra.mxu0 %v767
  %v856 = vpop.f32.mrf.mxu0
  %v857 = vadd.f32 0.0, %v856
  %v858 = vpop.f32.mrf.mxu0
  %v859 = vadd.f32 0.0, %v858
  %v860 = vpop.f32.mrf.mxu0
  %v861 = vpop.f32.mrf.mxu0
  %862 = vdwg.mxu0
  %v863 = vadd.f32 %v756, %v816
  %v864 = vadd.f32 %v757, %v818
  %v865 = vadd.f32 %v758, %v857
  %v866 = vadd.f32 %v759, %v859
  %867 = vrot.lane.b32.xlu0 %v52, 1
  %v868 = vpop.permute.xlu0 %867
  %869 = vrot.lane.b32.xlu0 %v59, 1
  %v870 = vpop.permute.xlu0 %869
  %871 = vrot.lane.b32.xlu0 %v53, 1
  %v872 = vpop.permute.xlu0 %871
  %873 = vrot.lane.b32.xlu0 %v60, 1
  %v874 = vpop.permute.xlu0 %873
  %vm875 = vcmp.lt.s32.totalorder %v72, 1
  %v876 = vsel %vm875, %v872, %v874
  %v877 = vsel %vm875, %v870, %v872
  %v878 = vsel %vm875, %v868, %v870
  %v879 = vsel %vm875, %v874, %v868
  %v881 = vlaneseq
  %v882 = vshrl.u32 %v881, 7
  %v883 = vsub.s32 0, %v882
  %v884 = vrot.slane %v42, %v883
  %v885 = vlaneseq
  %v886 = vshrl.u32 %v885, 7
  %v887 = vsub.s32 1, %v886
  %v888 = vrot.slane %v42, %v887
  %v889 = vlaneseq
  %v890 = vshrl.u32 %v889, 7
  %v891 = vsub.s32 2, %v890
  %v892 = vrot.slane %v42, %v891
  %v893 = vlaneseq
  %v894 = vshrl.u32 %v893, 7
  %v895 = vsub.s32 3, %v894
  %v896 = vrot.slane %v42, %v895
  %v901 = vmul.f32 %v879, %v884
  %v902 = vmul.f32 %v878, %v888
  %v903 = vmul.f32 %v877, %v892
  %v904 = vmul.f32 %v876, %v896
  %905 = vrot.lane.b32.xlu0 %v55, 1
  %v906 = vpop.permute.xlu0 %905
  %907 = vrot.lane.b32.xlu0 %v105, 1
  %v908 = vpop.permute.xlu0 %907
  %909 = vrot.lane.b32.xlu0 %v56, 1
  %v910 = vpop.permute.xlu0 %909
  %911 = vrot.lane.b32.xlu0 %v106, 1
  %v912 = vpop.permute.xlu0 %911
  %v913 = vsel %vm875, %v910, %v912
  %v914 = vsel %vm875, %v908, %v910
  %v915 = vsel %vm875, %v906, %v908
  %v916 = vsel %vm875, %v912, %v906
  %v917 = vmul.f32 %v916, %v884
  %v918 = vmul.f32 %v915, %v888
  %v919 = vmul.f32 %v914, %v892
  %v920 = vmul.f32 %v913, %v896
  %s921 = scalar_lea.vmem %s3, 6
  %v922 = vld [vmem:[%s921] sm:$0x3]
  %v923 = vpack.c.bf16 %v901, %v901
  %v924 = vpack.c.bf16 %v902, %v902
  %v925 = vpack.c.bf16 %v903, %v903
  %v926 = vpack.c.bf16 %v904, %v904
  %v928 = vsel %vm135, %v922, 0
  %v931 = vsel %vm139, %v923, 0
  %v934 = vsel %vm139, %v924, 0
  %v937 = vsel %vm139, %v925, 0
  %v940 = vsel %vm139, %v926, 0
  %942 = vmatprep.subr.bf16.mxu0 0
  %943 = vmatpush1.bf16.msra.mxu0 0
  %944 = vmatprep.subr.bf16.mxu0 0
  %945 = vmatpush1.bf16.msra.mxu0 0
  %946 = vmatprep.subr.bf16.mxu0 0
  %947 = vmatpush1.bf16.msra.mxu0 0
  %948 = vmatprep.subr.bf16.mxu0 0
  %949 = vmatpush1.bf16.msra.mxu0 0
  %950 = vmatprep.subr.bf16.mxu0 0
  %951 = vmatpush1.bf16.msra.mxu0 0
  %952 = vmatprep.subr.bf16.mxu0 0
  %953 = vmatpush1.bf16.msra.mxu0 0
  %954 = vmatprep.subr.bf16.mxu0 0
  %955 = vmatpush1.bf16.msra.mxu0 0
  %956 = vmatprep.subr.bf16.mxu0 %v934
  %957 = vmatpush1.bf16.msra.mxu0 %v931
  %958 = vmatprep.subr.bf16.mxu0 0
  %959 = vmatpush2.bf16.msra.mxu0 0
  %960 = vmatprep.subr.bf16.mxu0 0
  %961 = vmatpush2.bf16.msra.mxu0 0
  %962 = vmatprep.subr.bf16.mxu0 0
  %963 = vmatpush2.bf16.msra.mxu0 0
  %964 = vmatprep.subr.bf16.mxu0 0
  %965 = vmatpush2.bf16.msra.mxu0 0
  %966 = vmatprep.subr.bf16.mxu0 0
  %967 = vmatpush2.bf16.msra.mxu0 0
  %968 = vmatprep.subr.bf16.mxu0 0
  %969 = vmatpush2.bf16.msra.mxu0 0
  %970 = vmatprep.subr.bf16.mxu0 0
  %971 = vmatpush2.bf16.msra.mxu0 0
  %972 = vmatprep.subr.bf16.mxu0 0
  %973 = vmatpush2.bf16.msra.mxu0 0
  %974 = vmatprep.mubr.bf16.mxu0 0
  %975 = vmatmul.mubr.bf16.gmra.mxu0 %v928
  %v976 = vpop.f32.mrf.mxu0
  %v977 = vadd.f32 0.0, %v976
  %v978 = vpop.f32.mrf.mxu0
  %v979 = vadd.f32 0.0, %v978
  %v980 = vpop.f32.mrf.mxu0
  %v981 = vpop.f32.mrf.mxu0
  %982 = vdwg.mxu0
  %983 = vmatprep.subr.bf16.mxu0 0
  %984 = vmatpush1.bf16.msra.mxu0 0
  %985 = vmatprep.subr.bf16.mxu0 0
  %986 = vmatpush1.bf16.msra.mxu0 0
  %987 = vmatprep.subr.bf16.mxu0 0
  %988 = vmatpush1.bf16.msra.mxu0 0
  %989 = vmatprep.subr.bf16.mxu0 0
  %990 = vmatpush1.bf16.msra.mxu0 0
  %991 = vmatprep.subr.bf16.mxu0 0
  %992 = vmatpush1.bf16.msra.mxu0 0
  %993 = vmatprep.subr.bf16.mxu0 0
  %994 = vmatpush1.bf16.msra.mxu0 0
  %995 = vmatprep.subr.bf16.mxu0 0
  %996 = vmatpush1.bf16.msra.mxu0 0
  %997 = vmatprep.subr.bf16.mxu0 %v940
  %998 = vmatpush1.bf16.msra.mxu0 %v937
  %999 = vmatprep.subr.bf16.mxu0 0
  %1000 = vmatpush2.bf16.msra.mxu0 0
  %1001 = vmatprep.subr.bf16.mxu0 0
  %1002 = vmatpush2.bf16.msra.mxu0 0
  %1003 = vmatprep.subr.bf16.mxu0 0
  %1004 = vmatpush2.bf16.msra.mxu0 0
  %1005 = vmatprep.subr.bf16.mxu0 0
  %1006 = vmatpush2.bf16.msra.mxu0 0
  %1007 = vmatprep.subr.bf16.mxu0 0
  %1008 = vmatpush2.bf16.msra.mxu0 0
  %1009 = vmatprep.subr.bf16.mxu0 0
  %1010 = vmatpush2.bf16.msra.mxu0 0
  %1011 = vmatprep.subr.bf16.mxu0 0
  %1012 = vmatpush2.bf16.msra.mxu0 0
  %1013 = vmatprep.subr.bf16.mxu0 0
  %1014 = vmatpush2.bf16.msra.mxu0 0
  %1015 = vmatprep.mubr.bf16.mxu0 0
  %1016 = vmatmul.mubr.bf16.gmra.mxu0 %v928
  %v1017 = vpop.f32.mrf.mxu0
  %v1018 = vadd.f32 0.0, %v1017
  %v1019 = vpop.f32.mrf.mxu0
  %v1020 = vadd.f32 0.0, %v1019
  %v1021 = vpop.f32.mrf.mxu0
  %v1022 = vpop.f32.mrf.mxu0
  %1023 = vdwg.mxu0
  %v1024 = vadd.f32 %v863, %v977
  %v1025 = vadd.f32 %v864, %v979
  %v1026 = vadd.f32 %v865, %v1018
  %v1027 = vadd.f32 %v866, %v1020
  %s1028 = scalar_lea.vmem %s4, 6
  %v1029 = vld [vmem:[%s1028] sm:$0x3]
  %v1030 = vpack.c.bf16 %v917, %v917
  %v1031 = vpack.c.bf16 %v918, %v918
  %v1032 = vpack.c.bf16 %v919, %v919
  %v1033 = vpack.c.bf16 %v920, %v920
  %v1035 = vsel %vm135, %v1029, 0
  %v1038 = vsel %vm139, %v1030, 0
  %v1041 = vsel %vm139, %v1031, 0
  %v1044 = vsel %vm139, %v1032, 0
  %v1047 = vsel %vm139, %v1033, 0
  %1049 = vmatprep.subr.bf16.mxu0 0
  %1050 = vmatpush1.bf16.msra.mxu0 0
  %1051 = vmatprep.subr.bf16.mxu0 0
  %1052 = vmatpush1.bf16.msra.mxu0 0
  %1053 = vmatprep.subr.bf16.mxu0 0
  %1054 = vmatpush1.bf16.msra.mxu0 0
  %1055 = vmatprep.subr.bf16.mxu0 0
  %1056 = vmatpush1.bf16.msra.mxu0 0
  %1057 = vmatprep.subr.bf16.mxu0 0
  %1058 = vmatpush1.bf16.msra.mxu0 0
  %1059 = vmatprep.subr.bf16.mxu0 0
  %1060 = vmatpush1.bf16.msra.mxu0 0
  %1061 = vmatprep.subr.bf16.mxu0 0
  %1062 = vmatpush1.bf16.msra.mxu0 0
  %1063 = vmatprep.subr.bf16.mxu0 %v1041
  %1064 = vmatpush1.bf16.msra.mxu0 %v1038
  %1065 = vmatprep.subr.bf16.mxu0 0
  %1066 = vmatpush2.bf16.msra.mxu0 0
  %1067 = vmatprep.subr.bf16.mxu0 0
  %1068 = vmatpush2.bf16.msra.mxu0 0
  %1069 = vmatprep.subr.bf16.mxu0 0
  %1070 = vmatpush2.bf16.msra.mxu0 0
  %1071 = vmatprep.subr.bf16.mxu0 0
  %1072 = vmatpush2.bf16.msra.mxu0 0
  %1073 = vmatprep.subr.bf16.mxu0 0
  %1074 = vmatpush2.bf16.msra.mxu0 0
  %1075 = vmatprep.subr.bf16.mxu0 0
  %1076 = vmatpush2.bf16.msra.mxu0 0
  %1077 = vmatprep.subr.bf16.mxu0 0
  %1078 = vmatpush2.bf16.msra.mxu0 0
  %1079 = vmatprep.subr.bf16.mxu0 0
  %1080 = vmatpush2.bf16.msra.mxu0 0
  %1081 = vmatprep.mubr.bf16.mxu0 0
  %1082 = vmatmul.mubr.bf16.gmra.mxu0 %v1035
  %v1083 = vpop.f32.mrf.mxu0
  %v1084 = vadd.f32 0.0, %v1083
  %v1085 = vpop.f32.mrf.mxu0
  %v1086 = vadd.f32 0.0, %v1085
  %v1087 = vpop.f32.mrf.mxu0
  %v1088 = vpop.f32.mrf.mxu0
  %1089 = vdwg.mxu0
  %1090 = vmatprep.subr.bf16.mxu0 0
  %1091 = vmatpush1.bf16.msra.mxu0 0
  %1092 = vmatprep.subr.bf16.mxu0 0
  %1093 = vmatpush1.bf16.msra.mxu0 0
  %1094 = vmatprep.subr.bf16.mxu0 0
  %1095 = vmatpush1.bf16.msra.mxu0 0
  %1096 = vmatprep.subr.bf16.mxu0 0
  %1097 = vmatpush1.bf16.msra.mxu0 0
  %1098 = vmatprep.subr.bf16.mxu0 0
  %1099 = vmatpush1.bf16.msra.mxu0 0
  %1100 = vmatprep.subr.bf16.mxu0 0
  %1101 = vmatpush1.bf16.msra.mxu0 0
  %1102 = vmatprep.subr.bf16.mxu0 0
  %1103 = vmatpush1.bf16.msra.mxu0 0
  %1104 = vmatprep.subr.bf16.mxu0 %v1047
  %1105 = vmatpush1.bf16.msra.mxu0 %v1044
  %1106 = vmatprep.subr.bf16.mxu0 0
  %1107 = vmatpush2.bf16.msra.mxu0 0
  %1108 = vmatprep.subr.bf16.mxu0 0
  %1109 = vmatpush2.bf16.msra.mxu0 0
  %1110 = vmatprep.subr.bf16.mxu0 0
  %1111 = vmatpush2.bf16.msra.mxu0 0
  %1112 = vmatprep.subr.bf16.mxu0 0
  %1113 = vmatpush2.bf16.msra.mxu0 0
  %1114 = vmatprep.subr.bf16.mxu0 0
  %1115 = vmatpush2.bf16.msra.mxu0 0
  %1116 = vmatprep.subr.bf16.mxu0 0
  %1117 = vmatpush2.bf16.msra.mxu0 0
  %1118 = vmatprep.subr.bf16.mxu0 0
  %1119 = vmatpush2.bf16.msra.mxu0 0
  %1120 = vmatprep.subr.bf16.mxu0 0
  %1121 = vmatpush2.bf16.msra.mxu0 0
  %1122 = vmatprep.mubr.bf16.mxu0 0
  %1123 = vmatmul.mubr.bf16.gmra.mxu0 %v1035
  %v1124 = vpop.f32.mrf.mxu0
  %v1125 = vadd.f32 0.0, %v1124
  %v1126 = vpop.f32.mrf.mxu0
  %v1127 = vadd.f32 0.0, %v1126
  %v1128 = vpop.f32.mrf.mxu0
  %v1129 = vpop.f32.mrf.mxu0
  %1130 = vdwg.mxu0
  %v1131 = vadd.f32 %v1024, %v1084
  %v1132 = vadd.f32 %v1025, %v1086
  %v1133 = vadd.f32 %v1026, %v1125
  %v1134 = vadd.f32 %v1027, %v1127
  %s1135 = scalar_lea.vmem %s3, 8
  %v1136 = vld [vmem:[%s1135] sm:$0x3]
  %v1138 = vcombine.high %v51, %v51
  %v1140 = vunpack.c.l.s4 1983009808
  %v1141 = vunpack.c.0.s8 %v1140
  %v1142 = vlaneseq
  %v1143 = vshrl.u32 %v1142, 7
  %v1144 = vsub.s32 %v1141, %v1143
  %v1145 = vrot.slane %v51, %v1144
  %v1147 = vunpack.c.l.s4 1983009808
  %v1148 = vunpack.c.0.s8 %v1147
  %v1149 = vlaneseq
  %v1150 = vshrl.u32 %v1149, 7
  %v1151 = vsub.s32 %v1148, %v1150
  %v1152 = vrot.slane %v1138, %v1151
  %v1153 = vcombine.high %v1145, %v1145
  %v1154 = vcombine.high %v1152, %v1152
  %v1156 = vsel %vm135, %v1136, 0
  %v1159 = vsel %vm139, %v1145, 0
  %v1162 = vsel %vm139, %v1153, 0
  %v1165 = vsel %vm139, %v1152, 0
  %v1168 = vsel %vm139, %v1154, 0
  %1170 = vmatprep.subr.bf16.mxu0 0
  %1171 = vmatpush1.bf16.msra.mxu0 0
  %1172 = vmatprep.subr.bf16.mxu0 0
  %1173 = vmatpush1.bf16.msra.mxu0 0
  %1174 = vmatprep.subr.bf16.mxu0 0
  %1175 = vmatpush1.bf16.msra.mxu0 0
  %1176 = vmatprep.subr.bf16.mxu0 0
  %1177 = vmatpush1.bf16.msra.mxu0 0
  %1178 = vmatprep.subr.bf16.mxu0 0
  %1179 = vmatpush1.bf16.msra.mxu0 0
  %1180 = vmatprep.subr.bf16.mxu0 0
  %1181 = vmatpush1.bf16.msra.mxu0 0
  %1182 = vmatprep.subr.bf16.mxu0 0
  %1183 = vmatpush1.bf16.msra.mxu0 0
  %1184 = vmatprep.subr.bf16.mxu0 %v1162
  %1185 = vmatpush1.bf16.msra.mxu0 %v1159
  %1186 = vmatprep.subr.bf16.mxu0 0
  %1187 = vmatpush2.bf16.msra.mxu0 0
  %1188 = vmatprep.subr.bf16.mxu0 0
  %1189 = vmatpush2.bf16.msra.mxu0 0
  %1190 = vmatprep.subr.bf16.mxu0 0
  %1191 = vmatpush2.bf16.msra.mxu0 0
  %1192 = vmatprep.subr.bf16.mxu0 0
  %1193 = vmatpush2.bf16.msra.mxu0 0
  %1194 = vmatprep.subr.bf16.mxu0 0
  %1195 = vmatpush2.bf16.msra.mxu0 0
  %1196 = vmatprep.subr.bf16.mxu0 0
  %1197 = vmatpush2.bf16.msra.mxu0 0
  %1198 = vmatprep.subr.bf16.mxu0 0
  %1199 = vmatpush2.bf16.msra.mxu0 0
  %1200 = vmatprep.subr.bf16.mxu0 0
  %1201 = vmatpush2.bf16.msra.mxu0 0
  %1202 = vmatprep.mubr.bf16.mxu0 0
  %1203 = vmatmul.mubr.bf16.gmra.mxu0 %v1156
  %v1204 = vpop.f32.mrf.mxu0
  %v1205 = vadd.f32 0.0, %v1204
  %v1206 = vpop.f32.mrf.mxu0
  %v1207 = vadd.f32 0.0, %v1206
  %v1208 = vpop.f32.mrf.mxu0
  %v1209 = vpop.f32.mrf.mxu0
  %1210 = vdwg.mxu0
  %1211 = vmatprep.subr.bf16.mxu0 0
  %1212 = vmatpush1.bf16.msra.mxu0 0
  %1213 = vmatprep.subr.bf16.mxu0 0
  %1214 = vmatpush1.bf16.msra.mxu0 0
  %1215 = vmatprep.subr.bf16.mxu0 0
  %1216 = vmatpush1.bf16.msra.mxu0 0
  %1217 = vmatprep.subr.bf16.mxu0 0
  %1218 = vmatpush1.bf16.msra.mxu0 0
  %1219 = vmatprep.subr.bf16.mxu0 0
  %1220 = vmatpush1.bf16.msra.mxu0 0
  %1221 = vmatprep.subr.bf16.mxu0 0
  %1222 = vmatpush1.bf16.msra.mxu0 0
  %1223 = vmatprep.subr.bf16.mxu0 0
  %1224 = vmatpush1.bf16.msra.mxu0 0
  %1225 = vmatprep.subr.bf16.mxu0 %v1168
  %1226 = vmatpush1.bf16.msra.mxu0 %v1165
  %1227 = vmatprep.subr.bf16.mxu0 0
  %1228 = vmatpush2.bf16.msra.mxu0 0
  %1229 = vmatprep.subr.bf16.mxu0 0
  %1230 = vmatpush2.bf16.msra.mxu0 0
  %1231 = vmatprep.subr.bf16.mxu0 0
  %1232 = vmatpush2.bf16.msra.mxu0 0
  %1233 = vmatprep.subr.bf16.mxu0 0
  %1234 = vmatpush2.bf16.msra.mxu0 0
  %1235 = vmatprep.subr.bf16.mxu0 0
  %1236 = vmatpush2.bf16.msra.mxu0 0
  %1237 = vmatprep.subr.bf16.mxu0 0
  %1238 = vmatpush2.bf16.msra.mxu0 0
  %1239 = vmatprep.subr.bf16.mxu0 0
  %1240 = vmatpush2.bf16.msra.mxu0 0
  %1241 = vmatprep.subr.bf16.mxu0 0
  %1242 = vmatpush2.bf16.msra.mxu0 0
  %1243 = vmatprep.mubr.bf16.mxu0 0
  %1244 = vmatmul.mubr.bf16.gmra.mxu0 %v1156
  %v1245 = vpop.f32.mrf.mxu0
  %v1246 = vadd.f32 0.0, %v1245
  %v1247 = vpop.f32.mrf.mxu0
  %v1248 = vadd.f32 0.0, %v1247
  %v1249 = vpop.f32.mrf.mxu0
  %v1250 = vpop.f32.mrf.mxu0
  %1251 = vdwg.mxu0
  %v1252 = vadd.f32 %v1131, %v1205
  %v1253 = vadd.f32 %v1132, %v1207
  %v1254 = vadd.f32 %v1133, %v1246
  %v1255 = vadd.f32 %v1134, %v1248
  %s1256 = scalar_lea.vmem %s4, 8
  %v1257 = vld [vmem:[%s1256] sm:$0x3]
  %v1259 = vcombine.high %v54, %v54
  %v1261 = vunpack.c.l.s4 1983009808
  %v1262 = vunpack.c.0.s8 %v1261
  %v1263 = vlaneseq
  %v1264 = vshrl.u32 %v1263, 7
  %v1265 = vsub.s32 %v1262, %v1264
  %v1266 = vrot.slane %v54, %v1265
  %v1268 = vunpack.c.l.s4 1983009808
  %v1269 = vunpack.c.0.s8 %v1268
  %v1270 = vlaneseq
  %v1271 = vshrl.u32 %v1270, 7
  %v1272 = vsub.s32 %v1269, %v1271
  %v1273 = vrot.slane %v1259, %v1272
  %v1274 = vcombine.high %v1266, %v1266
  %v1275 = vcombine.high %v1273, %v1273
  %v1277 = vsel %vm135, %v1257, 0
  %v1280 = vsel %vm139, %v1266, 0
  %v1283 = vsel %vm139, %v1274, 0
  %v1286 = vsel %vm139, %v1273, 0
  %v1289 = vsel %vm139, %v1275, 0
  %1291 = vmatprep.subr.bf16.mxu0 0
  %1292 = vmatpush1.bf16.msra.mxu0 0
  %1293 = vmatprep.subr.bf16.mxu0 0
  %1294 = vmatpush1.bf16.msra.mxu0 0
  %1295 = vmatprep.subr.bf16.mxu0 0
  %1296 = vmatpush1.bf16.msra.mxu0 0
  %1297 = vmatprep.subr.bf16.mxu0 0
  %1298 = vmatpush1.bf16.msra.mxu0 0
  %1299 = vmatprep.subr.bf16.mxu0 0
  %1300 = vmatpush1.bf16.msra.mxu0 0
  %1301 = vmatprep.subr.bf16.mxu0 0
  %1302 = vmatpush1.bf16.msra.mxu0 0
  %1303 = vmatprep.subr.bf16.mxu0 0
  %1304 = vmatpush1.bf16.msra.mxu0 0
  %1305 = vmatprep.subr.bf16.mxu0 %v1283
  %1306 = vmatpush1.bf16.msra.mxu0 %v1280
  %1307 = vmatprep.subr.bf16.mxu0 0
  %1308 = vmatpush2.bf16.msra.mxu0 0
  %1309 = vmatprep.subr.bf16.mxu0 0
  %1310 = vmatpush2.bf16.msra.mxu0 0
  %1311 = vmatprep.subr.bf16.mxu0 0
  %1312 = vmatpush2.bf16.msra.mxu0 0
  %1313 = vmatprep.subr.bf16.mxu0 0
  %1314 = vmatpush2.bf16.msra.mxu0 0
  %1315 = vmatprep.subr.bf16.mxu0 0
  %1316 = vmatpush2.bf16.msra.mxu0 0
  %1317 = vmatprep.subr.bf16.mxu0 0
  %1318 = vmatpush2.bf16.msra.mxu0 0
  %1319 = vmatprep.subr.bf16.mxu0 0
  %1320 = vmatpush2.bf16.msra.mxu0 0
  %1321 = vmatprep.subr.bf16.mxu0 0
  %1322 = vmatpush2.bf16.msra.mxu0 0
  %1323 = vmatprep.mubr.bf16.mxu0 0
  %1324 = vmatmul.mubr.bf16.gmra.mxu0 %v1277
  %v1325 = vpop.f32.mrf.mxu0
  %v1326 = vadd.f32 0.0, %v1325
  %v1327 = vpop.f32.mrf.mxu0
  %v1328 = vadd.f32 0.0, %v1327
  %v1329 = vpop.f32.mrf.mxu0
  %v1330 = vpop.f32.mrf.mxu0
  %1331 = vdwg.mxu0
  %1332 = vmatprep.subr.bf16.mxu0 0
  %1333 = vmatpush1.bf16.msra.mxu0 0
  %1334 = vmatprep.subr.bf16.mxu0 0
  %1335 = vmatpush1.bf16.msra.mxu0 0
  %1336 = vmatprep.subr.bf16.mxu0 0
  %1337 = vmatpush1.bf16.msra.mxu0 0
  %1338 = vmatprep.subr.bf16.mxu0 0
  %1339 = vmatpush1.bf16.msra.mxu0 0
  %1340 = vmatprep.subr.bf16.mxu0 0
  %1341 = vmatpush1.bf16.msra.mxu0 0
  %1342 = vmatprep.subr.bf16.mxu0 0
  %1343 = vmatpush1.bf16.msra.mxu0 0
  %1344 = vmatprep.subr.bf16.mxu0 0
  %1345 = vmatpush1.bf16.msra.mxu0 0
  %1346 = vmatprep.subr.bf16.mxu0 %v1289
  %1347 = vmatpush1.bf16.msra.mxu0 %v1286
  %1348 = vmatprep.subr.bf16.mxu0 0
  %1349 = vmatpush2.bf16.msra.mxu0 0
  %1350 = vmatprep.subr.bf16.mxu0 0
  %1351 = vmatpush2.bf16.msra.mxu0 0
  %1352 = vmatprep.subr.bf16.mxu0 0
  %1353 = vmatpush2.bf16.msra.mxu0 0
  %1354 = vmatprep.subr.bf16.mxu0 0
  %1355 = vmatpush2.bf16.msra.mxu0 0
  %1356 = vmatprep.subr.bf16.mxu0 0
  %1357 = vmatpush2.bf16.msra.mxu0 0
  %1358 = vmatprep.subr.bf16.mxu0 0
  %1359 = vmatpush2.bf16.msra.mxu0 0
  %1360 = vmatprep.subr.bf16.mxu0 0
  %1361 = vmatpush2.bf16.msra.mxu0 0
  %1362 = vmatprep.subr.bf16.mxu0 0
  %1363 = vmatpush2.bf16.msra.mxu0 0
  %1364 = vmatprep.mubr.bf16.mxu0 0
  %1365 = vmatmul.mubr.bf16.gmra.mxu0 %v1277
  %v1366 = vpop.f32.mrf.mxu0
  %v1367 = vadd.f32 0.0, %v1366
  %v1368 = vpop.f32.mrf.mxu0
  %v1369 = vadd.f32 0.0, %v1368
  %v1370 = vpop.f32.mrf.mxu0
  %v1371 = vpop.f32.mrf.mxu0
  %1372 = vdwg.mxu0
  %v1373 = vadd.f32 %v1252, %v1326
  %v1374 = vadd.f32 %v1253, %v1328
  %v1375 = vadd.f32 %v1254, %v1367
  %v1376 = vadd.f32 %v1255, %v1369
  %1377 = vrot.lane.b32.xlu0 %v52, 127
  %v1378 = vpop.permute.xlu0 %1377
  %1379 = vrot.lane.b32.xlu0 %v59, 127
  %v1380 = vpop.permute.xlu0 %1379
  %1381 = vrot.lane.b32.xlu0 %v53, 127
  %v1382 = vpop.permute.xlu0 %1381
  %1383 = vrot.lane.b32.xlu0 %v60, 127
  %v1384 = vpop.permute.xlu0 %1383
  %vm1385 = vcmp.lt.s32.totalorder %v72, 127
  %v1386 = vsel %vm1385, %v1382, %v1384
  %v1387 = vsel %vm1385, %v1380, %v1382
  %v1388 = vsel %vm1385, %v1378, %v1380
  %v1389 = vsel %vm1385, %v1384, %v1378
  %v1391 = vlaneseq
  %v1392 = vshrl.u32 %v1391, 7
  %v1393 = vsub.s32 0, %v1392
  %v1394 = vrot.slane %v44, %v1393
  %v1395 = vlaneseq
  %v1396 = vshrl.u32 %v1395, 7
  %v1397 = vsub.s32 1, %v1396
  %v1398 = vrot.slane %v44, %v1397
  %v1399 = vlaneseq
  %v1400 = vshrl.u32 %v1399, 7
  %v1401 = vsub.s32 2, %v1400
  %v1402 = vrot.slane %v44, %v1401
  %v1403 = vlaneseq
  %v1404 = vshrl.u32 %v1403, 7
  %v1405 = vsub.s32 3, %v1404
  %v1406 = vrot.slane %v44, %v1405
  %v1411 = vmul.f32 %v1388, %v1394
  %v1412 = vmul.f32 %v1387, %v1398
  %v1413 = vmul.f32 %v1386, %v1402
  %v1414 = vmul.f32 %v1389, %v1406
  %1415 = vrot.lane.b32.xlu0 %v55, 127
  %v1416 = vpop.permute.xlu0 %1415
  %1417 = vrot.lane.b32.xlu0 %v105, 127
  %v1418 = vpop.permute.xlu0 %1417
  %1419 = vrot.lane.b32.xlu0 %v56, 127
  %v1420 = vpop.permute.xlu0 %1419
  %1421 = vrot.lane.b32.xlu0 %v106, 127
  %v1422 = vpop.permute.xlu0 %1421
  %v1423 = vsel %vm1385, %v1420, %v1422
  %v1424 = vsel %vm1385, %v1418, %v1420
  %v1425 = vsel %vm1385, %v1416, %v1418
  %v1426 = vsel %vm1385, %v1422, %v1416
  %v1427 = vmul.f32 %v1425, %v1394
  %v1428 = vmul.f32 %v1424, %v1398
  %v1429 = vmul.f32 %v1423, %v1402
  %v1430 = vmul.f32 %v1426, %v1406
  %s1431 = scalar_lea.vmem %s3, 10
  %v1432 = vld [vmem:[%s1431] sm:$0x3]
  %v1433 = vpack.c.bf16 %v1411, %v1411
  %v1434 = vpack.c.bf16 %v1412, %v1412
  %v1435 = vpack.c.bf16 %v1413, %v1413
  %v1436 = vpack.c.bf16 %v1414, %v1414
  %v1438 = vsel %vm135, %v1432, 0
  %v1441 = vsel %vm139, %v1433, 0
  %v1444 = vsel %vm139, %v1434, 0
  %v1447 = vsel %vm139, %v1435, 0
  %v1450 = vsel %vm139, %v1436, 0
  %1452 = vmatprep.subr.bf16.mxu0 0
  %1453 = vmatpush1.bf16.msra.mxu0 0
  %1454 = vmatprep.subr.bf16.mxu0 0
  %1455 = vmatpush1.bf16.msra.mxu0 0
  %1456 = vmatprep.subr.bf16.mxu0 0
  %1457 = vmatpush1.bf16.msra.mxu0 0
  %1458 = vmatprep.subr.bf16.mxu0 0
  %1459 = vmatpush1.bf16.msra.mxu0 0
  %1460 = vmatprep.subr.bf16.mxu0 0
  %1461 = vmatpush1.bf16.msra.mxu0 0
  %1462 = vmatprep.subr.bf16.mxu0 0
  %1463 = vmatpush1.bf16.msra.mxu0 0
  %1464 = vmatprep.subr.bf16.mxu0 0
  %1465 = vmatpush1.bf16.msra.mxu0 0
  %1466 = vmatprep.subr.bf16.mxu0 %v1444
  %1467 = vmatpush1.bf16.msra.mxu0 %v1441
  %1468 = vmatprep.subr.bf16.mxu0 0
  %1469 = vmatpush2.bf16.msra.mxu0 0
  %1470 = vmatprep.subr.bf16.mxu0 0
  %1471 = vmatpush2.bf16.msra.mxu0 0
  %1472 = vmatprep.subr.bf16.mxu0 0
  %1473 = vmatpush2.bf16.msra.mxu0 0
  %1474 = vmatprep.subr.bf16.mxu0 0
  %1475 = vmatpush2.bf16.msra.mxu0 0
  %1476 = vmatprep.subr.bf16.mxu0 0
  %1477 = vmatpush2.bf16.msra.mxu0 0
  %1478 = vmatprep.subr.bf16.mxu0 0
  %1479 = vmatpush2.bf16.msra.mxu0 0
  %1480 = vmatprep.subr.bf16.mxu0 0
  %1481 = vmatpush2.bf16.msra.mxu0 0
  %1482 = vmatprep.subr.bf16.mxu0 0
  %1483 = vmatpush2.bf16.msra.mxu0 0
  %1484 = vmatprep.mubr.bf16.mxu0 0
  %1485 = vmatmul.mubr.bf16.gmra.mxu0 %v1438
  %v1486 = vpop.f32.mrf.mxu0
  %v1487 = vadd.f32 0.0, %v1486
  %v1488 = vpop.f32.mrf.mxu0
  %v1489 = vadd.f32 0.0, %v1488
  %v1490 = vpop.f32.mrf.mxu0
  %v1491 = vpop.f32.mrf.mxu0
  %1492 = vdwg.mxu0
  %1493 = vmatprep.subr.bf16.mxu0 0
  %1494 = vmatpush1.bf16.msra.mxu0 0
  %1495 = vmatprep.subr.bf16.mxu0 0
  %1496 = vmatpush1.bf16.msra.mxu0 0
  %1497 = vmatprep.subr.bf16.mxu0 0
  %1498 = vmatpush1.bf16.msra.mxu0 0
  %1499 = vmatprep.subr.bf16.mxu0 0
  %1500 = vmatpush1.bf16.msra.mxu0 0
  %1501 = vmatprep.subr.bf16.mxu0 0
  %1502 = vmatpush1.bf16.msra.mxu0 0
  %1503 = vmatprep.subr.bf16.mxu0 0
  %1504 = vmatpush1.bf16.msra.mxu0 0
  %1505 = vmatprep.subr.bf16.mxu0 0
  %1506 = vmatpush1.bf16.msra.mxu0 0
  %1507 = vmatprep.subr.bf16.mxu0 %v1450
  %1508 = vmatpush1.bf16.msra.mxu0 %v1447
  %1509 = vmatprep.subr.bf16.mxu0 0
  %1510 = vmatpush2.bf16.msra.mxu0 0
  %1511 = vmatprep.subr.bf16.mxu0 0
  %1512 = vmatpush2.bf16.msra.mxu0 0
  %1513 = vmatprep.subr.bf16.mxu0 0
  %1514 = vmatpush2.bf16.msra.mxu0 0
  %1515 = vmatprep.subr.bf16.mxu0 0
  %1516 = vmatpush2.bf16.msra.mxu0 0
  %1517 = vmatprep.subr.bf16.mxu0 0
  %1518 = vmatpush2.bf16.msra.mxu0 0
  %1519 = vmatprep.subr.bf16.mxu0 0
  %1520 = vmatpush2.bf16.msra.mxu0 0
  %1521 = vmatprep.subr.bf16.mxu0 0
  %1522 = vmatpush2.bf16.msra.mxu0 0
  %1523 = vmatprep.subr.bf16.mxu0 0
  %1524 = vmatpush2.bf16.msra.mxu0 0
  %1525 = vmatprep.mubr.bf16.mxu0 0
  %1526 = vmatmul.mubr.bf16.gmra.mxu0 %v1438
  %v1527 = vpop.f32.mrf.mxu0
  %v1528 = vadd.f32 0.0, %v1527
  %v1529 = vpop.f32.mrf.mxu0
  %v1530 = vadd.f32 0.0, %v1529
  %v1531 = vpop.f32.mrf.mxu0
  %v1532 = vpop.f32.mrf.mxu0
  %1533 = vdwg.mxu0
  %v1534 = vadd.f32 %v1373, %v1487
  %v1535 = vadd.f32 %v1374, %v1489
  %v1536 = vadd.f32 %v1375, %v1528
  %v1537 = vadd.f32 %v1376, %v1530
  %s1538 = scalar_lea.vmem %s4, 10
  %v1539 = vld [vmem:[%s1538] sm:$0x3]
  %v1540 = vpack.c.bf16 %v1427, %v1427
  %v1541 = vpack.c.bf16 %v1428, %v1428
  %v1542 = vpack.c.bf16 %v1429, %v1429
  %v1543 = vpack.c.bf16 %v1430, %v1430
  %v1545 = vsel %vm135, %v1539, 0
  %v1548 = vsel %vm139, %v1540, 0
  %v1551 = vsel %vm139, %v1541, 0
  %v1554 = vsel %vm139, %v1542, 0
  %v1557 = vsel %vm139, %v1543, 0
  %1559 = vmatprep.subr.bf16.mxu0 0
  %1560 = vmatpush1.bf16.msra.mxu0 0
  %1561 = vmatprep.subr.bf16.mxu0 0
  %1562 = vmatpush1.bf16.msra.mxu0 0
  %1563 = vmatprep.subr.bf16.mxu0 0
  %1564 = vmatpush1.bf16.msra.mxu0 0
  %1565 = vmatprep.subr.bf16.mxu0 0
  %1566 = vmatpush1.bf16.msra.mxu0 0
  %1567 = vmatprep.subr.bf16.mxu0 0
  %1568 = vmatpush1.bf16.msra.mxu0 0
  %1569 = vmatprep.subr.bf16.mxu0 0
  %1570 = vmatpush1.bf16.msra.mxu0 0
  %1571 = vmatprep.subr.bf16.mxu0 0
  %1572 = vmatpush1.bf16.msra.mxu0 0
  %1573 = vmatprep.subr.bf16.mxu0 %v1551
  %1574 = vmatpush1.bf16.msra.mxu0 %v1548
  %1575 = vmatprep.subr.bf16.mxu0 0
  %1576 = vmatpush2.bf16.msra.mxu0 0
  %1577 = vmatprep.subr.bf16.mxu0 0
  %1578 = vmatpush2.bf16.msra.mxu0 0
  %1579 = vmatprep.subr.bf16.mxu0 0
  %1580 = vmatpush2.bf16.msra.mxu0 0
  %1581 = vmatprep.subr.bf16.mxu0 0
  %1582 = vmatpush2.bf16.msra.mxu0 0
  %1583 = vmatprep.subr.bf16.mxu0 0
  %1584 = vmatpush2.bf16.msra.mxu0 0
  %1585 = vmatprep.subr.bf16.mxu0 0
  %1586 = vmatpush2.bf16.msra.mxu0 0
  %1587 = vmatprep.subr.bf16.mxu0 0
  %1588 = vmatpush2.bf16.msra.mxu0 0
  %1589 = vmatprep.subr.bf16.mxu0 0
  %1590 = vmatpush2.bf16.msra.mxu0 0
  %1591 = vmatprep.mubr.bf16.mxu0 0
  %1592 = vmatmul.mubr.bf16.gmra.mxu0 %v1545
  %v1593 = vpop.f32.mrf.mxu0
  %v1594 = vadd.f32 0.0, %v1593
  %v1595 = vpop.f32.mrf.mxu0
  %v1596 = vadd.f32 0.0, %v1595
  %v1597 = vpop.f32.mrf.mxu0
  %v1598 = vpop.f32.mrf.mxu0
  %1599 = vdwg.mxu0
  %1600 = vmatprep.subr.bf16.mxu0 0
  %1601 = vmatpush1.bf16.msra.mxu0 0
  %1602 = vmatprep.subr.bf16.mxu0 0
  %1603 = vmatpush1.bf16.msra.mxu0 0
  %1604 = vmatprep.subr.bf16.mxu0 0
  %1605 = vmatpush1.bf16.msra.mxu0 0
  %1606 = vmatprep.subr.bf16.mxu0 0
  %1607 = vmatpush1.bf16.msra.mxu0 0
  %1608 = vmatprep.subr.bf16.mxu0 0
  %1609 = vmatpush1.bf16.msra.mxu0 0
  %1610 = vmatprep.subr.bf16.mxu0 0
  %1611 = vmatpush1.bf16.msra.mxu0 0
  %1612 = vmatprep.subr.bf16.mxu0 0
  %1613 = vmatpush1.bf16.msra.mxu0 0
  %1614 = vmatprep.subr.bf16.mxu0 %v1557
  %1615 = vmatpush1.bf16.msra.mxu0 %v1554
  %1616 = vmatprep.subr.bf16.mxu0 0
  %1617 = vmatpush2.bf16.msra.mxu0 0
  %1618 = vmatprep.subr.bf16.mxu0 0
  %1619 = vmatpush2.bf16.msra.mxu0 0
  %1620 = vmatprep.subr.bf16.mxu0 0
  %1621 = vmatpush2.bf16.msra.mxu0 0
  %1622 = vmatprep.subr.bf16.mxu0 0
  %1623 = vmatpush2.bf16.msra.mxu0 0
  %1624 = vmatprep.subr.bf16.mxu0 0
  %1625 = vmatpush2.bf16.msra.mxu0 0
  %1626 = vmatprep.subr.bf16.mxu0 0
  %1627 = vmatpush2.bf16.msra.mxu0 0
  %1628 = vmatprep.subr.bf16.mxu0 0
  %1629 = vmatpush2.bf16.msra.mxu0 0
  %1630 = vmatprep.subr.bf16.mxu0 0
  %1631 = vmatpush2.bf16.msra.mxu0 0
  %1632 = vmatprep.mubr.bf16.mxu0 0
  %1633 = vmatmul.mubr.bf16.gmra.mxu0 %v1545
  %v1634 = vpop.f32.mrf.mxu0
  %v1635 = vadd.f32 0.0, %v1634
  %v1636 = vpop.f32.mrf.mxu0
  %v1637 = vadd.f32 0.0, %v1636
  %v1638 = vpop.f32.mrf.mxu0
  %v1639 = vpop.f32.mrf.mxu0
  %1640 = vdwg.mxu0
  %v1641 = vadd.f32 %v1534, %v1594
  %v1642 = vadd.f32 %v1535, %v1596
  %v1643 = vadd.f32 %v1536, %v1635
  %v1644 = vadd.f32 %v1537, %v1637
  %1645 = vrot.lane.b32.xlu0 %v52, 113
  %v1646 = vpop.permute.xlu0 %1645
  %1647 = vrot.lane.b32.xlu0 %v59, 113
  %v1648 = vpop.permute.xlu0 %1647
  %1649 = vrot.lane.b32.xlu0 %v53, 113
  %v1650 = vpop.permute.xlu0 %1649
  %1651 = vrot.lane.b32.xlu0 %v60, 113
  %v1652 = vpop.permute.xlu0 %1651
  %vm1653 = vcmp.lt.s32.totalorder %v72, 113
  %v1654 = vsel %vm1653, %v1650, %v1652
  %v1655 = vsel %vm1653, %v1648, %v1650
  %v1656 = vsel %vm1653, %v1646, %v1648
  %v1657 = vsel %vm1653, %v1652, %v1646
  %v1659 = vlaneseq
  %v1660 = vshrl.u32 %v1659, 7
  %v1661 = vsub.s32 0, %v1660
  %v1662 = vrot.slane %v46, %v1661
  %v1663 = vlaneseq
  %v1664 = vshrl.u32 %v1663, 7
  %v1665 = vsub.s32 1, %v1664
  %v1666 = vrot.slane %v46, %v1665
  %v1667 = vlaneseq
  %v1668 = vshrl.u32 %v1667, 7
  %v1669 = vsub.s32 2, %v1668
  %v1670 = vrot.slane %v46, %v1669
  %v1671 = vlaneseq
  %v1672 = vshrl.u32 %v1671, 7
  %v1673 = vsub.s32 3, %v1672
  %v1674 = vrot.slane %v46, %v1673
  %v1679 = vmul.f32 %v1656, %v1662
  %v1680 = vmul.f32 %v1655, %v1666
  %v1681 = vmul.f32 %v1654, %v1670
  %v1682 = vmul.f32 %v1657, %v1674
  %1683 = vrot.lane.b32.xlu0 %v55, 113
  %v1684 = vpop.permute.xlu0 %1683
  %1685 = vrot.lane.b32.xlu0 %v105, 113
  %v1686 = vpop.permute.xlu0 %1685
  %1687 = vrot.lane.b32.xlu0 %v56, 113
  %v1688 = vpop.permute.xlu0 %1687
  %1689 = vrot.lane.b32.xlu0 %v106, 113
  %v1690 = vpop.permute.xlu0 %1689
  %v1691 = vsel %vm1653, %v1688, %v1690
  %v1692 = vsel %vm1653, %v1686, %v1688
  %v1693 = vsel %vm1653, %v1684, %v1686
  %v1694 = vsel %vm1653, %v1690, %v1684
  %v1695 = vmul.f32 %v1693, %v1662
  %v1696 = vmul.f32 %v1692, %v1666
  %v1697 = vmul.f32 %v1691, %v1670
  %v1698 = vmul.f32 %v1694, %v1674
  %s1699 = scalar_lea.vmem %s3, 12
  %v1700 = vld [vmem:[%s1699] sm:$0x3]
  %v1701 = vpack.c.bf16 %v1679, %v1679
  %v1702 = vpack.c.bf16 %v1680, %v1680
  %v1703 = vpack.c.bf16 %v1681, %v1681
  %v1704 = vpack.c.bf16 %v1682, %v1682
  %v1706 = vsel %vm135, %v1700, 0
  %v1709 = vsel %vm139, %v1701, 0
  %v1712 = vsel %vm139, %v1702, 0
  %v1715 = vsel %vm139, %v1703, 0
  %v1718 = vsel %vm139, %v1704, 0
  %1720 = vmatprep.subr.bf16.mxu0 0
  %1721 = vmatpush1.bf16.msra.mxu0 0
  %1722 = vmatprep.subr.bf16.mxu0 0
  %1723 = vmatpush1.bf16.msra.mxu0 0
  %1724 = vmatprep.subr.bf16.mxu0 0
  %1725 = vmatpush1.bf16.msra.mxu0 0
  %1726 = vmatprep.subr.bf16.mxu0 0
  %1727 = vmatpush1.bf16.msra.mxu0 0
  %1728 = vmatprep.subr.bf16.mxu0 0
  %1729 = vmatpush1.bf16.msra.mxu0 0
  %1730 = vmatprep.subr.bf16.mxu0 0
  %1731 = vmatpush1.bf16.msra.mxu0 0
  %1732 = vmatprep.subr.bf16.mxu0 0
  %1733 = vmatpush1.bf16.msra.mxu0 0
  %1734 = vmatprep.subr.bf16.mxu0 %v1712
  %1735 = vmatpush1.bf16.msra.mxu0 %v1709
  %1736 = vmatprep.subr.bf16.mxu0 0
  %1737 = vmatpush2.bf16.msra.mxu0 0
  %1738 = vmatprep.subr.bf16.mxu0 0
  %1739 = vmatpush2.bf16.msra.mxu0 0
  %1740 = vmatprep.subr.bf16.mxu0 0
  %1741 = vmatpush2.bf16.msra.mxu0 0
  %1742 = vmatprep.subr.bf16.mxu0 0
  %1743 = vmatpush2.bf16.msra.mxu0 0
  %1744 = vmatprep.subr.bf16.mxu0 0
  %1745 = vmatpush2.bf16.msra.mxu0 0
  %1746 = vmatprep.subr.bf16.mxu0 0
  %1747 = vmatpush2.bf16.msra.mxu0 0
  %1748 = vmatprep.subr.bf16.mxu0 0
  %1749 = vmatpush2.bf16.msra.mxu0 0
  %1750 = vmatprep.subr.bf16.mxu0 0
  %1751 = vmatpush2.bf16.msra.mxu0 0
  %1752 = vmatprep.mubr.bf16.mxu0 0
  %1753 = vmatmul.mubr.bf16.gmra.mxu0 %v1706
  %v1754 = vpop.f32.mrf.mxu0
  %v1755 = vadd.f32 0.0, %v1754
  %v1756 = vpop.f32.mrf.mxu0
  %v1757 = vadd.f32 0.0, %v1756
  %v1758 = vpop.f32.mrf.mxu0
  %v1759 = vpop.f32.mrf.mxu0
  %1760 = vdwg.mxu0
  %1761 = vmatprep.subr.bf16.mxu0 0
  %1762 = vmatpush1.bf16.msra.mxu0 0
  %1763 = vmatprep.subr.bf16.mxu0 0
  %1764 = vmatpush1.bf16.msra.mxu0 0
  %1765 = vmatprep.subr.bf16.mxu0 0
  %1766 = vmatpush1.bf16.msra.mxu0 0
  %1767 = vmatprep.subr.bf16.mxu0 0
  %1768 = vmatpush1.bf16.msra.mxu0 0
  %1769 = vmatprep.subr.bf16.mxu0 0
  %1770 = vmatpush1.bf16.msra.mxu0 0
  %1771 = vmatprep.subr.bf16.mxu0 0
  %1772 = vmatpush1.bf16.msra.mxu0 0
  %1773 = vmatprep.subr.bf16.mxu0 0
  %1774 = vmatpush1.bf16.msra.mxu0 0
  %1775 = vmatprep.subr.bf16.mxu0 %v1718
  %1776 = vmatpush1.bf16.msra.mxu0 %v1715
  %1777 = vmatprep.subr.bf16.mxu0 0
  %1778 = vmatpush2.bf16.msra.mxu0 0
  %1779 = vmatprep.subr.bf16.mxu0 0
  %1780 = vmatpush2.bf16.msra.mxu0 0
  %1781 = vmatprep.subr.bf16.mxu0 0
  %1782 = vmatpush2.bf16.msra.mxu0 0
  %1783 = vmatprep.subr.bf16.mxu0 0
  %1784 = vmatpush2.bf16.msra.mxu0 0
  %1785 = vmatprep.subr.bf16.mxu0 0
  %1786 = vmatpush2.bf16.msra.mxu0 0
  %1787 = vmatprep.subr.bf16.mxu0 0
  %1788 = vmatpush2.bf16.msra.mxu0 0
  %1789 = vmatprep.subr.bf16.mxu0 0
  %1790 = vmatpush2.bf16.msra.mxu0 0
  %1791 = vmatprep.subr.bf16.mxu0 0
  %1792 = vmatpush2.bf16.msra.mxu0 0
  %1793 = vmatprep.mubr.bf16.mxu0 0
  %1794 = vmatmul.mubr.bf16.gmra.mxu0 %v1706
  %v1795 = vpop.f32.mrf.mxu0
  %v1796 = vadd.f32 0.0, %v1795
  %v1797 = vpop.f32.mrf.mxu0
  %v1798 = vadd.f32 0.0, %v1797
  %v1799 = vpop.f32.mrf.mxu0
  %v1800 = vpop.f32.mrf.mxu0
  %1801 = vdwg.mxu0
  %v1802 = vadd.f32 %v1641, %v1755
  %v1803 = vadd.f32 %v1642, %v1757
  %v1804 = vadd.f32 %v1643, %v1796
  %v1805 = vadd.f32 %v1644, %v1798
  %s1806 = scalar_lea.vmem %s4, 12
  %v1807 = vld [vmem:[%s1806] sm:$0x3]
  %v1808 = vpack.c.bf16 %v1695, %v1695
  %v1809 = vpack.c.bf16 %v1696, %v1696
  %v1810 = vpack.c.bf16 %v1697, %v1697
  %v1811 = vpack.c.bf16 %v1698, %v1698
  %v1813 = vsel %vm135, %v1807, 0
  %v1816 = vsel %vm139, %v1808, 0
  %v1819 = vsel %vm139, %v1809, 0
  %v1822 = vsel %vm139, %v1810, 0
  %v1825 = vsel %vm139, %v1811, 0
  %1827 = vmatprep.subr.bf16.mxu0 0
  %1828 = vmatpush1.bf16.msra.mxu0 0
  %1829 = vmatprep.subr.bf16.mxu0 0
  %1830 = vmatpush1.bf16.msra.mxu0 0
  %1831 = vmatprep.subr.bf16.mxu0 0
  %1832 = vmatpush1.bf16.msra.mxu0 0
  %1833 = vmatprep.subr.bf16.mxu0 0
  %1834 = vmatpush1.bf16.msra.mxu0 0
  %1835 = vmatprep.subr.bf16.mxu0 0
  %1836 = vmatpush1.bf16.msra.mxu0 0
  %1837 = vmatprep.subr.bf16.mxu0 0
  %1838 = vmatpush1.bf16.msra.mxu0 0
  %1839 = vmatprep.subr.bf16.mxu0 0
  %1840 = vmatpush1.bf16.msra.mxu0 0
  %1841 = vmatprep.subr.bf16.mxu0 %v1819
  %1842 = vmatpush1.bf16.msra.mxu0 %v1816
  %1843 = vmatprep.subr.bf16.mxu0 0
  %1844 = vmatpush2.bf16.msra.mxu0 0
  %1845 = vmatprep.subr.bf16.mxu0 0
  %1846 = vmatpush2.bf16.msra.mxu0 0
  %1847 = vmatprep.subr.bf16.mxu0 0
  %1848 = vmatpush2.bf16.msra.mxu0 0
  %1849 = vmatprep.subr.bf16.mxu0 0
  %1850 = vmatpush2.bf16.msra.mxu0 0
  %1851 = vmatprep.subr.bf16.mxu0 0
  %1852 = vmatpush2.bf16.msra.mxu0 0
  %1853 = vmatprep.subr.bf16.mxu0 0
  %1854 = vmatpush2.bf16.msra.mxu0 0
  %1855 = vmatprep.subr.bf16.mxu0 0
  %1856 = vmatpush2.bf16.msra.mxu0 0
  %1857 = vmatprep.subr.bf16.mxu0 0
  %1858 = vmatpush2.bf16.msra.mxu0 0
  %1859 = vmatprep.mubr.bf16.mxu0 0
  %1860 = vmatmul.mubr.bf16.gmra.mxu0 %v1813
  %v1861 = vpop.f32.mrf.mxu0
  %v1862 = vadd.f32 0.0, %v1861
  %v1863 = vpop.f32.mrf.mxu0
  %v1864 = vadd.f32 0.0, %v1863
  %v1865 = vpop.f32.mrf.mxu0
  %v1866 = vpop.f32.mrf.mxu0
  %1867 = vdwg.mxu0
  %1868 = vmatprep.subr.bf16.mxu0 0
  %1869 = vmatpush1.bf16.msra.mxu0 0
  %1870 = vmatprep.subr.bf16.mxu0 0
  %1871 = vmatpush1.bf16.msra.mxu0 0
  %1872 = vmatprep.subr.bf16.mxu0 0
  %1873 = vmatpush1.bf16.msra.mxu0 0
  %1874 = vmatprep.subr.bf16.mxu0 0
  %1875 = vmatpush1.bf16.msra.mxu0 0
  %1876 = vmatprep.subr.bf16.mxu0 0
  %1877 = vmatpush1.bf16.msra.mxu0 0
  %1878 = vmatprep.subr.bf16.mxu0 0
  %1879 = vmatpush1.bf16.msra.mxu0 0
  %1880 = vmatprep.subr.bf16.mxu0 0
  %1881 = vmatpush1.bf16.msra.mxu0 0
  %1882 = vmatprep.subr.bf16.mxu0 %v1825
  %1883 = vmatpush1.bf16.msra.mxu0 %v1822
  %1884 = vmatprep.subr.bf16.mxu0 0
  %1885 = vmatpush2.bf16.msra.mxu0 0
  %1886 = vmatprep.subr.bf16.mxu0 0
  %1887 = vmatpush2.bf16.msra.mxu0 0
  %1888 = vmatprep.subr.bf16.mxu0 0
  %1889 = vmatpush2.bf16.msra.mxu0 0
  %1890 = vmatprep.subr.bf16.mxu0 0
  %1891 = vmatpush2.bf16.msra.mxu0 0
  %1892 = vmatprep.subr.bf16.mxu0 0
  %1893 = vmatpush2.bf16.msra.mxu0 0
  %1894 = vmatprep.subr.bf16.mxu0 0
  %1895 = vmatpush2.bf16.msra.mxu0 0
  %1896 = vmatprep.subr.bf16.mxu0 0
  %1897 = vmatpush2.bf16.msra.mxu0 0
  %1898 = vmatprep.subr.bf16.mxu0 0
  %1899 = vmatpush2.bf16.msra.mxu0 0
  %1900 = vmatprep.mubr.bf16.mxu0 0
  %1901 = vmatmul.mubr.bf16.gmra.mxu0 %v1813
  %v1902 = vpop.f32.mrf.mxu0
  %v1903 = vadd.f32 0.0, %v1902
  %v1904 = vpop.f32.mrf.mxu0
  %v1905 = vadd.f32 0.0, %v1904
  %v1906 = vpop.f32.mrf.mxu0
  %v1907 = vpop.f32.mrf.mxu0
  %1908 = vdwg.mxu0
  %v1909 = vadd.f32 %v1802, %v1862
  %v1910 = vadd.f32 %v1803, %v1864
  %v1911 = vadd.f32 %v1804, %v1903
  %v1912 = vadd.f32 %v1805, %v1905
  %1913 = vrot.lane.b32.xlu0 %v52, 112
  %v1914 = vpop.permute.xlu0 %1913
  %1915 = vrot.lane.b32.xlu0 %v59, 112
  %v1916 = vpop.permute.xlu0 %1915
  %1917 = vrot.lane.b32.xlu0 %v53, 112
  %v1918 = vpop.permute.xlu0 %1917
  %1919 = vrot.lane.b32.xlu0 %v60, 112
  %v1920 = vpop.permute.xlu0 %1919
  %vm1921 = vcmp.lt.s32.totalorder %v72, 112
  %v1922 = vsel %vm1921, %v1918, %v1920
  %v1923 = vsel %vm1921, %v1916, %v1918
  %v1924 = vsel %vm1921, %v1914, %v1916
  %v1925 = vsel %vm1921, %v1920, %v1914
  %v1927 = vlaneseq
  %v1928 = vshrl.u32 %v1927, 7
  %v1929 = vsub.s32 0, %v1928
  %v1930 = vrot.slane %v48, %v1929
  %v1931 = vlaneseq
  %v1932 = vshrl.u32 %v1931, 7
  %v1933 = vsub.s32 1, %v1932
  %v1934 = vrot.slane %v48, %v1933
  %v1935 = vlaneseq
  %v1936 = vshrl.u32 %v1935, 7
  %v1937 = vsub.s32 2, %v1936
  %v1938 = vrot.slane %v48, %v1937
  %v1939 = vlaneseq
  %v1940 = vshrl.u32 %v1939, 7
  %v1941 = vsub.s32 3, %v1940
  %v1942 = vrot.slane %v48, %v1941
  %v1947 = vmul.f32 %v1924, %v1930
  %v1948 = vmul.f32 %v1923, %v1934
  %v1949 = vmul.f32 %v1922, %v1938
  %v1950 = vmul.f32 %v1925, %v1942
  %1951 = vrot.lane.b32.xlu0 %v55, 112
  %v1952 = vpop.permute.xlu0 %1951
  %1953 = vrot.lane.b32.xlu0 %v105, 112
  %v1954 = vpop.permute.xlu0 %1953
  %1955 = vrot.lane.b32.xlu0 %v56, 112
  %v1956 = vpop.permute.xlu0 %1955
  %1957 = vrot.lane.b32.xlu0 %v106, 112
  %v1958 = vpop.permute.xlu0 %1957
  %v1959 = vsel %vm1921, %v1956, %v1958
  %v1960 = vsel %vm1921, %v1954, %v1956
  %v1961 = vsel %vm1921, %v1952, %v1954
  %v1962 = vsel %vm1921, %v1958, %v1952
  %v1963 = vmul.f32 %v1961, %v1930
  %v1964 = vmul.f32 %v1960, %v1934
  %v1965 = vmul.f32 %v1959, %v1938
  %v1966 = vmul.f32 %v1962, %v1942
  %s1967 = scalar_lea.vmem %s3, 14
  %v1968 = vld [vmem:[%s1967] sm:$0x3]
  %v1969 = vpack.c.bf16 %v1947, %v1947
  %v1970 = vpack.c.bf16 %v1948, %v1948
  %v1971 = vpack.c.bf16 %v1949, %v1949
  %v1972 = vpack.c.bf16 %v1950, %v1950
  %v1974 = vsel %vm135, %v1968, 0
  %v1977 = vsel %vm139, %v1969, 0
  %v1980 = vsel %vm139, %v1970, 0
  %v1983 = vsel %vm139, %v1971, 0
  %v1986 = vsel %vm139, %v1972, 0
  %1988 = vmatprep.subr.bf16.mxu0 0
  %1989 = vmatpush1.bf16.msra.mxu0 0
  %1990 = vmatprep.subr.bf16.mxu0 0
  %1991 = vmatpush1.bf16.msra.mxu0 0
  %1992 = vmatprep.subr.bf16.mxu0 0
  %1993 = vmatpush1.bf16.msra.mxu0 0
  %1994 = vmatprep.subr.bf16.mxu0 0
  %1995 = vmatpush1.bf16.msra.mxu0 0
  %1996 = vmatprep.subr.bf16.mxu0 0
  %1997 = vmatpush1.bf16.msra.mxu0 0
  %1998 = vmatprep.subr.bf16.mxu0 0
  %1999 = vmatpush1.bf16.msra.mxu0 0
  %2000 = vmatprep.subr.bf16.mxu0 0
  %2001 = vmatpush1.bf16.msra.mxu0 0
  %2002 = vmatprep.subr.bf16.mxu0 %v1980
  %2003 = vmatpush1.bf16.msra.mxu0 %v1977
  %2004 = vmatprep.subr.bf16.mxu0 0
  %2005 = vmatpush2.bf16.msra.mxu0 0
  %2006 = vmatprep.subr.bf16.mxu0 0
  %2007 = vmatpush2.bf16.msra.mxu0 0
  %2008 = vmatprep.subr.bf16.mxu0 0
  %2009 = vmatpush2.bf16.msra.mxu0 0
  %2010 = vmatprep.subr.bf16.mxu0 0
  %2011 = vmatpush2.bf16.msra.mxu0 0
  %2012 = vmatprep.subr.bf16.mxu0 0
  %2013 = vmatpush2.bf16.msra.mxu0 0
  %2014 = vmatprep.subr.bf16.mxu0 0
  %2015 = vmatpush2.bf16.msra.mxu0 0
  %2016 = vmatprep.subr.bf16.mxu0 0
  %2017 = vmatpush2.bf16.msra.mxu0 0
  %2018 = vmatprep.subr.bf16.mxu0 0
  %2019 = vmatpush2.bf16.msra.mxu0 0
  %2020 = vmatprep.mubr.bf16.mxu0 0
  %2021 = vmatmul.mubr.bf16.gmra.mxu0 %v1974
  %v2022 = vpop.f32.mrf.mxu0
  %v2023 = vadd.f32 0.0, %v2022
  %v2024 = vpop.f32.mrf.mxu0
  %v2025 = vadd.f32 0.0, %v2024
  %v2026 = vpop.f32.mrf.mxu0
  %v2027 = vpop.f32.mrf.mxu0
  %2028 = vdwg.mxu0
  %2029 = vmatprep.subr.bf16.mxu0 0
  %2030 = vmatpush1.bf16.msra.mxu0 0
  %2031 = vmatprep.subr.bf16.mxu0 0
  %2032 = vmatpush1.bf16.msra.mxu0 0
  %2033 = vmatprep.subr.bf16.mxu0 0
  %2034 = vmatpush1.bf16.msra.mxu0 0
  %2035 = vmatprep.subr.bf16.mxu0 0
  %2036 = vmatpush1.bf16.msra.mxu0 0
  %2037 = vmatprep.subr.bf16.mxu0 0
  %2038 = vmatpush1.bf16.msra.mxu0 0
  %2039 = vmatprep.subr.bf16.mxu0 0
  %2040 = vmatpush1.bf16.msra.mxu0 0
  %2041 = vmatprep.subr.bf16.mxu0 0
  %2042 = vmatpush1.bf16.msra.mxu0 0
  %2043 = vmatprep.subr.bf16.mxu0 %v1986
  %2044 = vmatpush1.bf16.msra.mxu0 %v1983
  %2045 = vmatprep.subr.bf16.mxu0 0
  %2046 = vmatpush2.bf16.msra.mxu0 0
  %2047 = vmatprep.subr.bf16.mxu0 0
  %2048 = vmatpush2.bf16.msra.mxu0 0
  %2049 = vmatprep.subr.bf16.mxu0 0
  %2050 = vmatpush2.bf16.msra.mxu0 0
  %2051 = vmatprep.subr.bf16.mxu0 0
  %2052 = vmatpush2.bf16.msra.mxu0 0
  %2053 = vmatprep.subr.bf16.mxu0 0
  %2054 = vmatpush2.bf16.msra.mxu0 0
  %2055 = vmatprep.subr.bf16.mxu0 0
  %2056 = vmatpush2.bf16.msra.mxu0 0
  %2057 = vmatprep.subr.bf16.mxu0 0
  %2058 = vmatpush2.bf16.msra.mxu0 0
  %2059 = vmatprep.subr.bf16.mxu0 0
  %2060 = vmatpush2.bf16.msra.mxu0 0
  %2061 = vmatprep.mubr.bf16.mxu0 0
  %2062 = vmatmul.mubr.bf16.gmra.mxu0 %v1974
  %v2063 = vpop.f32.mrf.mxu0
  %v2064 = vadd.f32 0.0, %v2063
  %v2065 = vpop.f32.mrf.mxu0
  %v2066 = vadd.f32 0.0, %v2065
  %v2067 = vpop.f32.mrf.mxu0
  %v2068 = vpop.f32.mrf.mxu0
  %2069 = vdwg.mxu0
  %v2070 = vadd.f32 %v1909, %v2023
  %v2071 = vadd.f32 %v1910, %v2025
  %v2072 = vadd.f32 %v1911, %v2064
  %v2073 = vadd.f32 %v1912, %v2066
  %s2074 = scalar_lea.vmem %s4, 14
  %v2075 = vld [vmem:[%s2074] sm:$0x3]
  %v2076 = vpack.c.bf16 %v1963, %v1963
  %v2077 = vpack.c.bf16 %v1964, %v1964
  %v2078 = vpack.c.bf16 %v1965, %v1965
  %v2079 = vpack.c.bf16 %v1966, %v1966
  %v2081 = vsel %vm135, %v2075, 0
  %v2084 = vsel %vm139, %v2076, 0
  %v2087 = vsel %vm139, %v2077, 0
  %v2090 = vsel %vm139, %v2078, 0
  %v2093 = vsel %vm139, %v2079, 0
  %2095 = vmatprep.subr.bf16.mxu0 0
  %2096 = vmatpush1.bf16.msra.mxu0 0
  %2097 = vmatprep.subr.bf16.mxu0 0
  %2098 = vmatpush1.bf16.msra.mxu0 0
  %2099 = vmatprep.subr.bf16.mxu0 0
  %2100 = vmatpush1.bf16.msra.mxu0 0
  %2101 = vmatprep.subr.bf16.mxu0 0
  %2102 = vmatpush1.bf16.msra.mxu0 0
  %2103 = vmatprep.subr.bf16.mxu0 0
  %2104 = vmatpush1.bf16.msra.mxu0 0
  %2105 = vmatprep.subr.bf16.mxu0 0
  %2106 = vmatpush1.bf16.msra.mxu0 0
  %2107 = vmatprep.subr.bf16.mxu0 0
  %2108 = vmatpush1.bf16.msra.mxu0 0
  %2109 = vmatprep.subr.bf16.mxu0 %v2087
  %2110 = vmatpush1.bf16.msra.mxu0 %v2084
  %2111 = vmatprep.subr.bf16.mxu0 0
  %2112 = vmatpush2.bf16.msra.mxu0 0
  %2113 = vmatprep.subr.bf16.mxu0 0
  %2114 = vmatpush2.bf16.msra.mxu0 0
  %2115 = vmatprep.subr.bf16.mxu0 0
  %2116 = vmatpush2.bf16.msra.mxu0 0
  %2117 = vmatprep.subr.bf16.mxu0 0
  %2118 = vmatpush2.bf16.msra.mxu0 0
  %2119 = vmatprep.subr.bf16.mxu0 0
  %2120 = vmatpush2.bf16.msra.mxu0 0
  %2121 = vmatprep.subr.bf16.mxu0 0
  %2122 = vmatpush2.bf16.msra.mxu0 0
  %2123 = vmatprep.subr.bf16.mxu0 0
  %2124 = vmatpush2.bf16.msra.mxu0 0
  %2125 = vmatprep.subr.bf16.mxu0 0
  %2126 = vmatpush2.bf16.msra.mxu0 0
  %2127 = vmatprep.mubr.bf16.mxu0 0
  %2128 = vmatmul.mubr.bf16.gmra.mxu0 %v2081
  %v2129 = vpop.f32.mrf.mxu0
  %v2130 = vadd.f32 0.0, %v2129
  %v2131 = vpop.f32.mrf.mxu0
  %v2132 = vadd.f32 0.0, %v2131
  %v2133 = vpop.f32.mrf.mxu0
  %v2134 = vpop.f32.mrf.mxu0
  %2135 = vdwg.mxu0
  %2136 = vmatprep.subr.bf16.mxu0 0
  %2137 = vmatpush1.bf16.msra.mxu0 0
  %2138 = vmatprep.subr.bf16.mxu0 0
  %2139 = vmatpush1.bf16.msra.mxu0 0
  %2140 = vmatprep.subr.bf16.mxu0 0
  %2141 = vmatpush1.bf16.msra.mxu0 0
  %2142 = vmatprep.subr.bf16.mxu0 0
  %2143 = vmatpush1.bf16.msra.mxu0 0
  %2144 = vmatprep.subr.bf16.mxu0 0
  %2145 = vmatpush1.bf16.msra.mxu0 0
  %2146 = vmatprep.subr.bf16.mxu0 0
  %2147 = vmatpush1.bf16.msra.mxu0 0
  %2148 = vmatprep.subr.bf16.mxu0 0
  %2149 = vmatpush1.bf16.msra.mxu0 0
  %2150 = vmatprep.subr.bf16.mxu0 %v2093
  %2151 = vmatpush1.bf16.msra.mxu0 %v2090
  %2152 = vmatprep.subr.bf16.mxu0 0
  %2153 = vmatpush2.bf16.msra.mxu0 0
  %2154 = vmatprep.subr.bf16.mxu0 0
  %2155 = vmatpush2.bf16.msra.mxu0 0
  %2156 = vmatprep.subr.bf16.mxu0 0
  %2157 = vmatpush2.bf16.msra.mxu0 0
  %2158 = vmatprep.subr.bf16.mxu0 0
  %2159 = vmatpush2.bf16.msra.mxu0 0
  %2160 = vmatprep.subr.bf16.mxu0 0
  %2161 = vmatpush2.bf16.msra.mxu0 0
  %2162 = vmatprep.subr.bf16.mxu0 0
  %2163 = vmatpush2.bf16.msra.mxu0 0
  %2164 = vmatprep.subr.bf16.mxu0 0
  %2165 = vmatpush2.bf16.msra.mxu0 0
  %2166 = vmatprep.subr.bf16.mxu0 0
  %2167 = vmatpush2.bf16.msra.mxu0 0
  %2168 = vmatprep.mubr.bf16.mxu0 0
  %2169 = vmatmul.mubr.bf16.gmra.mxu0 %v2081
  %v2170 = vpop.f32.mrf.mxu0
  %v2171 = vadd.f32 0.0, %v2170
  %v2172 = vpop.f32.mrf.mxu0
  %v2173 = vadd.f32 0.0, %v2172
  %v2174 = vpop.f32.mrf.mxu0
  %v2175 = vpop.f32.mrf.mxu0
  %2176 = vdwg.mxu0
  %v2177 = vadd.f32 %v2070, %v2130
  %v2178 = vadd.f32 %v2071, %v2132
  %v2179 = vadd.f32 %v2072, %v2171
  %v2180 = vadd.f32 %v2073, %v2173
  %2181 = vrot.lane.b32.xlu0 %v52, 111
  %v2182 = vpop.permute.xlu0 %2181
  %2183 = vrot.lane.b32.xlu0 %v59, 111
  %v2184 = vpop.permute.xlu0 %2183
  %2185 = vrot.lane.b32.xlu0 %v53, 111
  %v2186 = vpop.permute.xlu0 %2185
  %2187 = vrot.lane.b32.xlu0 %v60, 111
  %v2188 = vpop.permute.xlu0 %2187
  %vm2189 = vcmp.lt.s32.totalorder %v72, 111
  %v2190 = vsel %vm2189, %v2186, %v2188
  %v2191 = vsel %vm2189, %v2184, %v2186
  %v2192 = vsel %vm2189, %v2182, %v2184
  %v2193 = vsel %vm2189, %v2188, %v2182
  %v2195 = vlaneseq
  %v2196 = vshrl.u32 %v2195, 7
  %v2197 = vsub.s32 0, %v2196
  %v2198 = vrot.slane %v50, %v2197
  %v2199 = vlaneseq
  %v2200 = vshrl.u32 %v2199, 7
  %v2201 = vsub.s32 1, %v2200
  %v2202 = vrot.slane %v50, %v2201
  %v2203 = vlaneseq
  %v2204 = vshrl.u32 %v2203, 7
  %v2205 = vsub.s32 2, %v2204
  %v2206 = vrot.slane %v50, %v2205
  %v2207 = vlaneseq
  %v2208 = vshrl.u32 %v2207, 7
  %v2209 = vsub.s32 3, %v2208
  %v2210 = vrot.slane %v50, %v2209
  %v2215 = vmul.f32 %v2192, %v2198
  %v2216 = vmul.f32 %v2191, %v2202
  %v2217 = vmul.f32 %v2190, %v2206
  %v2218 = vmul.f32 %v2193, %v2210
  %2219 = vrot.lane.b32.xlu0 %v55, 111
  %v2220 = vpop.permute.xlu0 %2219
  %2221 = vrot.lane.b32.xlu0 %v105, 111
  %v2222 = vpop.permute.xlu0 %2221
  %2223 = vrot.lane.b32.xlu0 %v56, 111
  %v2224 = vpop.permute.xlu0 %2223
  %2225 = vrot.lane.b32.xlu0 %v106, 111
  %v2226 = vpop.permute.xlu0 %2225
  %v2227 = vsel %vm2189, %v2224, %v2226
  %v2228 = vsel %vm2189, %v2222, %v2224
  %v2229 = vsel %vm2189, %v2220, %v2222
  %v2230 = vsel %vm2189, %v2226, %v2220
  %v2231 = vmul.f32 %v2229, %v2198
  %v2232 = vmul.f32 %v2228, %v2202
  %v2233 = vmul.f32 %v2227, %v2206
  %v2234 = vmul.f32 %v2230, %v2210
  %s2235 = scalar_lea.vmem %s3, 16
  %v2236 = vld [vmem:[%s2235] sm:$0x3]
  %v2237 = vpack.c.bf16 %v2215, %v2215
  %v2238 = vpack.c.bf16 %v2216, %v2216
  %v2239 = vpack.c.bf16 %v2217, %v2217
  %v2240 = vpack.c.bf16 %v2218, %v2218
  %v2242 = vsel %vm135, %v2236, 0
  %v2245 = vsel %vm139, %v2237, 0
  %v2248 = vsel %vm139, %v2238, 0
  %v2251 = vsel %vm139, %v2239, 0
  %v2254 = vsel %vm139, %v2240, 0
  %2256 = vmatprep.subr.bf16.mxu0 0
  %2257 = vmatpush1.bf16.msra.mxu0 0
  %2258 = vmatprep.subr.bf16.mxu0 0
  %2259 = vmatpush1.bf16.msra.mxu0 0
  %2260 = vmatprep.subr.bf16.mxu0 0
  %2261 = vmatpush1.bf16.msra.mxu0 0
  %2262 = vmatprep.subr.bf16.mxu0 0
  %2263 = vmatpush1.bf16.msra.mxu0 0
  %2264 = vmatprep.subr.bf16.mxu0 0
  %2265 = vmatpush1.bf16.msra.mxu0 0
  %2266 = vmatprep.subr.bf16.mxu0 0
  %2267 = vmatpush1.bf16.msra.mxu0 0
  %2268 = vmatprep.subr.bf16.mxu0 0
  %2269 = vmatpush1.bf16.msra.mxu0 0
  %2270 = vmatprep.subr.bf16.mxu0 %v2248
  %2271 = vmatpush1.bf16.msra.mxu0 %v2245
  %2272 = vmatprep.subr.bf16.mxu0 0
  %2273 = vmatpush2.bf16.msra.mxu0 0
  %2274 = vmatprep.subr.bf16.mxu0 0
  %2275 = vmatpush2.bf16.msra.mxu0 0
  %2276 = vmatprep.subr.bf16.mxu0 0
  %2277 = vmatpush2.bf16.msra.mxu0 0
  %2278 = vmatprep.subr.bf16.mxu0 0
  %2279 = vmatpush2.bf16.msra.mxu0 0
  %2280 = vmatprep.subr.bf16.mxu0 0
  %2281 = vmatpush2.bf16.msra.mxu0 0
  %2282 = vmatprep.subr.bf16.mxu0 0
  %2283 = vmatpush2.bf16.msra.mxu0 0
  %2284 = vmatprep.subr.bf16.mxu0 0
  %2285 = vmatpush2.bf16.msra.mxu0 0
  %2286 = vmatprep.subr.bf16.mxu0 0
  %2287 = vmatpush2.bf16.msra.mxu0 0
  %2288 = vmatprep.mubr.bf16.mxu0 0
  %2289 = vmatmul.mubr.bf16.gmra.mxu0 %v2242
  %v2290 = vpop.f32.mrf.mxu0
  %v2291 = vadd.f32 0.0, %v2290
  %v2292 = vpop.f32.mrf.mxu0
  %v2293 = vadd.f32 0.0, %v2292
  %v2294 = vpop.f32.mrf.mxu0
  %v2295 = vpop.f32.mrf.mxu0
  %2296 = vdwg.mxu0
  %2297 = vmatprep.subr.bf16.mxu0 0
  %2298 = vmatpush1.bf16.msra.mxu0 0
  %2299 = vmatprep.subr.bf16.mxu0 0
  %2300 = vmatpush1.bf16.msra.mxu0 0
  %2301 = vmatprep.subr.bf16.mxu0 0
  %2302 = vmatpush1.bf16.msra.mxu0 0
  %2303 = vmatprep.subr.bf16.mxu0 0
  %2304 = vmatpush1.bf16.msra.mxu0 0
  %2305 = vmatprep.subr.bf16.mxu0 0
  %2306 = vmatpush1.bf16.msra.mxu0 0
  %2307 = vmatprep.subr.bf16.mxu0 0
  %2308 = vmatpush1.bf16.msra.mxu0 0
  %2309 = vmatprep.subr.bf16.mxu0 0
  %2310 = vmatpush1.bf16.msra.mxu0 0
  %2311 = vmatprep.subr.bf16.mxu0 %v2254
  %2312 = vmatpush1.bf16.msra.mxu0 %v2251
  %2313 = vmatprep.subr.bf16.mxu0 0
  %2314 = vmatpush2.bf16.msra.mxu0 0
  %2315 = vmatprep.subr.bf16.mxu0 0
  %2316 = vmatpush2.bf16.msra.mxu0 0
  %2317 = vmatprep.subr.bf16.mxu0 0
  %2318 = vmatpush2.bf16.msra.mxu0 0
  %2319 = vmatprep.subr.bf16.mxu0 0
  %2320 = vmatpush2.bf16.msra.mxu0 0
  %2321 = vmatprep.subr.bf16.mxu0 0
  %2322 = vmatpush2.bf16.msra.mxu0 0
  %2323 = vmatprep.subr.bf16.mxu0 0
  %2324 = vmatpush2.bf16.msra.mxu0 0
  %2325 = vmatprep.subr.bf16.mxu0 0
  %2326 = vmatpush2.bf16.msra.mxu0 0
  %2327 = vmatprep.subr.bf16.mxu0 0
  %2328 = vmatpush2.bf16.msra.mxu0 0
  %2329 = vmatprep.mubr.bf16.mxu0 0
  %2330 = vmatmul.mubr.bf16.gmra.mxu0 %v2242
  %v2331 = vpop.f32.mrf.mxu0
  %v2332 = vadd.f32 0.0, %v2331
  %v2333 = vpop.f32.mrf.mxu0
  %v2334 = vadd.f32 0.0, %v2333
  %v2335 = vpop.f32.mrf.mxu0
  %v2336 = vpop.f32.mrf.mxu0
  %2337 = vdwg.mxu0
  %v2338 = vadd.f32 %v2177, %v2291
  %v2339 = vadd.f32 %v2178, %v2293
  %v2340 = vadd.f32 %v2179, %v2332
  %v2341 = vadd.f32 %v2180, %v2334
  %s2342 = scalar_lea.vmem %s4, 16
  %v2343 = vld [vmem:[%s2342] sm:$0x3]
  %v2344 = vpack.c.bf16 %v2231, %v2231
  %v2345 = vpack.c.bf16 %v2232, %v2232
  %v2346 = vpack.c.bf16 %v2233, %v2233
  %v2347 = vpack.c.bf16 %v2234, %v2234
  %v2349 = vsel %vm135, %v2343, 0
  %v2352 = vsel %vm139, %v2344, 0
  %v2355 = vsel %vm139, %v2345, 0
  %v2358 = vsel %vm139, %v2346, 0
  %v2361 = vsel %vm139, %v2347, 0
  %2363 = vmatprep.subr.bf16.mxu0 0
  %2364 = vmatpush1.bf16.msra.mxu0 0
  %2365 = vmatprep.subr.bf16.mxu0 0
  %2366 = vmatpush1.bf16.msra.mxu0 0
  %2367 = vmatprep.subr.bf16.mxu0 0
  %2368 = vmatpush1.bf16.msra.mxu0 0
  %2369 = vmatprep.subr.bf16.mxu0 0
  %2370 = vmatpush1.bf16.msra.mxu0 0
  %2371 = vmatprep.subr.bf16.mxu0 0
  %2372 = vmatpush1.bf16.msra.mxu0 0
  %2373 = vmatprep.subr.bf16.mxu0 0
  %2374 = vmatpush1.bf16.msra.mxu0 0
  %2375 = vmatprep.subr.bf16.mxu0 0
  %2376 = vmatpush1.bf16.msra.mxu0 0
  %2377 = vmatprep.subr.bf16.mxu0 %v2355
  %2378 = vmatpush1.bf16.msra.mxu0 %v2352
  %2379 = vmatprep.subr.bf16.mxu0 0
  %2380 = vmatpush2.bf16.msra.mxu0 0
  %2381 = vmatprep.subr.bf16.mxu0 0
  %2382 = vmatpush2.bf16.msra.mxu0 0
  %2383 = vmatprep.subr.bf16.mxu0 0
  %2384 = vmatpush2.bf16.msra.mxu0 0
  %2385 = vmatprep.subr.bf16.mxu0 0
  %2386 = vmatpush2.bf16.msra.mxu0 0
  %2387 = vmatprep.subr.bf16.mxu0 0
  %2388 = vmatpush2.bf16.msra.mxu0 0
  %2389 = vmatprep.subr.bf16.mxu0 0
  %2390 = vmatpush2.bf16.msra.mxu0 0
  %2391 = vmatprep.subr.bf16.mxu0 0
  %2392 = vmatpush2.bf16.msra.mxu0 0
  %2393 = vmatprep.subr.bf16.mxu0 0
  %2394 = vmatpush2.bf16.msra.mxu0 0
  %2395 = vmatprep.mubr.bf16.mxu0 0
  %2396 = vmatmul.mubr.bf16.gmra.mxu0 %v2349
  %v2397 = vpop.f32.mrf.mxu0
  %v2398 = vadd.f32 0.0, %v2397
  %v2399 = vpop.f32.mrf.mxu0
  %v2400 = vadd.f32 0.0, %v2399
  %v2401 = vpop.f32.mrf.mxu0
  %v2402 = vpop.f32.mrf.mxu0
  %2403 = vdwg.mxu0
  %2404 = vmatprep.subr.bf16.mxu0 0
  %2405 = vmatpush1.bf16.msra.mxu0 0
  %2406 = vmatprep.subr.bf16.mxu0 0
  %2407 = vmatpush1.bf16.msra.mxu0 0
  %2408 = vmatprep.subr.bf16.mxu0 0
  %2409 = vmatpush1.bf16.msra.mxu0 0
  %2410 = vmatprep.subr.bf16.mxu0 0
  %2411 = vmatpush1.bf16.msra.mxu0 0
  %2412 = vmatprep.subr.bf16.mxu0 0
  %2413 = vmatpush1.bf16.msra.mxu0 0
  %2414 = vmatprep.subr.bf16.mxu0 0
  %2415 = vmatpush1.bf16.msra.mxu0 0
  %2416 = vmatprep.subr.bf16.mxu0 0
  %2417 = vmatpush1.bf16.msra.mxu0 0
  %2418 = vmatprep.subr.bf16.mxu0 %v2361
  %2419 = vmatpush1.bf16.msra.mxu0 %v2358
  %2420 = vmatprep.subr.bf16.mxu0 0
  %2421 = vmatpush2.bf16.msra.mxu0 0
  %2422 = vmatprep.subr.bf16.mxu0 0
  %2423 = vmatpush2.bf16.msra.mxu0 0
  %2424 = vmatprep.subr.bf16.mxu0 0
  %2425 = vmatpush2.bf16.msra.mxu0 0
  %2426 = vmatprep.subr.bf16.mxu0 0
  %2427 = vmatpush2.bf16.msra.mxu0 0
  %2428 = vmatprep.subr.bf16.mxu0 0
  %2429 = vmatpush2.bf16.msra.mxu0 0
  %2430 = vmatprep.subr.bf16.mxu0 0
  %2431 = vmatpush2.bf16.msra.mxu0 0
  %2432 = vmatprep.subr.bf16.mxu0 0
  %2433 = vmatpush2.bf16.msra.mxu0 0
  %2434 = vmatprep.subr.bf16.mxu0 0
  %2435 = vmatpush2.bf16.msra.mxu0 0
  %2436 = vmatprep.mubr.bf16.mxu0 0
  %2437 = vmatmul.mubr.bf16.gmra.mxu0 %v2349
  %v2438 = vpop.f32.mrf.mxu0
  %v2439 = vadd.f32 0.0, %v2438
  %v2440 = vpop.f32.mrf.mxu0
  %v2441 = vadd.f32 0.0, %v2440
  %v2442 = vpop.f32.mrf.mxu0
  %v2443 = vpop.f32.mrf.mxu0
  %2444 = vdwg.mxu0
  %v2445 = vadd.f32 %v2338, %v2398
  %v2446 = vadd.f32 %v2339, %v2400
  %v2447 = vadd.f32 %v2340, %v2439
  %v2448 = vadd.f32 %v2341, %v2441
  %v2449 = vld [vmem:[%s6] sm:$0xf]
  %v2450 = vld [vmem:[%s7] sm:$0xf]
  %vm2451 = vcmask 1043456
  %v2452 = vsel %vm2451, %v2445, 0.0
  %v2453 = vsel %vm2451, %v2446, 0.0
  %v2454 = vadd.f32 %v2452, %v2453
  %v2455 = vsel %vm2451, %v2447, 0.0
  %v2456 = vadd.f32 %v2454, %v2455
  %v2457 = vsel %vm2451, %v2448, 0.0
  %v2458 = vadd.f32 %v2456, %v2457
  %2459 = vadd.xlane.f32.xlu0 %v2458
  %v2460 = vpop.xlane.xlu0 %2459
  %v2461 = vmul.f32 %v2460, 0.001953125
  %v2462 = vsub.f32 %v2445, %v2461
  %v2463 = vsub.f32 %v2446, %v2461
  %v2464 = vsub.f32 %v2447, %v2461
  %v2465 = vsub.f32 %v2448, %v2461
  %v2466 = vmul.f32 %v2462, %v2462
  %v2467 = vmul.f32 %v2463, %v2463
  %v2468 = vmul.f32 %v2464, %v2464
  %v2469 = vmul.f32 %v2465, %v2465
  %v2470 = vsel %vm2451, %v2466, 0.0
  %v2471 = vsel %vm2451, %v2467, 0.0
  %v2472 = vadd.f32 %v2470, %v2471
  %v2473 = vsel %vm2451, %v2468, 0.0
  %v2474 = vadd.f32 %v2472, %v2473
  %v2475 = vsel %vm2451, %v2469, 0.0
  %v2476 = vadd.f32 %v2474, %v2475
  %2477 = vadd.xlane.f32.xlu0 %v2476
  %v2478 = vpop.xlane.xlu0 %2477
  %v2479 = vmul.f32 %v2478, 0.001953125
  %v2480 = vadd.f32 %v2479, 1e-05
  %v2481 = vrsqrt.pop %v2480
  %v2482 = vmul.f32 %v2449, %v2481
  %2484 = vset.pattern.permute.xlu0 0
  %2485 = vperm.xlu0 %2484, %v2482
  %v2486 = vpop.permute.xlu0 %2485
  %v2488 = vmul.f32 %v2462, %v2486
  %v2489 = vmul.f32 %v2463, %v2486
  %v2490 = vmul.f32 %v2464, %v2486
  %v2491 = vmul.f32 %v2465, %v2486
  %2493 = vset.pattern.permute.xlu0 0
  %2494 = vperm.xlu0 %2493, %v2450
  %v2495 = vpop.permute.xlu0 %2494
  %v2497 = vadd.f32 %v2488, %v2495
  %v2498 = vadd.f32 %v2489, %v2495
  %v2499 = vadd.f32 %v2490, %v2495
  %v2500 = vadd.f32 %v2491, %v2495
  %v2501 = vmax.f32 %v2497, 0.0
  %v2502 = vmax.f32 %v2498, 0.0
  %v2503 = vmax.f32 %v2499, 0.0
  %v2504 = vmax.f32 %v2500, 0.0
  %2505 = vrot.lane.b32.xlu0 %v2501, 17
  %v2506 = vpop.permute.xlu0 %2505
  %2507 = vrot.lane.b32.xlu0 %v2502, 17
  %v2508 = vpop.permute.xlu0 %2507
  %2509 = vrot.lane.b32.xlu0 %v2503, 17
  %v2510 = vpop.permute.xlu0 %2509
  %2511 = vrot.lane.b32.xlu0 %v2504, 17
  %v2512 = vpop.permute.xlu0 %2511
  %v2513 = vsel %vm73, %v2510, %v2512
  %v2514 = vsel %vm73, %v2508, %v2510
  %v2515 = vsel %vm73, %v2506, %v2508
  %v2516 = vsel %vm73, %v2512, %v2506
  %v2517 = vmul.f32 %v2516, %v82
  %v2518 = vmul.f32 %v2515, %v86
  %v2519 = vmul.f32 %v2514, %v90
  %v2520 = vmul.f32 %v2513, %v94
  %v2521 = vld [vmem:[%s5] sm:$0xf]
  %v2522 = vpack.c.bf16 %v2517, %v2517
  %v2523 = vpack.c.bf16 %v2518, %v2518
  %v2524 = vpack.c.bf16 %v2519, %v2519
  %v2525 = vpack.c.bf16 %v2520, %v2520
  %2526 = vrot.lane.b32.xlu0 %v2501, 16
  %v2527 = vpop.permute.xlu0 %2526
  %2528 = vrot.lane.b32.xlu0 %v2502, 16
  %v2529 = vpop.permute.xlu0 %2528
  %2530 = vrot.lane.b32.xlu0 %v2503, 16
  %v2531 = vpop.permute.xlu0 %2530
  %2532 = vrot.lane.b32.xlu0 %v2504, 16
  %v2533 = vpop.permute.xlu0 %2532
  %v2534 = vsel %vm339, %v2531, %v2533
  %v2535 = vsel %vm339, %v2529, %v2531
  %v2536 = vsel %vm339, %v2527, %v2529
  %v2537 = vsel %vm339, %v2533, %v2527
  %v2538 = vmul.f32 %v2537, %v348
  %v2539 = vmul.f32 %v2536, %v352
  %v2540 = vmul.f32 %v2535, %v356
  %v2541 = vmul.f32 %v2534, %v360
  %s2542 = scalar_lea.vmem %s5, 4
  %v2543 = vld [vmem:[%s2542] sm:$0xf]
  %v2544 = vpack.c.bf16 %v2538, %v2538
  %v2545 = vpack.c.bf16 %v2539, %v2539
  %v2546 = vpack.c.bf16 %v2540, %v2540
  %v2547 = vpack.c.bf16 %v2541, %v2541
  %v2549 = vsel %vm135, %v2543, 0
  %v2552 = vsel %vm139, %v2544, 0
  %v2555 = vsel %vm139, %v2545, 0
  %v2558 = vsel %vm139, %v2546, 0
  %v2561 = vsel %vm139, %v2547, 0
  %2563 = vmatprep.subr.bf16.mxu0 0
  %2564 = vmatpush1.bf16.msra.mxu0 0
  %2565 = vmatprep.subr.bf16.mxu0 0
  %2566 = vmatpush1.bf16.msra.mxu0 0
  %2567 = vmatprep.subr.bf16.mxu0 0
  %2568 = vmatpush1.bf16.msra.mxu0 0
  %2569 = vmatprep.subr.bf16.mxu0 0
  %2570 = vmatpush1.bf16.msra.mxu0 0
  %2571 = vmatprep.subr.bf16.mxu0 0
  %2572 = vmatpush1.bf16.msra.mxu0 0
  %2573 = vmatprep.subr.bf16.mxu0 0
  %2574 = vmatpush1.bf16.msra.mxu0 0
  %2575 = vmatprep.subr.bf16.mxu0 0
  %2576 = vmatpush1.bf16.msra.mxu0 0
  %2577 = vmatprep.subr.bf16.mxu0 %v2555
  %2578 = vmatpush1.bf16.msra.mxu0 %v2552
  %2579 = vmatprep.subr.bf16.mxu0 0
  %2580 = vmatpush2.bf16.msra.mxu0 0
  %2581 = vmatprep.subr.bf16.mxu0 0
  %2582 = vmatpush2.bf16.msra.mxu0 0
  %2583 = vmatprep.subr.bf16.mxu0 0
  %2584 = vmatpush2.bf16.msra.mxu0 0
  %2585 = vmatprep.subr.bf16.mxu0 0
  %2586 = vmatpush2.bf16.msra.mxu0 0
  %2587 = vmatprep.subr.bf16.mxu0 0
  %2588 = vmatpush2.bf16.msra.mxu0 0
  %2589 = vmatprep.subr.bf16.mxu0 0
  %2590 = vmatpush2.bf16.msra.mxu0 0
  %2591 = vmatprep.subr.bf16.mxu0 0
  %2592 = vmatpush2.bf16.msra.mxu0 0
  %2593 = vmatprep.subr.bf16.mxu0 0
  %2594 = vmatpush2.bf16.msra.mxu0 0
  %2595 = vmatprep.mubr.bf16.mxu0 0
  %2596 = vmatmul.mubr.bf16.gmra.mxu0 %v2549
  %v2597 = vpop.f32.mrf.mxu0
  %v2598 = vadd.f32 0.0, %v2597
  %v2599 = vpop.f32.mrf.mxu0
  %v2600 = vadd.f32 0.0, %v2599
  %v2601 = vpop.f32.mrf.mxu0
  %v2602 = vpop.f32.mrf.mxu0
  %2603 = vdwg.mxu0
  %2604 = vmatprep.subr.bf16.mxu0 0
  %2605 = vmatpush1.bf16.msra.mxu0 0
  %2606 = vmatprep.subr.bf16.mxu0 0
  %2607 = vmatpush1.bf16.msra.mxu0 0
  %2608 = vmatprep.subr.bf16.mxu0 0
  %2609 = vmatpush1.bf16.msra.mxu0 0
  %2610 = vmatprep.subr.bf16.mxu0 0
  %2611 = vmatpush1.bf16.msra.mxu0 0
  %2612 = vmatprep.subr.bf16.mxu0 0
  %2613 = vmatpush1.bf16.msra.mxu0 0
  %2614 = vmatprep.subr.bf16.mxu0 0
  %2615 = vmatpush1.bf16.msra.mxu0 0
  %2616 = vmatprep.subr.bf16.mxu0 0
  %2617 = vmatpush1.bf16.msra.mxu0 0
  %2618 = vmatprep.subr.bf16.mxu0 %v2561
  %2619 = vmatpush1.bf16.msra.mxu0 %v2558
  %2620 = vmatprep.subr.bf16.mxu0 0
  %2621 = vmatpush2.bf16.msra.mxu0 0
  %2622 = vmatprep.subr.bf16.mxu0 0
  %2623 = vmatpush2.bf16.msra.mxu0 0
  %2624 = vmatprep.subr.bf16.mxu0 0
  %2625 = vmatpush2.bf16.msra.mxu0 0
  %2626 = vmatprep.subr.bf16.mxu0 0
  %2627 = vmatpush2.bf16.msra.mxu0 0
  %2628 = vmatprep.subr.bf16.mxu0 0
  %2629 = vmatpush2.bf16.msra.mxu0 0
  %2630 = vmatprep.subr.bf16.mxu0 0
  %2631 = vmatpush2.bf16.msra.mxu0 0
  %2632 = vmatprep.subr.bf16.mxu0 0
  %2633 = vmatpush2.bf16.msra.mxu0 0
  %2634 = vmatprep.subr.bf16.mxu0 0
  %2635 = vmatpush2.bf16.msra.mxu0 0
  %2636 = vmatprep.mubr.bf16.mxu0 0
  %2637 = vmatmul.mubr.bf16.gmra.mxu0 %v2549
  %v2638 = vpop.f32.mrf.mxu0
  %v2639 = vadd.f32 0.0, %v2638
  %v2640 = vpop.f32.mrf.mxu0
  %v2641 = vadd.f32 0.0, %v2640
  %v2642 = vpop.f32.mrf.mxu0
  %v2643 = vpop.f32.mrf.mxu0
  %2644 = vdwg.mxu0
  %v2646 = vsel %vm135, %v2521, 0
  %v2649 = vsel %vm139, %v2522, 0
  %v2652 = vsel %vm139, %v2523, 0
  %v2655 = vsel %vm139, %v2524, 0
  %v2658 = vsel %vm139, %v2525, 0
  %2660 = vmatprep.subr.bf16.mxu0 0
  %2661 = vmatpush1.bf16.msra.mxu0 0
  %2662 = vmatprep.subr.bf16.mxu0 0
  %2663 = vmatpush1.bf16.msra.mxu0 0
  %2664 = vmatprep.subr.bf16.mxu0 0
  %2665 = vmatpush1.bf16.msra.mxu0 0
  %2666 = vmatprep.subr.bf16.mxu0 0
  %2667 = vmatpush1.bf16.msra.mxu0 0
  %2668 = vmatprep.subr.bf16.mxu0 0
  %2669 = vmatpush1.bf16.msra.mxu0 0
  %2670 = vmatprep.subr.bf16.mxu0 0
  %2671 = vmatpush1.bf16.msra.mxu0 0
  %2672 = vmatprep.subr.bf16.mxu0 0
  %2673 = vmatpush1.bf16.msra.mxu0 0
  %2674 = vmatprep.subr.bf16.mxu0 %v2652
  %2675 = vmatpush1.bf16.msra.mxu0 %v2649
  %2676 = vmatprep.subr.bf16.mxu0 0
  %2677 = vmatpush2.bf16.msra.mxu0 0
  %2678 = vmatprep.subr.bf16.mxu0 0
  %2679 = vmatpush2.bf16.msra.mxu0 0
  %2680 = vmatprep.subr.bf16.mxu0 0
  %2681 = vmatpush2.bf16.msra.mxu0 0
  %2682 = vmatprep.subr.bf16.mxu0 0
  %2683 = vmatpush2.bf16.msra.mxu0 0
  %2684 = vmatprep.subr.bf16.mxu0 0
  %2685 = vmatpush2.bf16.msra.mxu0 0
  %2686 = vmatprep.subr.bf16.mxu0 0
  %2687 = vmatpush2.bf16.msra.mxu0 0
  %2688 = vmatprep.subr.bf16.mxu0 0
  %2689 = vmatpush2.bf16.msra.mxu0 0
  %2690 = vmatprep.subr.bf16.mxu0 0
  %2691 = vmatpush2.bf16.msra.mxu0 0
  %2692 = vmatprep.mubr.bf16.mxu0 0
  %2693 = vmatmul.mubr.bf16.gmra.mxu0 %v2646
  %v2694 = vpop.f32.mrf.mxu0
  %v2695 = vadd.f32 %v2598, %v2694
  %v2696 = vpop.f32.mrf.mxu0
  %v2697 = vadd.f32 %v2600, %v2696
  %v2698 = vpop.f32.mrf.mxu0
  %v2699 = vpop.f32.mrf.mxu0
  %2700 = vdwg.mxu0
  %2701 = vmatprep.subr.bf16.mxu0 0
  %2702 = vmatpush1.bf16.msra.mxu0 0
  %2703 = vmatprep.subr.bf16.mxu0 0
  %2704 = vmatpush1.bf16.msra.mxu0 0
  %2705 = vmatprep.subr.bf16.mxu0 0
  %2706 = vmatpush1.bf16.msra.mxu0 0
  %2707 = vmatprep.subr.bf16.mxu0 0
  %2708 = vmatpush1.bf16.msra.mxu0 0
  %2709 = vmatprep.subr.bf16.mxu0 0
  %2710 = vmatpush1.bf16.msra.mxu0 0
  %2711 = vmatprep.subr.bf16.mxu0 0
  %2712 = vmatpush1.bf16.msra.mxu0 0
  %2713 = vmatprep.subr.bf16.mxu0 0
  %2714 = vmatpush1.bf16.msra.mxu0 0
  %2715 = vmatprep.subr.bf16.mxu0 %v2658
  %2716 = vmatpush1.bf16.msra.mxu0 %v2655
  %2717 = vmatprep.subr.bf16.mxu0 0
  %2718 = vmatpush2.bf16.msra.mxu0 0
  %2719 = vmatprep.subr.bf16.mxu0 0
  %2720 = vmatpush2.bf16.msra.mxu0 0
  %2721 = vmatprep.subr.bf16.mxu0 0
  %2722 = vmatpush2.bf16.msra.mxu0 0
  %2723 = vmatprep.subr.bf16.mxu0 0
  %2724 = vmatpush2.bf16.msra.mxu0 0
  %2725 = vmatprep.subr.bf16.mxu0 0
  %2726 = vmatpush2.bf16.msra.mxu0 0
  %2727 = vmatprep.subr.bf16.mxu0 0
  %2728 = vmatpush2.bf16.msra.mxu0 0
  %2729 = vmatprep.subr.bf16.mxu0 0
  %2730 = vmatpush2.bf16.msra.mxu0 0
  %2731 = vmatprep.subr.bf16.mxu0 0
  %2732 = vmatpush2.bf16.msra.mxu0 0
  %2733 = vmatprep.mubr.bf16.mxu0 0
  %2734 = vmatmul.mubr.bf16.gmra.mxu0 %v2646
  %v2735 = vpop.f32.mrf.mxu0
  %v2736 = vadd.f32 %v2639, %v2735
  %v2737 = vpop.f32.mrf.mxu0
  %v2738 = vadd.f32 %v2641, %v2737
  %v2739 = vpop.f32.mrf.mxu0
  %v2740 = vpop.f32.mrf.mxu0
  %2741 = vdwg.mxu0
  %2742 = vrot.lane.b32.xlu0 %v2501, 15
  %v2743 = vpop.permute.xlu0 %2742
  %2744 = vrot.lane.b32.xlu0 %v2502, 15
  %v2745 = vpop.permute.xlu0 %2744
  %2746 = vrot.lane.b32.xlu0 %v2503, 15
  %v2747 = vpop.permute.xlu0 %2746
  %2748 = vrot.lane.b32.xlu0 %v2504, 15
  %v2749 = vpop.permute.xlu0 %2748
  %v2750 = vsel %vm607, %v2747, %v2749
  %v2751 = vsel %vm607, %v2745, %v2747
  %v2752 = vsel %vm607, %v2743, %v2745
  %v2753 = vsel %vm607, %v2749, %v2743
  %v2754 = vmul.f32 %v2753, %v616
  %v2755 = vmul.f32 %v2752, %v620
  %v2756 = vmul.f32 %v2751, %v624
  %v2757 = vmul.f32 %v2750, %v628
  %s2758 = scalar_lea.vmem %s5, 8
  %v2759 = vld [vmem:[%s2758] sm:$0xf]
  %v2760 = vpack.c.bf16 %v2754, %v2754
  %v2761 = vpack.c.bf16 %v2755, %v2755
  %v2762 = vpack.c.bf16 %v2756, %v2756
  %v2763 = vpack.c.bf16 %v2757, %v2757
  %v2765 = vsel %vm135, %v2759, 0
  %v2768 = vsel %vm139, %v2760, 0
  %v2771 = vsel %vm139, %v2761, 0
  %v2774 = vsel %vm139, %v2762, 0
  %v2777 = vsel %vm139, %v2763, 0
  %2779 = vmatprep.subr.bf16.mxu0 0
  %2780 = vmatpush1.bf16.msra.mxu0 0
  %2781 = vmatprep.subr.bf16.mxu0 0
  %2782 = vmatpush1.bf16.msra.mxu0 0
  %2783 = vmatprep.subr.bf16.mxu0 0
  %2784 = vmatpush1.bf16.msra.mxu0 0
  %2785 = vmatprep.subr.bf16.mxu0 0
  %2786 = vmatpush1.bf16.msra.mxu0 0
  %2787 = vmatprep.subr.bf16.mxu0 0
  %2788 = vmatpush1.bf16.msra.mxu0 0
  %2789 = vmatprep.subr.bf16.mxu0 0
  %2790 = vmatpush1.bf16.msra.mxu0 0
  %2791 = vmatprep.subr.bf16.mxu0 0
  %2792 = vmatpush1.bf16.msra.mxu0 0
  %2793 = vmatprep.subr.bf16.mxu0 %v2771
  %2794 = vmatpush1.bf16.msra.mxu0 %v2768
  %2795 = vmatprep.subr.bf16.mxu0 0
  %2796 = vmatpush2.bf16.msra.mxu0 0
  %2797 = vmatprep.subr.bf16.mxu0 0
  %2798 = vmatpush2.bf16.msra.mxu0 0
  %2799 = vmatprep.subr.bf16.mxu0 0
  %2800 = vmatpush2.bf16.msra.mxu0 0
  %2801 = vmatprep.subr.bf16.mxu0 0
  %2802 = vmatpush2.bf16.msra.mxu0 0
  %2803 = vmatprep.subr.bf16.mxu0 0
  %2804 = vmatpush2.bf16.msra.mxu0 0
  %2805 = vmatprep.subr.bf16.mxu0 0
  %2806 = vmatpush2.bf16.msra.mxu0 0
  %2807 = vmatprep.subr.bf16.mxu0 0
  %2808 = vmatpush2.bf16.msra.mxu0 0
  %2809 = vmatprep.subr.bf16.mxu0 0
  %2810 = vmatpush2.bf16.msra.mxu0 0
  %2811 = vmatprep.mubr.bf16.mxu0 0
  %2812 = vmatmul.mubr.bf16.gmra.mxu0 %v2765
  %v2813 = vpop.f32.mrf.mxu0
  %v2814 = vadd.f32 0.0, %v2813
  %v2815 = vpop.f32.mrf.mxu0
  %v2816 = vadd.f32 0.0, %v2815
  %v2817 = vpop.f32.mrf.mxu0
  %v2818 = vpop.f32.mrf.mxu0
  %2819 = vdwg.mxu0
  %2820 = vmatprep.subr.bf16.mxu0 0
  %2821 = vmatpush1.bf16.msra.mxu0 0
  %2822 = vmatprep.subr.bf16.mxu0 0
  %2823 = vmatpush1.bf16.msra.mxu0 0
  %2824 = vmatprep.subr.bf16.mxu0 0
  %2825 = vmatpush1.bf16.msra.mxu0 0
  %2826 = vmatprep.subr.bf16.mxu0 0
  %2827 = vmatpush1.bf16.msra.mxu0 0
  %2828 = vmatprep.subr.bf16.mxu0 0
  %2829 = vmatpush1.bf16.msra.mxu0 0
  %2830 = vmatprep.subr.bf16.mxu0 0
  %2831 = vmatpush1.bf16.msra.mxu0 0
  %2832 = vmatprep.subr.bf16.mxu0 0
  %2833 = vmatpush1.bf16.msra.mxu0 0
  %2834 = vmatprep.subr.bf16.mxu0 %v2777
  %2835 = vmatpush1.bf16.msra.mxu0 %v2774
  %2836 = vmatprep.subr.bf16.mxu0 0
  %2837 = vmatpush2.bf16.msra.mxu0 0
  %2838 = vmatprep.subr.bf16.mxu0 0
  %2839 = vmatpush2.bf16.msra.mxu0 0
  %2840 = vmatprep.subr.bf16.mxu0 0
  %2841 = vmatpush2.bf16.msra.mxu0 0
  %2842 = vmatprep.subr.bf16.mxu0 0
  %2843 = vmatpush2.bf16.msra.mxu0 0
  %2844 = vmatprep.subr.bf16.mxu0 0
  %2845 = vmatpush2.bf16.msra.mxu0 0
  %2846 = vmatprep.subr.bf16.mxu0 0
  %2847 = vmatpush2.bf16.msra.mxu0 0
  %2848 = vmatprep.subr.bf16.mxu0 0
  %2849 = vmatpush2.bf16.msra.mxu0 0
  %2850 = vmatprep.subr.bf16.mxu0 0
  %2851 = vmatpush2.bf16.msra.mxu0 0
  %2852 = vmatprep.mubr.bf16.mxu0 0
  %2853 = vmatmul.mubr.bf16.gmra.mxu0 %v2765
  %v2854 = vpop.f32.mrf.mxu0
  %v2855 = vadd.f32 0.0, %v2854
  %v2856 = vpop.f32.mrf.mxu0
  %v2857 = vadd.f32 0.0, %v2856
  %v2858 = vpop.f32.mrf.mxu0
  %v2859 = vpop.f32.mrf.mxu0
  %2860 = vdwg.mxu0
  %v2861 = vadd.f32 %v2695, %v2814
  %v2862 = vadd.f32 %v2697, %v2816
  %v2863 = vadd.f32 %v2736, %v2855
  %v2864 = vadd.f32 %v2738, %v2857
  %2865 = vrot.lane.b32.xlu0 %v2501, 1
  %v2866 = vpop.permute.xlu0 %2865
  %2867 = vrot.lane.b32.xlu0 %v2502, 1
  %v2868 = vpop.permute.xlu0 %2867
  %2869 = vrot.lane.b32.xlu0 %v2503, 1
  %v2870 = vpop.permute.xlu0 %2869
  %2871 = vrot.lane.b32.xlu0 %v2504, 1
  %v2872 = vpop.permute.xlu0 %2871
  %v2873 = vsel %vm875, %v2870, %v2872
  %v2874 = vsel %vm875, %v2868, %v2870
  %v2875 = vsel %vm875, %v2866, %v2868
  %v2876 = vsel %vm875, %v2872, %v2866
  %v2877 = vmul.f32 %v2876, %v884
  %v2878 = vmul.f32 %v2875, %v888
  %v2879 = vmul.f32 %v2874, %v892
  %v2880 = vmul.f32 %v2873, %v896
  %s2881 = scalar_lea.vmem %s5, 12
  %v2882 = vld [vmem:[%s2881] sm:$0xf]
  %v2883 = vpack.c.bf16 %v2877, %v2877
  %v2884 = vpack.c.bf16 %v2878, %v2878
  %v2885 = vpack.c.bf16 %v2879, %v2879
  %v2886 = vpack.c.bf16 %v2880, %v2880
  %v2888 = vsel %vm135, %v2882, 0
  %v2891 = vsel %vm139, %v2883, 0
  %v2894 = vsel %vm139, %v2884, 0
  %v2897 = vsel %vm139, %v2885, 0
  %v2900 = vsel %vm139, %v2886, 0
  %2902 = vmatprep.subr.bf16.mxu0 0
  %2903 = vmatpush1.bf16.msra.mxu0 0
  %2904 = vmatprep.subr.bf16.mxu0 0
  %2905 = vmatpush1.bf16.msra.mxu0 0
  %2906 = vmatprep.subr.bf16.mxu0 0
  %2907 = vmatpush1.bf16.msra.mxu0 0
  %2908 = vmatprep.subr.bf16.mxu0 0
  %2909 = vmatpush1.bf16.msra.mxu0 0
  %2910 = vmatprep.subr.bf16.mxu0 0
  %2911 = vmatpush1.bf16.msra.mxu0 0
  %2912 = vmatprep.subr.bf16.mxu0 0
  %2913 = vmatpush1.bf16.msra.mxu0 0
  %2914 = vmatprep.subr.bf16.mxu0 0
  %2915 = vmatpush1.bf16.msra.mxu0 0
  %2916 = vmatprep.subr.bf16.mxu0 %v2894
  %2917 = vmatpush1.bf16.msra.mxu0 %v2891
  %2918 = vmatprep.subr.bf16.mxu0 0
  %2919 = vmatpush2.bf16.msra.mxu0 0
  %2920 = vmatprep.subr.bf16.mxu0 0
  %2921 = vmatpush2.bf16.msra.mxu0 0
  %2922 = vmatprep.subr.bf16.mxu0 0
  %2923 = vmatpush2.bf16.msra.mxu0 0
  %2924 = vmatprep.subr.bf16.mxu0 0
  %2925 = vmatpush2.bf16.msra.mxu0 0
  %2926 = vmatprep.subr.bf16.mxu0 0
  %2927 = vmatpush2.bf16.msra.mxu0 0
  %2928 = vmatprep.subr.bf16.mxu0 0
  %2929 = vmatpush2.bf16.msra.mxu0 0
  %2930 = vmatprep.subr.bf16.mxu0 0
  %2931 = vmatpush2.bf16.msra.mxu0 0
  %2932 = vmatprep.subr.bf16.mxu0 0
  %2933 = vmatpush2.bf16.msra.mxu0 0
  %2934 = vmatprep.mubr.bf16.mxu0 0
  %2935 = vmatmul.mubr.bf16.gmra.mxu0 %v2888
  %v2936 = vpop.f32.mrf.mxu0
  %v2937 = vadd.f32 0.0, %v2936
  %v2938 = vpop.f32.mrf.mxu0
  %v2939 = vadd.f32 0.0, %v2938
  %v2940 = vpop.f32.mrf.mxu0
  %v2941 = vpop.f32.mrf.mxu0
  %2942 = vdwg.mxu0
  %2943 = vmatprep.subr.bf16.mxu0 0
  %2944 = vmatpush1.bf16.msra.mxu0 0
  %2945 = vmatprep.subr.bf16.mxu0 0
  %2946 = vmatpush1.bf16.msra.mxu0 0
  %2947 = vmatprep.subr.bf16.mxu0 0
  %2948 = vmatpush1.bf16.msra.mxu0 0
  %2949 = vmatprep.subr.bf16.mxu0 0
  %2950 = vmatpush1.bf16.msra.mxu0 0
  %2951 = vmatprep.subr.bf16.mxu0 0
  %2952 = vmatpush1.bf16.msra.mxu0 0
  %2953 = vmatprep.subr.bf16.mxu0 0
  %2954 = vmatpush1.bf16.msra.mxu0 0
  %2955 = vmatprep.subr.bf16.mxu0 0
  %2956 = vmatpush1.bf16.msra.mxu0 0
  %2957 = vmatprep.subr.bf16.mxu0 %v2900
  %2958 = vmatpush1.bf16.msra.mxu0 %v2897
  %2959 = vmatprep.subr.bf16.mxu0 0
  %2960 = vmatpush2.bf16.msra.mxu0 0
  %2961 = vmatprep.subr.bf16.mxu0 0
  %2962 = vmatpush2.bf16.msra.mxu0 0
  %2963 = vmatprep.subr.bf16.mxu0 0
  %2964 = vmatpush2.bf16.msra.mxu0 0
  %2965 = vmatprep.subr.bf16.mxu0 0
  %2966 = vmatpush2.bf16.msra.mxu0 0
  %2967 = vmatprep.subr.bf16.mxu0 0
  %2968 = vmatpush2.bf16.msra.mxu0 0
  %2969 = vmatprep.subr.bf16.mxu0 0
  %2970 = vmatpush2.bf16.msra.mxu0 0
  %2971 = vmatprep.subr.bf16.mxu0 0
  %2972 = vmatpush2.bf16.msra.mxu0 0
  %2973 = vmatprep.subr.bf16.mxu0 0
  %2974 = vmatpush2.bf16.msra.mxu0 0
  %2975 = vmatprep.mubr.bf16.mxu0 0
  %2976 = vmatmul.mubr.bf16.gmra.mxu0 %v2888
  %v2977 = vpop.f32.mrf.mxu0
  %v2978 = vadd.f32 0.0, %v2977
  %v2979 = vpop.f32.mrf.mxu0
  %v2980 = vadd.f32 0.0, %v2979
  %v2981 = vpop.f32.mrf.mxu0
  %v2982 = vpop.f32.mrf.mxu0
  %2983 = vdwg.mxu0
  %v2984 = vadd.f32 %v2861, %v2937
  %v2985 = vadd.f32 %v2862, %v2939
  %v2986 = vadd.f32 %v2863, %v2978
  %v2987 = vadd.f32 %v2864, %v2980
  %s2988 = scalar_lea.vmem %s5, 16
  %v2989 = vld [vmem:[%s2988] sm:$0xf]
  %v2990 = vpack.c.bf16 %v2501, %v2501
  %v2991 = vpack.c.bf16 %v2502, %v2502
  %v2992 = vpack.c.bf16 %v2503, %v2503
  %v2993 = vpack.c.bf16 %v2504, %v2504
  %v2995 = vsel %vm135, %v2989, 0
  %v2998 = vsel %vm139, %v2990, 0
  %v3001 = vsel %vm139, %v2991, 0
  %v3004 = vsel %vm139, %v2992, 0
  %v3007 = vsel %vm139, %v2993, 0
  %3009 = vmatprep.subr.bf16.mxu0 0
  %3010 = vmatpush1.bf16.msra.mxu0 0
  %3011 = vmatprep.subr.bf16.mxu0 0
  %3012 = vmatpush1.bf16.msra.mxu0 0
  %3013 = vmatprep.subr.bf16.mxu0 0
  %3014 = vmatpush1.bf16.msra.mxu0 0
  %3015 = vmatprep.subr.bf16.mxu0 0
  %3016 = vmatpush1.bf16.msra.mxu0 0
  %3017 = vmatprep.subr.bf16.mxu0 0
  %3018 = vmatpush1.bf16.msra.mxu0 0
  %3019 = vmatprep.subr.bf16.mxu0 0
  %3020 = vmatpush1.bf16.msra.mxu0 0
  %3021 = vmatprep.subr.bf16.mxu0 0
  %3022 = vmatpush1.bf16.msra.mxu0 0
  %3023 = vmatprep.subr.bf16.mxu0 %v3001
  %3024 = vmatpush1.bf16.msra.mxu0 %v2998
  %3025 = vmatprep.subr.bf16.mxu0 0
  %3026 = vmatpush2.bf16.msra.mxu0 0
  %3027 = vmatprep.subr.bf16.mxu0 0
  %3028 = vmatpush2.bf16.msra.mxu0 0
  %3029 = vmatprep.subr.bf16.mxu0 0
  %3030 = vmatpush2.bf16.msra.mxu0 0
  %3031 = vmatprep.subr.bf16.mxu0 0
  %3032 = vmatpush2.bf16.msra.mxu0 0
  %3033 = vmatprep.subr.bf16.mxu0 0
  %3034 = vmatpush2.bf16.msra.mxu0 0
  %3035 = vmatprep.subr.bf16.mxu0 0
  %3036 = vmatpush2.bf16.msra.mxu0 0
  %3037 = vmatprep.subr.bf16.mxu0 0
  %3038 = vmatpush2.bf16.msra.mxu0 0
  %3039 = vmatprep.subr.bf16.mxu0 0
  %3040 = vmatpush2.bf16.msra.mxu0 0
  %3041 = vmatprep.mubr.bf16.mxu0 0
  %3042 = vmatmul.mubr.bf16.gmra.mxu0 %v2995
  %v3043 = vpop.f32.mrf.mxu0
  %v3044 = vadd.f32 0.0, %v3043
  %v3045 = vpop.f32.mrf.mxu0
  %v3046 = vadd.f32 0.0, %v3045
  %v3047 = vpop.f32.mrf.mxu0
  %v3048 = vpop.f32.mrf.mxu0
  %3049 = vdwg.mxu0
  %3050 = vmatprep.subr.bf16.mxu0 0
  %3051 = vmatpush1.bf16.msra.mxu0 0
  %3052 = vmatprep.subr.bf16.mxu0 0
  %3053 = vmatpush1.bf16.msra.mxu0 0
  %3054 = vmatprep.subr.bf16.mxu0 0
  %3055 = vmatpush1.bf16.msra.mxu0 0
  %3056 = vmatprep.subr.bf16.mxu0 0
  %3057 = vmatpush1.bf16.msra.mxu0 0
  %3058 = vmatprep.subr.bf16.mxu0 0
  %3059 = vmatpush1.bf16.msra.mxu0 0
  %3060 = vmatprep.subr.bf16.mxu0 0
  %3061 = vmatpush1.bf16.msra.mxu0 0
  %3062 = vmatprep.subr.bf16.mxu0 0
  %3063 = vmatpush1.bf16.msra.mxu0 0
  %3064 = vmatprep.subr.bf16.mxu0 %v3007
  %3065 = vmatpush1.bf16.msra.mxu0 %v3004
  %3066 = vmatprep.subr.bf16.mxu0 0
  %3067 = vmatpush2.bf16.msra.mxu0 0
  %3068 = vmatprep.subr.bf16.mxu0 0
  %3069 = vmatpush2.bf16.msra.mxu0 0
  %3070 = vmatprep.subr.bf16.mxu0 0
  %3071 = vmatpush2.bf16.msra.mxu0 0
  %3072 = vmatprep.subr.bf16.mxu0 0
  %3073 = vmatpush2.bf16.msra.mxu0 0
  %3074 = vmatprep.subr.bf16.mxu0 0
  %3075 = vmatpush2.bf16.msra.mxu0 0
  %3076 = vmatprep.subr.bf16.mxu0 0
  %3077 = vmatpush2.bf16.msra.mxu0 0
  %3078 = vmatprep.subr.bf16.mxu0 0
  %3079 = vmatpush2.bf16.msra.mxu0 0
  %3080 = vmatprep.subr.bf16.mxu0 0
  %3081 = vmatpush2.bf16.msra.mxu0 0
  %3082 = vmatprep.mubr.bf16.mxu0 0
  %3083 = vmatmul.mubr.bf16.gmra.mxu0 %v2995
  %v3084 = vpop.f32.mrf.mxu0
  %v3085 = vadd.f32 0.0, %v3084
  %v3086 = vpop.f32.mrf.mxu0
  %v3087 = vadd.f32 0.0, %v3086
  %v3088 = vpop.f32.mrf.mxu0
  %v3089 = vpop.f32.mrf.mxu0
  %3090 = vdwg.mxu0
  %v3091 = vadd.f32 %v2984, %v3044
  %v3092 = vadd.f32 %v2985, %v3046
  %v3093 = vadd.f32 %v2986, %v3085
  %v3094 = vadd.f32 %v2987, %v3087
  %3095 = vrot.lane.b32.xlu0 %v2501, 127
  %v3096 = vpop.permute.xlu0 %3095
  %3097 = vrot.lane.b32.xlu0 %v2502, 127
  %v3098 = vpop.permute.xlu0 %3097
  %3099 = vrot.lane.b32.xlu0 %v2503, 127
  %v3100 = vpop.permute.xlu0 %3099
  %3101 = vrot.lane.b32.xlu0 %v2504, 127
  %v3102 = vpop.permute.xlu0 %3101
  %v3103 = vsel %vm1385, %v3100, %v3102
  %v3104 = vsel %vm1385, %v3098, %v3100
  %v3105 = vsel %vm1385, %v3096, %v3098
  %v3106 = vsel %vm1385, %v3102, %v3096
  %v3107 = vmul.f32 %v3105, %v1394
  %v3108 = vmul.f32 %v3104, %v1398
  %v3109 = vmul.f32 %v3103, %v1402
  %v3110 = vmul.f32 %v3106, %v1406
  %s3111 = scalar_lea.vmem %s5, 20
  %v3112 = vld [vmem:[%s3111] sm:$0xf]
  %v3113 = vpack.c.bf16 %v3107, %v3107
  %v3114 = vpack.c.bf16 %v3108, %v3108
  %v3115 = vpack.c.bf16 %v3109, %v3109
  %v3116 = vpack.c.bf16 %v3110, %v3110
  %v3118 = vsel %vm135, %v3112, 0
  %v3121 = vsel %vm139, %v3113, 0
  %v3124 = vsel %vm139, %v3114, 0
  %v3127 = vsel %vm139, %v3115, 0
  %v3130 = vsel %vm139, %v3116, 0
  %3132 = vmatprep.subr.bf16.mxu0 0
  %3133 = vmatpush1.bf16.msra.mxu0 0
  %3134 = vmatprep.subr.bf16.mxu0 0
  %3135 = vmatpush1.bf16.msra.mxu0 0
  %3136 = vmatprep.subr.bf16.mxu0 0
  %3137 = vmatpush1.bf16.msra.mxu0 0
  %3138 = vmatprep.subr.bf16.mxu0 0
  %3139 = vmatpush1.bf16.msra.mxu0 0
  %3140 = vmatprep.subr.bf16.mxu0 0
  %3141 = vmatpush1.bf16.msra.mxu0 0
  %3142 = vmatprep.subr.bf16.mxu0 0
  %3143 = vmatpush1.bf16.msra.mxu0 0
  %3144 = vmatprep.subr.bf16.mxu0 0
  %3145 = vmatpush1.bf16.msra.mxu0 0
  %3146 = vmatprep.subr.bf16.mxu0 %v3124
  %3147 = vmatpush1.bf16.msra.mxu0 %v3121
  %3148 = vmatprep.subr.bf16.mxu0 0
  %3149 = vmatpush2.bf16.msra.mxu0 0
  %3150 = vmatprep.subr.bf16.mxu0 0
  %3151 = vmatpush2.bf16.msra.mxu0 0
  %3152 = vmatprep.subr.bf16.mxu0 0
  %3153 = vmatpush2.bf16.msra.mxu0 0
  %3154 = vmatprep.subr.bf16.mxu0 0
  %3155 = vmatpush2.bf16.msra.mxu0 0
  %3156 = vmatprep.subr.bf16.mxu0 0
  %3157 = vmatpush2.bf16.msra.mxu0 0
  %3158 = vmatprep.subr.bf16.mxu0 0
  %3159 = vmatpush2.bf16.msra.mxu0 0
  %3160 = vmatprep.subr.bf16.mxu0 0
  %3161 = vmatpush2.bf16.msra.mxu0 0
  %3162 = vmatprep.subr.bf16.mxu0 0
  %3163 = vmatpush2.bf16.msra.mxu0 0
  %3164 = vmatprep.mubr.bf16.mxu0 0
  %3165 = vmatmul.mubr.bf16.gmra.mxu0 %v3118
  %v3166 = vpop.f32.mrf.mxu0
  %v3167 = vadd.f32 0.0, %v3166
  %v3168 = vpop.f32.mrf.mxu0
  %v3169 = vadd.f32 0.0, %v3168
  %v3170 = vpop.f32.mrf.mxu0
  %v3171 = vpop.f32.mrf.mxu0
  %3172 = vdwg.mxu0
  %3173 = vmatprep.subr.bf16.mxu0 0
  %3174 = vmatpush1.bf16.msra.mxu0 0
  %3175 = vmatprep.subr.bf16.mxu0 0
  %3176 = vmatpush1.bf16.msra.mxu0 0
  %3177 = vmatprep.subr.bf16.mxu0 0
  %3178 = vmatpush1.bf16.msra.mxu0 0
  %3179 = vmatprep.subr.bf16.mxu0 0
  %3180 = vmatpush1.bf16.msra.mxu0 0
  %3181 = vmatprep.subr.bf16.mxu0 0
  %3182 = vmatpush1.bf16.msra.mxu0 0
  %3183 = vmatprep.subr.bf16.mxu0 0
  %3184 = vmatpush1.bf16.msra.mxu0 0
  %3185 = vmatprep.subr.bf16.mxu0 0
  %3186 = vmatpush1.bf16.msra.mxu0 0
  %3187 = vmatprep.subr.bf16.mxu0 %v3130
  %3188 = vmatpush1.bf16.msra.mxu0 %v3127
  %3189 = vmatprep.subr.bf16.mxu0 0
  %3190 = vmatpush2.bf16.msra.mxu0 0
  %3191 = vmatprep.subr.bf16.mxu0 0
  %3192 = vmatpush2.bf16.msra.mxu0 0
  %3193 = vmatprep.subr.bf16.mxu0 0
  %3194 = vmatpush2.bf16.msra.mxu0 0
  %3195 = vmatprep.subr.bf16.mxu0 0
  %3196 = vmatpush2.bf16.msra.mxu0 0
  %3197 = vmatprep.subr.bf16.mxu0 0
  %3198 = vmatpush2.bf16.msra.mxu0 0
  %3199 = vmatprep.subr.bf16.mxu0 0
  %3200 = vmatpush2.bf16.msra.mxu0 0
  %3201 = vmatprep.subr.bf16.mxu0 0
  %3202 = vmatpush2.bf16.msra.mxu0 0
  %3203 = vmatprep.subr.bf16.mxu0 0
  %3204 = vmatpush2.bf16.msra.mxu0 0
  %3205 = vmatprep.mubr.bf16.mxu0 0
  %3206 = vmatmul.mubr.bf16.gmra.mxu0 %v3118
  %v3207 = vpop.f32.mrf.mxu0
  %v3208 = vadd.f32 0.0, %v3207
  %v3209 = vpop.f32.mrf.mxu0
  %v3210 = vadd.f32 0.0, %v3209
  %v3211 = vpop.f32.mrf.mxu0
  %v3212 = vpop.f32.mrf.mxu0
  %3213 = vdwg.mxu0
  %v3214 = vadd.f32 %v3091, %v3167
  %v3215 = vadd.f32 %v3092, %v3169
  %v3216 = vadd.f32 %v3093, %v3208
  %v3217 = vadd.f32 %v3094, %v3210
  %3218 = vrot.lane.b32.xlu0 %v2501, 113
  %v3219 = vpop.permute.xlu0 %3218
  %3220 = vrot.lane.b32.xlu0 %v2502, 113
  %v3221 = vpop.permute.xlu0 %3220
  %3222 = vrot.lane.b32.xlu0 %v2503, 113
  %v3223 = vpop.permute.xlu0 %3222
  %3224 = vrot.lane.b32.xlu0 %v2504, 113
  %v3225 = vpop.permute.xlu0 %3224
  %v3226 = vsel %vm1653, %v3223, %v3225
  %v3227 = vsel %vm1653, %v3221, %v3223
  %v3228 = vsel %vm1653, %v3219, %v3221
  %v3229 = vsel %vm1653, %v3225, %v3219
  %v3230 = vmul.f32 %v3228, %v1662
  %v3231 = vmul.f32 %v3227, %v1666
  %v3232 = vmul.f32 %v3226, %v1670
  %v3233 = vmul.f32 %v3229, %v1674
  %s3234 = scalar_lea.vmem %s5, 24
  %v3235 = vld [vmem:[%s3234] sm:$0xf]
  %v3236 = vpack.c.bf16 %v3230, %v3230
  %v3237 = vpack.c.bf16 %v3231, %v3231
  %v3238 = vpack.c.bf16 %v3232, %v3232
  %v3239 = vpack.c.bf16 %v3233, %v3233
  %v3241 = vsel %vm135, %v3235, 0
  %v3244 = vsel %vm139, %v3236, 0
  %v3247 = vsel %vm139, %v3237, 0
  %v3250 = vsel %vm139, %v3238, 0
  %v3253 = vsel %vm139, %v3239, 0
  %3255 = vmatprep.subr.bf16.mxu0 0
  %3256 = vmatpush1.bf16.msra.mxu0 0
  %3257 = vmatprep.subr.bf16.mxu0 0
  %3258 = vmatpush1.bf16.msra.mxu0 0
  %3259 = vmatprep.subr.bf16.mxu0 0
  %3260 = vmatpush1.bf16.msra.mxu0 0
  %3261 = vmatprep.subr.bf16.mxu0 0
  %3262 = vmatpush1.bf16.msra.mxu0 0
  %3263 = vmatprep.subr.bf16.mxu0 0
  %3264 = vmatpush1.bf16.msra.mxu0 0
  %3265 = vmatprep.subr.bf16.mxu0 0
  %3266 = vmatpush1.bf16.msra.mxu0 0
  %3267 = vmatprep.subr.bf16.mxu0 0
  %3268 = vmatpush1.bf16.msra.mxu0 0
  %3269 = vmatprep.subr.bf16.mxu0 %v3247
  %3270 = vmatpush1.bf16.msra.mxu0 %v3244
  %3271 = vmatprep.subr.bf16.mxu0 0
  %3272 = vmatpush2.bf16.msra.mxu0 0
  %3273 = vmatprep.subr.bf16.mxu0 0
  %3274 = vmatpush2.bf16.msra.mxu0 0
  %3275 = vmatprep.subr.bf16.mxu0 0
  %3276 = vmatpush2.bf16.msra.mxu0 0
  %3277 = vmatprep.subr.bf16.mxu0 0
  %3278 = vmatpush2.bf16.msra.mxu0 0
  %3279 = vmatprep.subr.bf16.mxu0 0
  %3280 = vmatpush2.bf16.msra.mxu0 0
  %3281 = vmatprep.subr.bf16.mxu0 0
  %3282 = vmatpush2.bf16.msra.mxu0 0
  %3283 = vmatprep.subr.bf16.mxu0 0
  %3284 = vmatpush2.bf16.msra.mxu0 0
  %3285 = vmatprep.subr.bf16.mxu0 0
  %3286 = vmatpush2.bf16.msra.mxu0 0
  %3287 = vmatprep.mubr.bf16.mxu0 0
  %3288 = vmatmul.mubr.bf16.gmra.mxu0 %v3241
  %v3289 = vpop.f32.mrf.mxu0
  %v3290 = vadd.f32 0.0, %v3289
  %v3291 = vpop.f32.mrf.mxu0
  %v3292 = vadd.f32 0.0, %v3291
  %v3293 = vpop.f32.mrf.mxu0
  %v3294 = vpop.f32.mrf.mxu0
  %3295 = vdwg.mxu0
  %3296 = vmatprep.subr.bf16.mxu0 0
  %3297 = vmatpush1.bf16.msra.mxu0 0
  %3298 = vmatprep.subr.bf16.mxu0 0
  %3299 = vmatpush1.bf16.msra.mxu0 0
  %3300 = vmatprep.subr.bf16.mxu0 0
  %3301 = vmatpush1.bf16.msra.mxu0 0
  %3302 = vmatprep.subr.bf16.mxu0 0
  %3303 = vmatpush1.bf16.msra.mxu0 0
  %3304 = vmatprep.subr.bf16.mxu0 0
  %3305 = vmatpush1.bf16.msra.mxu0 0
  %3306 = vmatprep.subr.bf16.mxu0 0
  %3307 = vmatpush1.bf16.msra.mxu0 0
  %3308 = vmatprep.subr.bf16.mxu0 0
  %3309 = vmatpush1.bf16.msra.mxu0 0
  %3310 = vmatprep.subr.bf16.mxu0 %v3253
  %3311 = vmatpush1.bf16.msra.mxu0 %v3250
  %3312 = vmatprep.subr.bf16.mxu0 0
  %3313 = vmatpush2.bf16.msra.mxu0 0
  %3314 = vmatprep.subr.bf16.mxu0 0
  %3315 = vmatpush2.bf16.msra.mxu0 0
  %3316 = vmatprep.subr.bf16.mxu0 0
  %3317 = vmatpush2.bf16.msra.mxu0 0
  %3318 = vmatprep.subr.bf16.mxu0 0
  %3319 = vmatpush2.bf16.msra.mxu0 0
  %3320 = vmatprep.subr.bf16.mxu0 0
  %3321 = vmatpush2.bf16.msra.mxu0 0
  %3322 = vmatprep.subr.bf16.mxu0 0
  %3323 = vmatpush2.bf16.msra.mxu0 0
  %3324 = vmatprep.subr.bf16.mxu0 0
  %3325 = vmatpush2.bf16.msra.mxu0 0
  %3326 = vmatprep.subr.bf16.mxu0 0
  %3327 = vmatpush2.bf16.msra.mxu0 0
  %3328 = vmatprep.mubr.bf16.mxu0 0
  %3329 = vmatmul.mubr.bf16.gmra.mxu0 %v3241
  %v3330 = vpop.f32.mrf.mxu0
  %v3331 = vadd.f32 0.0, %v3330
  %v3332 = vpop.f32.mrf.mxu0
  %v3333 = vadd.f32 0.0, %v3332
  %v3334 = vpop.f32.mrf.mxu0
  %v3335 = vpop.f32.mrf.mxu0
  %3336 = vdwg.mxu0
  %v3337 = vadd.f32 %v3214, %v3290
  %v3338 = vadd.f32 %v3215, %v3292
  %v3339 = vadd.f32 %v3216, %v3331
  %v3340 = vadd.f32 %v3217, %v3333
  %3341 = vrot.lane.b32.xlu0 %v2501, 112
  %v3342 = vpop.permute.xlu0 %3341
  %3343 = vrot.lane.b32.xlu0 %v2502, 112
  %v3344 = vpop.permute.xlu0 %3343
  %3345 = vrot.lane.b32.xlu0 %v2503, 112
  %v3346 = vpop.permute.xlu0 %3345
  %3347 = vrot.lane.b32.xlu0 %v2504, 112
  %v3348 = vpop.permute.xlu0 %3347
  %v3349 = vsel %vm1921, %v3346, %v3348
  %v3350 = vsel %vm1921, %v3344, %v3346
  %v3351 = vsel %vm1921, %v3342, %v3344
  %v3352 = vsel %vm1921, %v3348, %v3342
  %v3353 = vmul.f32 %v3351, %v1930
  %v3354 = vmul.f32 %v3350, %v1934
  %v3355 = vmul.f32 %v3349, %v1938
  %v3356 = vmul.f32 %v3352, %v1942
  %s3357 = scalar_lea.vmem %s5, 28
  %v3358 = vld [vmem:[%s3357] sm:$0xf]
  %v3359 = vpack.c.bf16 %v3353, %v3353
  %v3360 = vpack.c.bf16 %v3354, %v3354
  %v3361 = vpack.c.bf16 %v3355, %v3355
  %v3362 = vpack.c.bf16 %v3356, %v3356
  %v3364 = vsel %vm135, %v3358, 0
  %v3367 = vsel %vm139, %v3359, 0
  %v3370 = vsel %vm139, %v3360, 0
  %v3373 = vsel %vm139, %v3361, 0
  %v3376 = vsel %vm139, %v3362, 0
  %3378 = vmatprep.subr.bf16.mxu0 0
  %3379 = vmatpush1.bf16.msra.mxu0 0
  %3380 = vmatprep.subr.bf16.mxu0 0
  %3381 = vmatpush1.bf16.msra.mxu0 0
  %3382 = vmatprep.subr.bf16.mxu0 0
  %3383 = vmatpush1.bf16.msra.mxu0 0
  %3384 = vmatprep.subr.bf16.mxu0 0
  %3385 = vmatpush1.bf16.msra.mxu0 0
  %3386 = vmatprep.subr.bf16.mxu0 0
  %3387 = vmatpush1.bf16.msra.mxu0 0
  %3388 = vmatprep.subr.bf16.mxu0 0
  %3389 = vmatpush1.bf16.msra.mxu0 0
  %3390 = vmatprep.subr.bf16.mxu0 0
  %3391 = vmatpush1.bf16.msra.mxu0 0
  %3392 = vmatprep.subr.bf16.mxu0 %v3370
  %3393 = vmatpush1.bf16.msra.mxu0 %v3367
  %3394 = vmatprep.subr.bf16.mxu0 0
  %3395 = vmatpush2.bf16.msra.mxu0 0
  %3396 = vmatprep.subr.bf16.mxu0 0
  %3397 = vmatpush2.bf16.msra.mxu0 0
  %3398 = vmatprep.subr.bf16.mxu0 0
  %3399 = vmatpush2.bf16.msra.mxu0 0
  %3400 = vmatprep.subr.bf16.mxu0 0
  %3401 = vmatpush2.bf16.msra.mxu0 0
  %3402 = vmatprep.subr.bf16.mxu0 0
  %3403 = vmatpush2.bf16.msra.mxu0 0
  %3404 = vmatprep.subr.bf16.mxu0 0
  %3405 = vmatpush2.bf16.msra.mxu0 0
  %3406 = vmatprep.subr.bf16.mxu0 0
  %3407 = vmatpush2.bf16.msra.mxu0 0
  %3408 = vmatprep.subr.bf16.mxu0 0
  %3409 = vmatpush2.bf16.msra.mxu0 0
  %3410 = vmatprep.mubr.bf16.mxu0 0
  %3411 = vmatmul.mubr.bf16.gmra.mxu0 %v3364
  %v3412 = vpop.f32.mrf.mxu0
  %v3413 = vadd.f32 0.0, %v3412
  %v3414 = vpop.f32.mrf.mxu0
  %v3415 = vadd.f32 0.0, %v3414
  %v3416 = vpop.f32.mrf.mxu0
  %v3417 = vpop.f32.mrf.mxu0
  %3418 = vdwg.mxu0
  %3419 = vmatprep.subr.bf16.mxu0 0
  %3420 = vmatpush1.bf16.msra.mxu0 0
  %3421 = vmatprep.subr.bf16.mxu0 0
  %3422 = vmatpush1.bf16.msra.mxu0 0
  %3423 = vmatprep.subr.bf16.mxu0 0
  %3424 = vmatpush1.bf16.msra.mxu0 0
  %3425 = vmatprep.subr.bf16.mxu0 0
  %3426 = vmatpush1.bf16.msra.mxu0 0
  %3427 = vmatprep.subr.bf16.mxu0 0
  %3428 = vmatpush1.bf16.msra.mxu0 0
  %3429 = vmatprep.subr.bf16.mxu0 0
  %3430 = vmatpush1.bf16.msra.mxu0 0
  %3431 = vmatprep.subr.bf16.mxu0 0
  %3432 = vmatpush1.bf16.msra.mxu0 0
  %3433 = vmatprep.subr.bf16.mxu0 %v3376
  %3434 = vmatpush1.bf16.msra.mxu0 %v3373
  %3435 = vmatprep.subr.bf16.mxu0 0
  %3436 = vmatpush2.bf16.msra.mxu0 0
  %3437 = vmatprep.subr.bf16.mxu0 0
  %3438 = vmatpush2.bf16.msra.mxu0 0
  %3439 = vmatprep.subr.bf16.mxu0 0
  %3440 = vmatpush2.bf16.msra.mxu0 0
  %3441 = vmatprep.subr.bf16.mxu0 0
  %3442 = vmatpush2.bf16.msra.mxu0 0
  %3443 = vmatprep.subr.bf16.mxu0 0
  %3444 = vmatpush2.bf16.msra.mxu0 0
  %3445 = vmatprep.subr.bf16.mxu0 0
  %3446 = vmatpush2.bf16.msra.mxu0 0
  %3447 = vmatprep.subr.bf16.mxu0 0
  %3448 = vmatpush2.bf16.msra.mxu0 0
  %3449 = vmatprep.subr.bf16.mxu0 0
  %3450 = vmatpush2.bf16.msra.mxu0 0
  %3451 = vmatprep.mubr.bf16.mxu0 0
  %3452 = vmatmul.mubr.bf16.gmra.mxu0 %v3364
  %v3453 = vpop.f32.mrf.mxu0
  %v3454 = vadd.f32 0.0, %v3453
  %v3455 = vpop.f32.mrf.mxu0
  %v3456 = vadd.f32 0.0, %v3455
  %v3457 = vpop.f32.mrf.mxu0
  %v3458 = vpop.f32.mrf.mxu0
  %3459 = vdwg.mxu0
  %v3460 = vadd.f32 %v3337, %v3413
  %v3461 = vadd.f32 %v3338, %v3415
  %v3462 = vadd.f32 %v3339, %v3454
  %v3463 = vadd.f32 %v3340, %v3456
  %3464 = vrot.lane.b32.xlu0 %v2501, 111
  %v3465 = vpop.permute.xlu0 %3464
  %3466 = vrot.lane.b32.xlu0 %v2502, 111
  %v3467 = vpop.permute.xlu0 %3466
  %3468 = vrot.lane.b32.xlu0 %v2503, 111
  %v3469 = vpop.permute.xlu0 %3468
  %3470 = vrot.lane.b32.xlu0 %v2504, 111
  %v3471 = vpop.permute.xlu0 %3470
  %v3472 = vsel %vm2189, %v3469, %v3471
  %v3473 = vsel %vm2189, %v3467, %v3469
  %v3474 = vsel %vm2189, %v3465, %v3467
  %v3475 = vsel %vm2189, %v3471, %v3465
  %v3476 = vmul.f32 %v3474, %v2198
  %v3477 = vmul.f32 %v3473, %v2202
  %v3478 = vmul.f32 %v3472, %v2206
  %v3479 = vmul.f32 %v3475, %v2210
  %s3480 = scalar_lea.vmem %s5, 32
  %v3481 = vld [vmem:[%s3480] sm:$0xf]
  %v3482 = vpack.c.bf16 %v3476, %v3476
  %v3483 = vpack.c.bf16 %v3477, %v3477
  %v3484 = vpack.c.bf16 %v3478, %v3478
  %v3485 = vpack.c.bf16 %v3479, %v3479
  %v3487 = vsel %vm135, %v3481, 0
  %v3490 = vsel %vm139, %v3482, 0
  %v3493 = vsel %vm139, %v3483, 0
  %v3496 = vsel %vm139, %v3484, 0
  %v3499 = vsel %vm139, %v3485, 0
  %3501 = vmatprep.subr.bf16.mxu0 0
  %3502 = vmatpush1.bf16.msra.mxu0 0
  %3503 = vmatprep.subr.bf16.mxu0 0
  %3504 = vmatpush1.bf16.msra.mxu0 0
  %3505 = vmatprep.subr.bf16.mxu0 0
  %3506 = vmatpush1.bf16.msra.mxu0 0
  %3507 = vmatprep.subr.bf16.mxu0 0
  %3508 = vmatpush1.bf16.msra.mxu0 0
  %3509 = vmatprep.subr.bf16.mxu0 0
  %3510 = vmatpush1.bf16.msra.mxu0 0
  %3511 = vmatprep.subr.bf16.mxu0 0
  %3512 = vmatpush1.bf16.msra.mxu0 0
  %3513 = vmatprep.subr.bf16.mxu0 0
  %3514 = vmatpush1.bf16.msra.mxu0 0
  %3515 = vmatprep.subr.bf16.mxu0 %v3493
  %3516 = vmatpush1.bf16.msra.mxu0 %v3490
  %3517 = vmatprep.subr.bf16.mxu0 0
  %3518 = vmatpush2.bf16.msra.mxu0 0
  %3519 = vmatprep.subr.bf16.mxu0 0
  %3520 = vmatpush2.bf16.msra.mxu0 0
  %3521 = vmatprep.subr.bf16.mxu0 0
  %3522 = vmatpush2.bf16.msra.mxu0 0
  %3523 = vmatprep.subr.bf16.mxu0 0
  %3524 = vmatpush2.bf16.msra.mxu0 0
  %3525 = vmatprep.subr.bf16.mxu0 0
  %3526 = vmatpush2.bf16.msra.mxu0 0
  %3527 = vmatprep.subr.bf16.mxu0 0
  %3528 = vmatpush2.bf16.msra.mxu0 0
  %3529 = vmatprep.subr.bf16.mxu0 0
  %3530 = vmatpush2.bf16.msra.mxu0 0
  %3531 = vmatprep.subr.bf16.mxu0 0
  %3532 = vmatpush2.bf16.msra.mxu0 0
  %3533 = vmatprep.mubr.bf16.mxu0 0
  %3534 = vmatmul.mubr.bf16.gmra.mxu0 %v3487
  %v3535 = vpop.f32.mrf.mxu0
  %v3536 = vadd.f32 0.0, %v3535
  %v3537 = vpop.f32.mrf.mxu0
  %v3538 = vadd.f32 0.0, %v3537
  %v3539 = vpop.f32.mrf.mxu0
  %v3540 = vpop.f32.mrf.mxu0
  %3541 = vdwg.mxu0
  %3542 = vmatprep.subr.bf16.mxu0 0
  %3543 = vmatpush1.bf16.msra.mxu0 0
  %3544 = vmatprep.subr.bf16.mxu0 0
  %3545 = vmatpush1.bf16.msra.mxu0 0
  %3546 = vmatprep.subr.bf16.mxu0 0
  %3547 = vmatpush1.bf16.msra.mxu0 0
  %3548 = vmatprep.subr.bf16.mxu0 0
  %3549 = vmatpush1.bf16.msra.mxu0 0
  %3550 = vmatprep.subr.bf16.mxu0 0
  %3551 = vmatpush1.bf16.msra.mxu0 0
  %3552 = vmatprep.subr.bf16.mxu0 0
  %3553 = vmatpush1.bf16.msra.mxu0 0
  %3554 = vmatprep.subr.bf16.mxu0 0
  %3555 = vmatpush1.bf16.msra.mxu0 0
  %3556 = vmatprep.subr.bf16.mxu0 %v3499
  %3557 = vmatpush1.bf16.msra.mxu0 %v3496
  %3558 = vmatprep.subr.bf16.mxu0 0
  %3559 = vmatpush2.bf16.msra.mxu0 0
  %3560 = vmatprep.subr.bf16.mxu0 0
  %3561 = vmatpush2.bf16.msra.mxu0 0
  %3562 = vmatprep.subr.bf16.mxu0 0
  %3563 = vmatpush2.bf16.msra.mxu0 0
  %3564 = vmatprep.subr.bf16.mxu0 0
  %3565 = vmatpush2.bf16.msra.mxu0 0
  %3566 = vmatprep.subr.bf16.mxu0 0
  %3567 = vmatpush2.bf16.msra.mxu0 0
  %3568 = vmatprep.subr.bf16.mxu0 0
  %3569 = vmatpush2.bf16.msra.mxu0 0
  %3570 = vmatprep.subr.bf16.mxu0 0
  %3571 = vmatpush2.bf16.msra.mxu0 0
  %3572 = vmatprep.subr.bf16.mxu0 0
  %3573 = vmatpush2.bf16.msra.mxu0 0
  %3574 = vmatprep.mubr.bf16.mxu0 0
  %3575 = vmatmul.mubr.bf16.gmra.mxu0 %v3487
  %v3576 = vpop.f32.mrf.mxu0
  %v3577 = vadd.f32 0.0, %v3576
  %v3578 = vpop.f32.mrf.mxu0
  %v3579 = vadd.f32 0.0, %v3578
  %v3580 = vpop.f32.mrf.mxu0
  %v3581 = vpop.f32.mrf.mxu0
  %3582 = vdwg.mxu0
  %v3583 = vadd.f32 %v3460, %v3536
  %v3584 = vadd.f32 %v3461, %v3538
  %v3585 = vadd.f32 %v3462, %v3577
  %v3586 = vadd.f32 %v3463, %v3579
  %v3587 = vld [vmem:[%s8] sm:$0xff]
  %v3588 = vld [vmem:[%s9] sm:$0xff]
  %v3589 = vadd.f32 %v3583, %v3584
  %v3590 = vadd.f32 %v3589, %v3585
  %v3591 = vadd.f32 %v3590, %v3586
  %3592 = vadd.xlane.f32.xlu0 %v3591
  %v3593 = vpop.xlane.xlu0 %3592
  %v3594 = vmul.f32 %v3593, 0.001953125
  %v3595 = vsub.f32 %v3583, %v3594
  %v3596 = vsub.f32 %v3584, %v3594
  %v3597 = vsub.f32 %v3585, %v3594
  %v3598 = vsub.f32 %v3586, %v3594
  %v3599 = vmul.f32 %v3595, %v3595
  %v3600 = vmul.f32 %v3596, %v3596
  %v3601 = vmul.f32 %v3597, %v3597
  %v3602 = vmul.f32 %v3598, %v3598
  %v3603 = vadd.f32 %v3599, %v3600
  %v3604 = vadd.f32 %v3603, %v3601
  %v3605 = vadd.f32 %v3604, %v3602
  %3606 = vadd.xlane.f32.xlu0 %v3605
  %v3607 = vpop.xlane.xlu0 %3606
  %v3608 = vmul.f32 %v3607, 0.001953125
  %v3609 = vadd.f32 %v3608, 1e-05
  %v3610 = vrsqrt.pop %v3609
  %v3611 = vmul.f32 %v3587, %v3610
  %3613 = vset.pattern.permute.xlu0 0
  %3614 = vperm.xlu0 %3613, %v3611
  %v3615 = vpop.permute.xlu0 %3614
  %v3617 = vmul.f32 %v3595, %v3615
  %v3618 = vmul.f32 %v3596, %v3615
  %v3619 = vmul.f32 %v3597, %v3615
  %v3620 = vmul.f32 %v3598, %v3615
  %3622 = vset.pattern.permute.xlu0 0
  %3623 = vperm.xlu0 %3622, %v3588
  %v3624 = vpop.permute.xlu0 %3623
  %v3626 = vadd.f32 %v3617, %v3624
  %v3627 = vadd.f32 %v3618, %v3624
  %v3628 = vadd.f32 %v3619, %v3624
  %v3629 = vadd.f32 %v3620, %v3624
  %v3630 = vmax.f32 %v3626, 0.0
  %v3631 = vmax.f32 %v3627, 0.0
  %v3632 = vmax.f32 %v3628, 0.0
  %v3633 = vmax.f32 %v3629, 0.0
  %3634 = vst [vmem:[%s10] sm:$0xff] %v3630
  %3635 = vst [vmem:[%s10 + $0x8] sm:$0xff] %v3631
  %3636 = vst [vmem:[%s10 + $0x10] sm:$0xff] %v3632
  %3637 = vst [vmem:[%s10 + $0x18] sm:$0xff] %v3633
  // Predicated region
  $region42: #{up_forward.1} parent=0 // pred_check
    _
  $region43: #{up_forward.1} parent=0 // pred_check_branch
    %3639 = sbr.rel (0) target = $region45
  $region44: #{up_forward.1} parent=0 // pred_region
    _
  $region45: #{up_forward.1} parent=0 // pred_fallthru
    _
  // Predicated region
  $region46: #{up_forward.1} parent=0 // pred_check
    _
  $region47: #{up_forward.1} parent=0 // pred_check_branch
    %3641 = sbr.rel (0) target = $region49
  $region48: #{up_forward.1} parent=0 // pred_region
    _
  $region49: #{up_forward.1} parent=0 // pred_fallthru
    _

</llo_original>
